<compile_context>
chip_gen: v7x
topology: tpu7x:2x2x1
jax: 0.10.0
libtpu: 0.0.40
codegen_flags: <defaults>
</compile_context>

<pallas_src>
import math

import jax
import jax.numpy as jnp
from jax import lax
from jax.experimental import pallas as pl
from jax.experimental.pallas import tpu as pltpu

# Conv matmul operand dtype.  Set to jnp.bfloat16 on v6e/v7x for 2x MXU
# throughput (the fused stack is compute-bound, not HBM-bound); kept f32 here
# so the 8-layer chained numerics stay well inside the test tolerance.
_CONV_MM_DTYPE = jnp.float32
# Attention K/V (and matmul operand) dtype: bf16 halves K/V HBM traffic and
# doubles MXU throughput on v6e/v7x; softmax stays f32.
_ATTN_KV_DTYPE = jnp.bfloat16


# ------------------------------------------------------------------
# Fused 8-layer conv3x3(s=1,p=1) + folded BN + ReLU (+U-Net residuals) kernel
# ------------------------------------------------------------------
#
# "Wide-row" layout: the input is padded to (H+3, W+2, Cin) and flattened to
# ((H+3)*(W+2), Cin).  For wide-output row m on an (H, W+2) grid, tap (dy, dx)
# is the contiguous window x_flat[m + dy*(W+2) + dx : ... + M].  The 2 junk
# columns per row are masked to zero so the buffer can be reused as the next
# layer's padded input (shifted by W+3 rows).

def _make_fused_stack_kernel(h, w, e, c, include_last):
    wide = w + 2
    m = h * wide                 # rows of the "wide" output grid
    mp = (h + 3) * wide          # rows of the padded, flattened input
    shift_rows = wide + 1        # wide-output row 0 sits at padded row W+3
    offsets = [dy * wide + dx for dy in range(3) for dx in range(3)]

    def kernel(x_ref, w0_ref, wm_ref, w7_ref, scc_ref, shc_ref, sce_ref,
               she_ref, out_ref, act_a, act_b, slab, feats):
        # Junk-column mask (2 wrap-around columns per wide row).
        valid = (lax.broadcasted_iota(jnp.int32, (m, 1), 0) % wide) < w

        # Zero the ping-pong buffers once: layers only rewrite the body rows
        # [shift_rows, shift_rows + m), so the conv padding stays zero.
        act_a[...] = jnp.zeros((mp, c), jnp.float32)
        act_b[...] = jnp.zeros((mp, c), jnp.float32)

        def conv_bn_relu(src_ref, w_flat, scale, shift, cin, residual=None):
            kk = 9 * cin
            # Stage the 9 shifted tap windows -> one K=9*Cin MXU matmul
            # (accumulation stays in the MXU, no big f32 accumulator).
            for tp, off in enumerate(offsets):
                slab[:, tp * cin:(tp + 1) * cin] = (
                    src_ref[pl.ds(off, m), :].astype(slab.dtype))
            y = jnp.dot(slab[:, :kk], w_flat,
                        preferred_element_type=jnp.float32)
            y = y * scale + shift                 # folded BatchNorm (eval)
            y = jnp.maximum(y, 0.0)               # ReLU
            if residual is not None:
                y = y + residual                  # U-Net add, AFTER the ReLU
            return jnp.where(valid, y, 0.0)       # zero wrap-around columns

        # L0: enc0 (E -> C); taps read straight from the input block.
        y = conv_bn_relu(x_ref, w0_ref[...], scc_ref[0], shc_ref[0], e)
        feats[0] = y
        act_a[pl.ds(shift_rows, m), :] = y

        # L1..L3 = enc1..enc3, L4..L6 = dec0..dec2 (+ residuals), all C -> C.
        bufs = (act_a, act_b)
        cur = 0
        for j in range(6):
            src, dst = bufs[cur], bufs[1 - cur]
            res = feats[5 - j] if j >= 3 else None         # feat2, feat1, feat0
            y = conv_bn_relu(src, wm_ref[j], scc_ref[j + 1], shc_ref[j + 1],
                             c, residual=res)
            if j < 2:                                      # enc1/enc2 features
                feats[j + 1] = y
            dst[pl.ds(shift_rows, m), :] = y
            cur = 1 - cur

        if include_last:
            # L7: dec3 (C -> E); nearest Upsample(size=(h,w)) is the identity
            # here (the wrapper handles the general resize case).
            y = conv_bn_relu(bufs[cur], w7_ref[...], sce_ref[...],
                             she_ref[...], c)
        out_ref[...] = y.astype(out_ref.dtype)

    return kernel, m, mp


def _fused_stack_call(x_img, enc_params, dec_params, include_last):
    n, hs, ws, e = x_img.shape
    c = enc_params[0][0].shape[-1]
    kernel, m, mp = _make_fused_stack_kernel(hs, ws, e, c, include_last)

    # Pad ONCE in XLA glue and flatten to the wide-row layout (no 9x im2col).
    xp = jnp.pad(x_img, ((0, 0), (1, 2), (1, 1), (0, 0))).reshape(n, mp, e)

    mid = [enc_params[1], enc_params[2], enc_params[3],
           dec_params[0], dec_params[1], dec_params[2]]
    w0 = enc_params[0][0].reshape(9 * e, c).astype(_CONV_MM_DTYPE)
    wm = jnp.stack([p[0].reshape(9 * c, c) for p in mid]).astype(_CONV_MM_DTYPE)
    w7 = dec_params[3][0].reshape(9 * c, e).astype(_CONV_MM_DTYPE)
    scc = jnp.stack([p[1].reshape(1, c)
                     for p in [enc_params[0]] + mid]).astype(jnp.float32)
    shc = jnp.stack([p[2].reshape(1, c)
                     for p in [enc_params[0]] + mid]).astype(jnp.float32)
    sce = dec_params[3][1].reshape(1, e).astype(jnp.float32)
    she = dec_params[3][2].reshape(1, e).astype(jnp.float32)

    out_c = e if include_last else c
    cmax = max(e, c)

    return pl.pallas_call(
        kernel,
        out_shape=jax.ShapeDtypeStruct((n, m, out_c), x_img.dtype),
        grid=(n,),
        in_specs=[
            pl.BlockSpec((None, mp, e), lambda i: (i, 0, 0)),   # per-image input
            pl.BlockSpec((9 * e, c), lambda i: (0, 0)),          # enc0 weights
            pl.BlockSpec((6, 9 * c, c), lambda i: (0, 0, 0)),    # mid weights
            pl.BlockSpec((9 * c, e), lambda i: (0, 0)),          # dec3 weights
            pl.BlockSpec((7, 1, c), lambda i: (0, 0, 0)),        # scales (C out)
            pl.BlockSpec((7, 1, c), lambda i: (0, 0, 0)),        # shifts (C out)
            pl.BlockSpec((1, e), lambda i: (0, 0)),              # dec3 scale
            pl.BlockSpec((1, e), lambda i: (0, 0)),              # dec3 shift
        ],
        out_specs=pl.BlockSpec((None, m, out_c), lambda i: (i, 0, 0)),
        scratch_shapes=[
            pltpu.VMEM((mp, c), jnp.float32),             # activation ping
            pltpu.VMEM((mp, c), jnp.float32),             # activation pong
            pltpu.VMEM((m, 9 * cmax), _CONV_MM_DTYPE),    # tap slab (K=9*Cin)
            pltpu.VMEM((3, m, c), jnp.float32),           # U-Net residuals
        ],
        compiler_params=pltpu.CompilerParams(dimension_semantics=("parallel",)),
    )(xp, w0, wm, w7, scc, shc, sce, she)


# Single conv3x3+BN+ReLU (only used on the general-resize fallback path).
def _make_single_conv_kernel(h, w, cin, cout):
    wide = w + 2
    m = h * wide
    offsets = [dy * wide + dx for dy in range(3) for dx in range(3)]

    def kernel(x_ref, w_ref, sc_ref, sh_ref, out_ref, slab):
        for tp, off in enumerate(offsets):
            slab[:, tp * cin:(tp + 1) * cin] = (
                x_ref[pl.ds(off, m), :].astype(slab.dtype))
        y = jnp.dot(slab[...], w_ref[...], preferred_element_type=jnp.float32)
        y = jnp.maximum(y * sc_ref[...] + sh_ref[...], 0.0)
        out_ref[...] = y.astype(out_ref.dtype)

    return kernel, m


def conv3x3_bn_relu_single(x, w_hwio, scale, shift):
    n, h, w, cin = x.shape
    cout = w_hwio.shape[-1]
    wide = w + 2
    mp = (h + 3) * wide
    kernel, m = _make_single_conv_kernel(h, w, cin, cout)
    xp = jnp.pad(x, ((0, 0), (1, 2), (1, 1), (0, 0))).reshape(n, mp, cin)
    wf = w_hwio.reshape(9 * cin, cout).astype(_CONV_MM_DTYPE)
    out = pl.pallas_call(
        kernel,
        out_shape=jax.ShapeDtypeStruct((n, m, cout), x.dtype),
        grid=(n,),
        in_specs=[
            pl.BlockSpec((None, mp, cin), lambda i: (i, 0, 0)),
            pl.BlockSpec((9 * cin, cout), lambda i: (0, 0)),
            pl.BlockSpec((1, cout), lambda i: (0, 0)),
            pl.BlockSpec((1, cout), lambda i: (0, 0)),
        ],
        out_specs=pl.BlockSpec((None, m, cout), lambda i: (i, 0, 0)),
        scratch_shapes=[pltpu.VMEM((m, 9 * cin), _CONV_MM_DTYPE)],
        compiler_params=pltpu.CompilerParams(dimension_semantics=("parallel",)),
    )(xp, wf, scale.reshape(1, cout).astype(jnp.float32),
      shift.reshape(1, cout).astype(jnp.float32))
    return out.reshape(n, h, wide, cout)[:, :, :w, :]


def conv_stack(x_img, enc_params, dec_params, h_out, w_out):
    """x_img: (N, Hs, Ws, E) NHWC -> (N, h_out, w_out, E)."""
    n, hs, ws, e = x_img.shape
    c = enc_params[0][0].shape[-1]
    wide = ws + 2
    same = (h_out == hs) and (w_out == ws)

    out = _fused_stack_call(x_img, enc_params, dec_params, include_last=same)
    if same:
        return out.reshape(n, hs, wide, e)[:, :, :ws, :]
    # General path: fused 7 layers, nearest resize in XLA glue, then dec3.
    k = out.reshape(n, hs, wide, c)[:, :, :ws, :]
    k = nearest_resize(k, h_out, w_out)
    w7, sc7, sh7 = dec_params[3]
    return conv3x3_bn_relu_single(k, w7, sc7, sh7)


# ------------------------------------------------------------------
# Attention kernel (bf16 K/V, batch-invariant q passed once, blocked batch)
# ------------------------------------------------------------------

def _make_attention_kernel(bb):
    def kernel(q_ref, k_ref, v_ref, av_ref, as_ref):
        # q: (T, E) pre-projected & pre-scaled (constant block, DMA'd once).
        q = q_ref[...].astype(_ATTN_KV_DTYPE)
        for b in range(bb):                         # static unroll over block
            k_b = k_ref[b]                          # (L, E) bf16
            v_b = v_ref[b]                          # (L, E) bf16
            s = jnp.einsum("te,le->tl", q, k_b,
                           preferred_element_type=jnp.float32)
            s = s - jnp.max(s, axis=-1, keepdims=True)
            p = jnp.exp(s)
            p = p * pl.reciprocal(jnp.sum(p, axis=-1, keepdims=True),
                                  approx=True)
            as_ref[b] = p.astype(as_ref.dtype)
            av_ref[b] = jnp.einsum(
                "tl,le->te", p.astype(_ATTN_KV_DTYPE), v_b,
                preferred_element_type=jnp.float32).astype(av_ref.dtype)
    return kernel


def attention(q_scaled, k_seq, v, block_b=8):
    """q_scaled: (T, E) = (PE @ Wp^T + bp) / sqrt(E); k_seq, v: (N, L, E)."""
    n, l, e = k_seq.shape
    t = q_scaled.shape[0]
    # bf16 K/V: halves K/V HBM traffic, bf16 MXU matmuls (f32 accumulate).
    k_seq = k_seq.astype(_ATTN_KV_DTYPE)
    v = v.astype(_ATTN_KV_DTYPE)

    # Cap the batch block so the (double-buffered) K/V + output blocks stay
    # within ~12 MiB (safe for v5e's 16 MiB default scoped VMEM) and keep the
    # grid length >= 2 whenever N >= 2 (both v7x TensorCores busy).
    per_b = (2 * l * e * 2 + (t * e + t * l) * 4) * 2
    bb = max(1, min(block_b, (12 << 20) // max(per_b, 1), -(-n // 2)))
    n_blocks = -(-n // bb)
    n_pad = n_blocks * bb
    if n_pad != n:
        pad = ((0, n_pad - n), (0, 0), (0, 0))
        k_seq = jnp.pad(k_seq, pad)
        v = jnp.pad(v, pad)

    av, scores = pl.pallas_call(
        _make_attention_kernel(bb),
        out_shape=(
            jax.ShapeDtypeStruct((n_pad, t, e), jnp.float32),
            # TODO(synk): emit bf16 scores when callers allow it (halves writeback).
            jax.ShapeDtypeStruct((n_pad, t, l), jnp.float32),
        ),
        grid=(n_blocks,),
        in_specs=[
            pl.BlockSpec((t, e), lambda i: (0, 0)),        # q: constant block
            pl.BlockSpec((bb, l, e), lambda i: (i, 0, 0)),
            pl.BlockSpec((bb, l, e), lambda i: (i, 0, 0)),
        ],
        out_specs=(
            pl.BlockSpec((bb, t, e), lambda i: (i, 0, 0)),
            pl.BlockSpec((bb, t, l), lambda i: (i, 0, 0)),
        ),
        compiler_params=pltpu.CompilerParams(dimension_semantics=("parallel",)),
    )(q_scaled, k_seq, v)
    return av[:n], scores[:n]


# ------------------------------------------------------------------
# Glue: parameters, positional encoding, nearest resize, forward pass
# ------------------------------------------------------------------

def positional_encoding(max_len, d_model):
    pos = jnp.arange(max_len, dtype=jnp.float32)[:, None]
    div = jnp.exp(jnp.arange(0, d_model, 2, dtype=jnp.float32)
                  * (-math.log(10000.0) / d_model))
    pe = jnp.zeros((max_len, d_model), jnp.float32)
    pe = pe.at[:, 0::2].set(jnp.sin(pos * div))
    pe = pe.at[:, 1::2].set(jnp.cos(pos * div))
    return pe  # PositionalEncoding(zeros, dropout=0) == pe


def nearest_resize(x, out_h, out_w):
    """PyTorch 'nearest' upsample semantics: idx = floor(dst * in / out)."""
    n, h, w, c = x.shape
    rows = (jnp.arange(out_h) * h // out_h).astype(jnp.int32)
    cols = (jnp.arange(out_w) * w // out_w).astype(jnp.int32)
    return x[:, rows][:, :, cols]


def init_conv_params(key, cin, cout, eps=1e-5):
    kw, kb, kg, kbt = jax.random.split(key, 4)
    w = jax.random.normal(kw, (3, 3, cin, cout), jnp.float32) / math.sqrt(9.0 * cin)
    b = 0.1 * jax.random.normal(kb, (cout,), jnp.float32)
    gamma = 1.0 + 0.1 * jax.random.normal(kg, (cout,), jnp.float32)
    beta = 0.1 * jax.random.normal(kbt, (cout,), jnp.float32)
    # BatchNorm eval mode with default running stats (mean=0, var=1), folded.
    scale = gamma / jnp.sqrt(1.0 + eps)
    shift = beta + b * scale
    return (w, scale, shift)


def make_params(key, in_channels, num_channels, h, w, max_length):
    keys = jax.random.split(key, 16)
    enc_io = [(in_channels, num_channels)] + [(num_channels, num_channels)] * 3
    dec_io = [(num_channels, num_channels)] * 3 + [(num_channels, in_channels)]
    enc = [init_conv_params(keys[i], ci, co) for i, (ci, co) in enumerate(enc_io)]
    dec = [init_conv_params(keys[4 + i], ci, co) for i, (ci, co) in enumerate(dec_io)]
    wp_t = (jax.random.normal(keys[8], (in_channels, in_channels), jnp.float32)
            / math.sqrt(in_channels))  # already transposed: q @ wp_t + bp
    bp = 0.1 * jax.random.normal(keys[9], (1, in_channels), jnp.float32)
    return dict(enc=enc, dec=dec, wp_t=wp_t, bp=bp, h=h, w=w, T=max_length)


def forward_pallas(x, params):
    n, l, e = x.shape
    hs = ws = math.isqrt(l - 1)
    cls_token = x[:, 0:1, :]
    k_img = x[:, 1:, :].reshape(n, hs, ws, e)  # NHWC (channels on the lane dim)

    # Fused conv/BN/ReLU stack (single pallas_call, activations VMEM-resident).
    k = conv_stack(k_img, params["enc"], params["dec"], params["h"], params["w"])

    k_seq = jnp.concatenate(
        [cls_token, k.reshape(n, params["h"] * params["w"], e)], axis=1)  # (N,L,E)

    # Hoisted, batch-invariant projection with the 1/sqrt(E) scale folded in.
    q_base = positional_encoding(params["T"], e)
    q_scaled = (q_base @ params["wp_t"] + params["bp"]) * (1.0 / math.sqrt(e))

    attn_vecs, attn_scores = attention(q_scaled, k_seq, x)
    return attn_vecs, attn_scores


# ------------------------------------------------------------------
# Pure-JAX reference (sanity check)
# ------------------------------------------------------------------

def _ref_conv(x, w_, scale, shift, residual=None):
    y = lax.conv_general_dilated(x, w_, (1, 1), ((1, 1), (1, 1)),
                                 dimension_numbers=("NHWC", "HWIO", "NHWC"))
    y = jnp.maximum(y * scale + shift, 0.0)
    if residual is not None:
        y = y + residual
    return y


def forward_ref(x, params):
    n, l, e = x.shape
    hs = ws = math.isqrt(l - 1)
    cls_token = x[:, 0:1, :]
    k = x[:, 1:, :].reshape(n, hs, ws, e)
    feats = []
    for (w_, sc, sh) in params["enc"]:
        k = _ref_conv(k, w_, sc, sh)
        feats.append(k)
    for i in range(3):
        w_, sc, sh = params["dec"][i]
        k = _ref_conv(k, w_, sc, sh, residual=feats[2 - i])
    k = nearest_resize(k, params["h"], params["w"])
    w_, sc, sh = params["dec"][3]
    k = _ref_conv(k, w_, sc, sh)
    k_seq = jnp.concatenate([cls_token, k.reshape(n, -1, e)], axis=1)
    q = positional_encoding(params["T"], e) @ params["wp_t"] + params["bp"]  # (T,E)
    q = jnp.broadcast_to(q[None], (n, params["T"], e))
    s = jnp.einsum("nte,nle->ntl", q, k_seq) / math.sqrt(e)
    p = jax.nn.softmax(s, axis=-1)
    av = jnp.einsum("ntl,nle->nte", p, x)
    return av, p


# ------------------------------------------------------------------

if __name__ == "__main__":
    # Small shapes consistent with the module: x is [N, L, E], L = H*W + 1.
    N, E, C = 2, 32, 8          # batch, in_channels, num_channels
    H = W = 4                   # spatial (module h=w set to match)
    T = 8                       # max_length
    L = H * W + 1

    key = jax.random.PRNGKey(0)
    kx, kp = jax.random.split(key)
    x = jax.random.normal(kx, (N, L, E), jnp.float32)
    params = make_params(kp, in_channels=E, num_channels=C, h=H, w=W, max_length=T)

    attn_vecs, attn_scores = forward_pallas(x, params)
    attn_vecs = jax.block_until_ready(attn_vecs)
    attn_scores = jax.block_until_ready(attn_scores)

    ref_vecs, ref_scores = forward_ref(x, params)

    assert attn_vecs.shape == (N, T, E) and attn_scores.shape == (N, T, L)
    assert jnp.allclose(attn_vecs, ref_vecs, rtol=2e-2, atol=2e-2), "attn_vecs mismatch"
    assert jnp.allclose(attn_scores, ref_scores, rtol=2e-2, atol=2e-2), "attn_scores mismatch"

    print("KERNEL_OK")
</pallas_src>

<mosaic_0001>
module attributes {stable_mosaic.version = 11 : i64} {
  func.func @kernel(%arg0: i32, %arg1: memref<1x42x32xf32, #tpu.memory_space<vmem>>, %arg2: memref<288x8xf32, #tpu.memory_space<vmem>>, %arg3: memref<6x72x8xf32, #tpu.memory_space<vmem>>, %arg4: memref<72x32xf32, #tpu.memory_space<vmem>>, %arg5: memref<7x1x8xf32, #tpu.memory_space<vmem>>, %arg6: memref<7x1x8xf32, #tpu.memory_space<vmem>>, %arg7: memref<1x32xf32, #tpu.memory_space<vmem>>, %arg8: memref<1x32xf32, #tpu.memory_space<vmem>>, %arg9: memref<1x24x32xf32, #tpu.memory_space<vmem>>, %arg10: memref<42x8xf32, #tpu.memory_space<vmem>>, %arg11: memref<42x8xf32, #tpu.memory_space<vmem>>, %arg12: memref<24x288xf32, #tpu.memory_space<vmem>>, %arg13: memref<3x24x8xf32, #tpu.memory_space<vmem>>) attributes {dimension_semantics = [#tpu.dimension_semantics<parallel>], iteration_bounds = array<i64: 2>, scalar_prefetch = 0 : i64, scratch_operands = 4 : i64, tpu.core_type = #tpu.core_type<tc>, window_params = [{transform_indices = @transform_0, window_bounds = array<i64: 1, 42, 32>}, {pipeline_mode = #tpu.pipeline_mode<synchronous>, transform_indices = @transform_1, window_bounds = array<i64: 288, 8>}, {pipeline_mode = #tpu.pipeline_mode<synchronous>, transform_indices = @transform_2, window_bounds = array<i64: 6, 72, 8>}, {pipeline_mode = #tpu.pipeline_mode<synchronous>, transform_indices = @transform_3, window_bounds = array<i64: 72, 32>}, {pipeline_mode = #tpu.pipeline_mode<synchronous>, transform_indices = @transform_4, window_bounds = array<i64: 7, 1, 8>}, {pipeline_mode = #tpu.pipeline_mode<synchronous>, transform_indices = @transform_5, window_bounds = array<i64: 7, 1, 8>}, {pipeline_mode = #tpu.pipeline_mode<synchronous>, transform_indices = @transform_6, window_bounds = array<i64: 1, 32>}, {pipeline_mode = #tpu.pipeline_mode<synchronous>, transform_indices = @transform_7, window_bounds = array<i64: 1, 32>}, {transform_indices = @transform_8, window_bounds = array<i64: 1, 24, 32>}]} {
    %0 = tpu.iota {dimensions = array<i32: 0>} : vector<24x1xi32>
    %c6_i32 = arith.constant 6 : i32
    %c0_i32 = arith.constant 0 : i32
    %1 = arith.cmpi eq, %c6_i32, %c0_i32 : i32
    %c1_i32 = arith.constant 1 : i32
    %2 = arith.select %1, %c1_i32, %c6_i32 : i32
    %3 = vector.broadcast %2 : i32 to vector<24x1xi32>
    %4 = arith.remsi %0, %3 : vector<24x1xi32>
    %c0_i32_0 = arith.constant 0 : i32
    %5 = vector.broadcast %c0_i32_0 : i32 to vector<24x1xi32>
    %6 = arith.cmpi ne, %4, %5 : vector<24x1xi32>
    %c0_i32_1 = arith.constant 0 : i32
    %7 = vector.broadcast %c0_i32_1 : i32 to vector<24x1xi32>
    %8 = arith.cmpi slt, %4, %7 : vector<24x1xi32>
    %c0_i32_2 = arith.constant 0 : i32
    %9 = arith.cmpi slt, %2, %c0_i32_2 : i32
    %10 = vector.broadcast %9 : i1 to vector<24x1xi1>
    %11 = vector.broadcast %10 : vector<24x1xi1> to vector<24x1xi1>
    %12 = arith.xori %8, %11 : vector<24x1xi1>
    %13 = arith.andi %12, %6 : vector<24x1xi1>
    %14 = vector.broadcast %2 : i32 to vector<24x1xi32>
    %15 = arith.addi %4, %14 : vector<24x1xi32>
    %16 = arith.select %13, %15, %4 : vector<24x1xi1>, vector<24x1xi32>
    %c4_i32 = arith.constant 4 : i32
    %17 = vector.broadcast %c4_i32 : i32 to vector<24x1xi32>
    %18 = arith.cmpi slt, %16, %17 : vector<24x1xi32>
    %cst = arith.constant 0.000000e+00 : f32
    %19 = vector.broadcast %cst : f32 to vector<42x8xf32>
    %c0 = arith.constant 0 : index
    %c0_3 = arith.constant 0 : index
    %20 = vector.load %arg10[%c0, %c0_3] : memref<42x8xf32, #tpu.memory_space<vmem>>, vector<42x8xf32>
    tpu.vector_store %arg10[%c0, %c0_3], %19 {strides = array<i32>} : memref<42x8xf32, #tpu.memory_space<vmem>>, vector<42x8xf32>,
    %cst_4 = arith.constant 0.000000e+00 : f32
    %21 = vector.broadcast %cst_4 : f32 to vector<42x8xf32>
    %c0_5 = arith.constant 0 : index
    %c0_6 = arith.constant 0 : index
    %22 = vector.load %arg11[%c0_5, %c0_6] : memref<42x8xf32, #tpu.memory_space<vmem>>, vector<42x8xf32>
    tpu.vector_store %arg11[%c0_5, %c0_6], %21 {strides = array<i32>} : memref<42x8xf32, #tpu.memory_space<vmem>>, vector<42x8xf32>,
    %c0_7 = arith.constant 0 : index
    %c0_8 = arith.constant 0 : index
    %23 = vector.load %arg2[%c0_7, %c0_8] : memref<288x8xf32, #tpu.memory_space<vmem>>, vector<288x8xf32>
    %c0_9 = arith.constant 0 : index
    %c0_10 = arith.constant 0 : index
    %c0_11 = arith.constant 0 : index
    %24 = vector.load %arg5[%c0_9, %c0_10, %c0_11] : memref<7x1x8xf32, #tpu.memory_space<vmem>>, vector<1x1x8xf32>
    %25 = vector.shape_cast %24 : vector<1x1x8xf32> to vector<1x8xf32>
    %c0_12 = arith.constant 0 : index
    %c0_13 = arith.constant 0 : index
    %c0_14 = arith.constant 0 : index
    %26 = vector.load %arg6[%c0_12, %c0_13, %c0_14] : memref<7x1x8xf32, #tpu.memory_space<vmem>>, vector<1x1x8xf32>
    %27 = vector.shape_cast %26 : vector<1x1x8xf32> to vector<1x8xf32>
    %c0_15 = arith.constant 0 : index
    %c0_16 = arith.constant 0 : index
    %c0_17 = arith.constant 0 : index
    %28 = vector.load %arg1[%c0_15, %c0_16, %c0_17] : memref<1x42x32xf32, #tpu.memory_space<vmem>>, vector<1x24x32xf32>
    %29 = vector.shape_cast %28 : vector<1x24x32xf32> to vector<24x32xf32>
    %c0_18 = arith.constant 0 : index
    %c0_19 = arith.constant 0 : index
    %30 = vector.load %arg12[%c0_18, %c0_19] : memref<24x288xf32, #tpu.memory_space<vmem>>, vector<24x32xf32>
    tpu.vector_store %arg12[%c0_18, %c0_19], %29 {strides = array<i32>} : memref<24x288xf32, #tpu.memory_space<vmem>>, vector<24x32xf32>,
    %c0_20 = arith.constant 0 : index
    %c1 = arith.constant 1 : index
    %c0_21 = arith.constant 0 : index
    %31 = vector.load %arg1[%c0_20, %c1, %c0_21] : memref<1x42x32xf32, #tpu.memory_space<vmem>>, vector<1x24x32xf32>
    %32 = vector.shape_cast %31 : vector<1x24x32xf32> to vector<24x32xf32>
    %c0_22 = arith.constant 0 : index
    %c32 = arith.constant 32 : index
    %33 = vector.load %arg12[%c0_22, %c32] : memref<24x288xf32, #tpu.memory_space<vmem>>, vector<24x32xf32>
    tpu.vector_store %arg12[%c0_22, %c32], %32 {strides = array<i32>} : memref<24x288xf32, #tpu.memory_space<vmem>>, vector<24x32xf32>,
    %c0_23 = arith.constant 0 : index
    %c2 = arith.constant 2 : index
    %c0_24 = arith.constant 0 : index
    %34 = vector.load %arg1[%c0_23, %c2, %c0_24] : memref<1x42x32xf32, #tpu.memory_space<vmem>>, vector<1x24x32xf32>
    %35 = vector.shape_cast %34 : vector<1x24x32xf32> to vector<24x32xf32>
    %c0_25 = arith.constant 0 : index
    %c64 = arith.constant 64 : index
    %36 = vector.load %arg12[%c0_25, %c64] : memref<24x288xf32, #tpu.memory_space<vmem>>, vector<24x32xf32>
    tpu.vector_store %arg12[%c0_25, %c64], %35 {strides = array<i32>} : memref<24x288xf32, #tpu.memory_space<vmem>>, vector<24x32xf32>,
    %c0_26 = arith.constant 0 : index
    %c6 = arith.constant 6 : index
    %c0_27 = arith.constant 0 : index
    %37 = vector.load %arg1[%c0_26, %c6, %c0_27] : memref<1x42x32xf32, #tpu.memory_space<vmem>>, vector<1x24x32xf32>
    %38 = vector.shape_cast %37 : vector<1x24x32xf32> to vector<24x32xf32>
    %c0_28 = arith.constant 0 : index
    %c96 = arith.constant 96 : index
    %39 = vector.load %arg12[%c0_28, %c96] : memref<24x288xf32, #tpu.memory_space<vmem>>, vector<24x32xf32>
    tpu.vector_store %arg12[%c0_28, %c96], %38 {strides = array<i32>} : memref<24x288xf32, #tpu.memory_space<vmem>>, vector<24x32xf32>,
    %c0_29 = arith.constant 0 : index
    %c7 = arith.constant 7 : index
    %c0_30 = arith.constant 0 : index
    %40 = vector.load %arg1[%c0_29, %c7, %c0_30] : memref<1x42x32xf32, #tpu.memory_space<vmem>>, vector<1x24x32xf32>
    %41 = vector.shape_cast %40 : vector<1x24x32xf32> to vector<24x32xf32>
    %c0_31 = arith.constant 0 : index
    %c128 = arith.constant 128 : index
    %42 = vector.load %arg12[%c0_31, %c128] : memref<24x288xf32, #tpu.memory_space<vmem>>, vector<24x32xf32>
    tpu.vector_store %arg12[%c0_31, %c128], %41 {strides = array<i32>} : memref<24x288xf32, #tpu.memory_space<vmem>>, vector<24x32xf32>,
    %c0_32 = arith.constant 0 : index
    %c8 = arith.constant 8 : index
    %c0_33 = arith.constant 0 : index
    %43 = vector.load %arg1[%c0_32, %c8, %c0_33] : memref<1x42x32xf32, #tpu.memory_space<vmem>>, vector<1x24x32xf32>
    %44 = vector.shape_cast %43 : vector<1x24x32xf32> to vector<24x32xf32>
    %c0_34 = arith.constant 0 : index
    %c160 = arith.constant 160 : index
    %45 = vector.load %arg12[%c0_34, %c160] : memref<24x288xf32, #tpu.memory_space<vmem>>, vector<24x32xf32>
    tpu.vector_store %arg12[%c0_34, %c160], %44 {strides = array<i32>} : memref<24x288xf32, #tpu.memory_space<vmem>>, vector<24x32xf32>,
    %c0_35 = arith.constant 0 : index
    %c12 = arith.constant 12 : index
    %c0_36 = arith.constant 0 : index
    %46 = vector.load %arg1[%c0_35, %c12, %c0_36] : memref<1x42x32xf32, #tpu.memory_space<vmem>>, vector<1x24x32xf32>
    %47 = vector.shape_cast %46 : vector<1x24x32xf32> to vector<24x32xf32>
    %c0_37 = arith.constant 0 : index
    %c192 = arith.constant 192 : index
    %48 = vector.load %arg12[%c0_37, %c192] : memref<24x288xf32, #tpu.memory_space<vmem>>, vector<24x32xf32>
    tpu.vector_store %arg12[%c0_37, %c192], %47 {strides = array<i32>} : memref<24x288xf32, #tpu.memory_space<vmem>>, vector<24x32xf32>,
    %c0_38 = arith.constant 0 : index
    %c13 = arith.constant 13 : index
    %c0_39 = arith.constant 0 : index
    %49 = vector.load %arg1[%c0_38, %c13, %c0_39] : memref<1x42x32xf32, #tpu.memory_space<vmem>>, vector<1x24x32xf32>
    %50 = vector.shape_cast %49 : vector<1x24x32xf32> to vector<24x32xf32>
    %c0_40 = arith.constant 0 : index
    %c224 = arith.constant 224 : index
    %51 = vector.load %arg12[%c0_40, %c224] : memref<24x288xf32, #tpu.memory_space<vmem>>, vector<24x32xf32>
    tpu.vector_store %arg12[%c0_40, %c224], %50 {strides = array<i32>} : memref<24x288xf32, #tpu.memory_space<vmem>>, vector<24x32xf32>,
    %c0_41 = arith.constant 0 : index
    %c14 = arith.constant 14 : index
    %c0_42 = arith.constant 0 : index
    %52 = vector.load %arg1[%c0_41, %c14, %c0_42] : memref<1x42x32xf32, #tpu.memory_space<vmem>>, vector<1x24x32xf32>
    %53 = vector.shape_cast %52 : vector<1x24x32xf32> to vector<24x32xf32>
    %c0_43 = arith.constant 0 : index
    %c256 = arith.constant 256 : index
    %54 = vector.load %arg12[%c0_43, %c256] : memref<24x288xf32, #tpu.memory_space<vmem>>, vector<24x32xf32>
    tpu.vector_store %arg12[%c0_43, %c256], %53 {strides = array<i32>} : memref<24x288xf32, #tpu.memory_space<vmem>>, vector<24x32xf32>,
    %c0_44 = arith.constant 0 : index
    %c0_45 = arith.constant 0 : index
    %55 = vector.load %arg12[%c0_44, %c0_45] : memref<24x288xf32, #tpu.memory_space<vmem>>, vector<24x288xf32>
    %cst_46 = arith.constant dense<0.000000e+00> : vector<24x8xf32>
    %56 = tpu.matmul %55, %23, %cst_46 {dimension_numbers = #tpu.dot_dimension_numbers<[1], [0], [0], [1], [0, 0, 1, 1], [], []>} : vector<24x288xf32>, vector<288x8xf32>, vector<24x8xf32> -> vector<24x8xf32>
    %57 = vector.broadcast %25 : vector<1x8xf32> to vector<24x8xf32>
    %58 = arith.mulf %56, %57 : vector<24x8xf32>
    %59 = vector.broadcast %27 : vector<1x8xf32> to vector<24x8xf32>
    %60 = arith.addf %58, %59 : vector<24x8xf32>
    %cst_47 = arith.constant 0.000000e+00 : f32
    %61 = vector.broadcast %cst_47 : f32 to vector<24x8xf32>
    %62 = arith.maximumf %60, %61 : vector<24x8xf32>
    %cst_48 = arith.constant 0.000000e+00 : f32
    %63 = vector.shape_cast %18 : vector<24x1xi1> to vector<24x1xi1>
    %64 = vector.broadcast %63 : vector<24x1xi1> to vector<24x8xi1>
    %65 = vector.broadcast %cst_48 : f32 to vector<24x8xf32>
    %66 = arith.select %64, %62, %65 : vector<24x8xi1>, vector<24x8xf32>
    %c0_49 = arith.constant 0 : index
    %c0_50 = arith.constant 0 : index
    %c0_51 = arith.constant 0 : index
    %67 = vector.load %arg13[%c0_49, %c0_50, %c0_51] : memref<3x24x8xf32, #tpu.memory_space<vmem>>, vector<1x24x8xf32>
    %68 = vector.shape_cast %67 : vector<1x24x8xf32> to vector<24x8xf32>
    %69 = vector.shape_cast %66 : vector<24x8xf32> to vector<1x24x8xf32>
    tpu.vector_store %arg13[%c0_49, %c0_50, %c0_51], %69 {strides = array<i32>} : memref<3x24x8xf32, #tpu.memory_space<vmem>>, vector<1x24x8xf32>,
    %c7_52 = arith.constant 7 : index
    %c0_53 = arith.constant 0 : index
    %70 = vector.load %arg10[%c7_52, %c0_53] : memref<42x8xf32, #tpu.memory_space<vmem>>, vector<24x8xf32>
    tpu.vector_store %arg10[%c7_52, %c0_53], %66 {strides = array<i32>} : memref<42x8xf32, #tpu.memory_space<vmem>>, vector<24x8xf32>,
    %c0_54 = arith.constant 0 : index
    %c0_55 = arith.constant 0 : index
    %c0_56 = arith.constant 0 : index
    %71 = vector.load %arg3[%c0_54, %c0_55, %c0_56] : memref<6x72x8xf32, #tpu.memory_space<vmem>>, vector<1x72x8xf32>
    %72 = vector.shape_cast %71 : vector<1x72x8xf32> to vector<72x8xf32>
    %c1_57 = arith.constant 1 : index
    %c0_58 = arith.constant 0 : index
    %c0_59 = arith.constant 0 : index
    %73 = vector.load %arg5[%c1_57, %c0_58, %c0_59] : memref<7x1x8xf32, #tpu.memory_space<vmem>>, vector<1x1x8xf32>
    %74 = vector.shape_cast %73 : vector<1x1x8xf32> to vector<1x8xf32>
    %c1_60 = arith.constant 1 : index
    %c0_61 = arith.constant 0 : index
    %c0_62 = arith.constant 0 : index
    %75 = vector.load %arg6[%c1_60, %c0_61, %c0_62] : memref<7x1x8xf32, #tpu.memory_space<vmem>>, vector<1x1x8xf32>
    %76 = vector.shape_cast %75 : vector<1x1x8xf32> to vector<1x8xf32>
    %c0_63 = arith.constant 0 : index
    %c0_64 = arith.constant 0 : index
    %77 = vector.load %arg10[%c0_63, %c0_64] : memref<42x8xf32, #tpu.memory_space<vmem>>, vector<24x8xf32>
    %c0_65 = arith.constant 0 : index
    %c0_66 = arith.constant 0 : index
    %78 = vector.load %arg12[%c0_65, %c0_66] : memref<24x288xf32, #tpu.memory_space<vmem>>, vector<24x8xf32>
    tpu.vector_store %arg12[%c0_65, %c0_66], %77 {strides = array<i32>} : memref<24x288xf32, #tpu.memory_space<vmem>>, vector<24x8xf32>,
    %c1_67 = arith.constant 1 : index
    %c0_68 = arith.constant 0 : index
    %79 = vector.load %arg10[%c1_67, %c0_68] : memref<42x8xf32, #tpu.memory_space<vmem>>, vector<24x8xf32>
    %c0_69 = arith.constant 0 : index
    %c8_70 = arith.constant 8 : index
    %80 = vector.load %arg12[%c0_69, %c8_70] : memref<24x288xf32, #tpu.memory_space<vmem>>, vector<24x8xf32>
    tpu.vector_store %arg12[%c0_69, %c8_70], %79 {strides = array<i32>} : memref<24x288xf32, #tpu.memory_space<vmem>>, vector<24x8xf32>,
    %c2_71 = arith.constant 2 : index
    %c0_72 = arith.constant 0 : index
    %81 = vector.load %arg10[%c2_71, %c0_72] : memref<42x8xf32, #tpu.memory_space<vmem>>, vector<24x8xf32>
    %c0_73 = arith.constant 0 : index
    %c16 = arith.constant 16 : index
    %82 = vector.load %arg12[%c0_73, %c16] : memref<24x288xf32, #tpu.memory_space<vmem>>, vector<24x8xf32>
    tpu.vector_store %arg12[%c0_73, %c16], %81 {strides = array<i32>} : memref<24x288xf32, #tpu.memory_space<vmem>>, vector<24x8xf32>,
    %c6_74 = arith.constant 6 : index
    %c0_75 = arith.constant 0 : index
    %83 = vector.load %arg10[%c6_74, %c0_75] : memref<42x8xf32, #tpu.memory_space<vmem>>, vector<24x8xf32>
    %c0_76 = arith.constant 0 : index
    %c24 = arith.constant 24 : index
    %84 = vector.load %arg12[%c0_76, %c24] : memref<24x288xf32, #tpu.memory_space<vmem>>, vector<24x8xf32>
    tpu.vector_store %arg12[%c0_76, %c24], %83 {strides = array<i32>} : memref<24x288xf32, #tpu.memory_space<vmem>>, vector<24x8xf32>,
    %c7_77 = arith.constant 7 : index
    %c0_78 = arith.constant 0 : index
    %85 = vector.load %arg10[%c7_77, %c0_78] : memref<42x8xf32, #tpu.memory_space<vmem>>, vector<24x8xf32>
    %c0_79 = arith.constant 0 : index
    %c32_80 = arith.constant 32 : index
    %86 = vector.load %arg12[%c0_79, %c32_80] : memref<24x288xf32, #tpu.memory_space<vmem>>, vector<24x8xf32>
    tpu.vector_store %arg12[%c0_79, %c32_80], %85 {strides = array<i32>} : memref<24x288xf32, #tpu.memory_space<vmem>>, vector<24x8xf32>,
    %c8_81 = arith.constant 8 : index
    %c0_82 = arith.constant 0 : index
    %87 = vector.load %arg10[%c8_81, %c0_82] : memref<42x8xf32, #tpu.memory_space<vmem>>, vector<24x8xf32>
    %c0_83 = arith.constant 0 : index
    %c40 = arith.constant 40 : index
    %88 = vector.load %arg12[%c0_83, %c40] : memref<24x288xf32, #tpu.memory_space<vmem>>, vector<24x8xf32>
    tpu.vector_store %arg12[%c0_83, %c40], %87 {strides = array<i32>} : memref<24x288xf32, #tpu.memory_space<vmem>>, vector<24x8xf32>,
    %c12_84 = arith.constant 12 : index
    %c0_85 = arith.constant 0 : index
    %89 = vector.load %arg10[%c12_84, %c0_85] : memref<42x8xf32, #tpu.memory_space<vmem>>, vector<24x8xf32>
    %c0_86 = arith.constant 0 : index
    %c48 = arith.constant 48 : index
    %90 = vector.load %arg12[%c0_86, %c48] : memref<24x288xf32, #tpu.memory_space<vmem>>, vector<24x8xf32>
    tpu.vector_store %arg12[%c0_86, %c48], %89 {strides = array<i32>} : memref<24x288xf32, #tpu.memory_space<vmem>>, vector<24x8xf32>,
    %c13_87 = arith.constant 13 : index
    %c0_88 = arith.constant 0 : index
    %91 = vector.load %arg10[%c13_87, %c0_88] : memref<42x8xf32, #tpu.memory_space<vmem>>, vector<24x8xf32>
    %c0_89 = arith.constant 0 : index
    %c56 = arith.constant 56 : index
    %92 = vector.load %arg12[%c0_89, %c56] : memref<24x288xf32, #tpu.memory_space<vmem>>, vector<24x8xf32>
    tpu.vector_store %arg12[%c0_89, %c56], %91 {strides = array<i32>} : memref<24x288xf32, #tpu.memory_space<vmem>>, vector<24x8xf32>,
    %c14_90 = arith.constant 14 : index
    %c0_91 = arith.constant 0 : index
    %93 = vector.load %arg10[%c14_90, %c0_91] : memref<42x8xf32, #tpu.memory_space<vmem>>, vector<24x8xf32>
    %c0_92 = arith.constant 0 : index
    %c64_93 = arith.constant 64 : index
    %94 = vector.load %arg12[%c0_92, %c64_93] : memref<24x288xf32, #tpu.memory_space<vmem>>, vector<24x8xf32>
    tpu.vector_store %arg12[%c0_92, %c64_93], %93 {strides = array<i32>} : memref<24x288xf32, #tpu.memory_space<vmem>>, vector<24x8xf32>,
    %c0_94 = arith.constant 0 : index
    %c0_95 = arith.constant 0 : index
    %95 = vector.load %arg12[%c0_94, %c0_95] : memref<24x288xf32, #tpu.memory_space<vmem>>, vector<24x72xf32>
    %cst_96 = arith.constant dense<0.000000e+00> : vector<24x8xf32>
    %96 = tpu.matmul %95, %72, %cst_96 {dimension_numbers = #tpu.dot_dimension_numbers<[1], [0], [0], [1], [0, 0, 1, 1], [], []>} : vector<24x72xf32>, vector<72x8xf32>, vector<24x8xf32> -> vector<24x8xf32>
    %97 = vector.broadcast %74 : vector<1x8xf32> to vector<24x8xf32>
    %98 = arith.mulf %96, %97 : vector<24x8xf32>
    %99 = vector.broadcast %76 : vector<1x8xf32> to vector<24x8xf32>
    %100 = arith.addf %98, %99 : vector<24x8xf32>
    %cst_97 = arith.constant 0.000000e+00 : f32
    %101 = vector.broadcast %cst_97 : f32 to vector<24x8xf32>
    %102 = arith.maximumf %100, %101 : vector<24x8xf32>
    %cst_98 = arith.constant 0.000000e+00 : f32
    %103 = vector.shape_cast %18 : vector<24x1xi1> to vector<24x1xi1>
    %104 = vector.broadcast %103 : vector<24x1xi1> to vector<24x8xi1>
    %105 = vector.broadcast %cst_98 : f32 to vector<24x8xf32>
    %106 = arith.select %104, %102, %105 : vector<24x8xi1>, vector<24x8xf32>
    %c1_99 = arith.constant 1 : index
    %c0_100 = arith.constant 0 : index
    %c0_101 = arith.constant 0 : index
    %107 = vector.load %arg13[%c1_99, %c0_100, %c0_101] : memref<3x24x8xf32, #tpu.memory_space<vmem>>, vector<1x24x8xf32>
    %108 = vector.shape_cast %107 : vector<1x24x8xf32> to vector<24x8xf32>
    %109 = vector.shape_cast %106 : vector<24x8xf32> to vector<1x24x8xf32>
    tpu.vector_store %arg13[%c1_99, %c0_100, %c0_101], %109 {strides = array<i32>} : memref<3x24x8xf32, #tpu.memory_space<vmem>>, vector<1x24x8xf32>,
    %c7_102 = arith.constant 7 : index
    %c0_103 = arith.constant 0 : index
    %110 = vector.load %arg11[%c7_102, %c0_103] : memref<42x8xf32, #tpu.memory_space<vmem>>, vector<24x8xf32>
    tpu.vector_store %arg11[%c7_102, %c0_103], %106 {strides = array<i32>} : memref<42x8xf32, #tpu.memory_space<vmem>>, vector<24x8xf32>,
    %c1_104 = arith.constant 1 : index
    %c0_105 = arith.constant 0 : index
    %c0_106 = arith.constant 0 : index
    %111 = vector.load %arg3[%c1_104, %c0_105, %c0_106] : memref<6x72x8xf32, #tpu.memory_space<vmem>>, vector<1x72x8xf32>
    %112 = vector.shape_cast %111 : vector<1x72x8xf32> to vector<72x8xf32>
    %c2_107 = arith.constant 2 : index
    %c0_108 = arith.constant 0 : index
    %c0_109 = arith.constant 0 : index
    %113 = vector.load %arg5[%c2_107, %c0_108, %c0_109] : memref<7x1x8xf32, #tpu.memory_space<vmem>>, vector<1x1x8xf32>
    %114 = vector.shape_cast %113 : vector<1x1x8xf32> to vector<1x8xf32>
    %c2_110 = arith.constant 2 : index
    %c0_111 = arith.constant 0 : index
    %c0_112 = arith.constant 0 : index
    %115 = vector.load %arg6[%c2_110, %c0_111, %c0_112] : memref<7x1x8xf32, #tpu.memory_space<vmem>>, vector<1x1x8xf32>
    %116 = vector.shape_cast %115 : vector<1x1x8xf32> to vector<1x8xf32>
    %c0_113 = arith.constant 0 : index
    %c0_114 = arith.constant 0 : index
    %117 = vector.load %arg11[%c0_113, %c0_114] : memref<42x8xf32, #tpu.memory_space<vmem>>, vector<24x8xf32>
    %c0_115 = arith.constant 0 : index
    %c0_116 = arith.constant 0 : index
    %118 = vector.load %arg12[%c0_115, %c0_116] : memref<24x288xf32, #tpu.memory_space<vmem>>, vector<24x8xf32>
    tpu.vector_store %arg12[%c0_115, %c0_116], %117 {strides = array<i32>} : memref<24x288xf32, #tpu.memory_space<vmem>>, vector<24x8xf32>,
    %c1_117 = arith.constant 1 : index
    %c0_118 = arith.constant 0 : index
    %119 = vector.load %arg11[%c1_117, %c0_118] : memref<42x8xf32, #tpu.memory_space<vmem>>, vector<24x8xf32>
    %c0_119 = arith.constant 0 : index
    %c8_120 = arith.constant 8 : index
    %120 = vector.load %arg12[%c0_119, %c8_120] : memref<24x288xf32, #tpu.memory_space<vmem>>, vector<24x8xf32>
    tpu.vector_store %arg12[%c0_119, %c8_120], %119 {strides = array<i32>} : memref<24x288xf32, #tpu.memory_space<vmem>>, vector<24x8xf32>,
    %c2_121 = arith.constant 2 : index
    %c0_122 = arith.constant 0 : index
    %121 = vector.load %arg11[%c2_121, %c0_122] : memref<42x8xf32, #tpu.memory_space<vmem>>, vector<24x8xf32>
    %c0_123 = arith.constant 0 : index
    %c16_124 = arith.constant 16 : index
    %122 = vector.load %arg12[%c0_123, %c16_124] : memref<24x288xf32, #tpu.memory_space<vmem>>, vector<24x8xf32>
    tpu.vector_store %arg12[%c0_123, %c16_124], %121 {strides = array<i32>} : memref<24x288xf32, #tpu.memory_space<vmem>>, vector<24x8xf32>,
    %c6_125 = arith.constant 6 : index
    %c0_126 = arith.constant 0 : index
    %123 = vector.load %arg11[%c6_125, %c0_126] : memref<42x8xf32, #tpu.memory_space<vmem>>, vector<24x8xf32>
    %c0_127 = arith.constant 0 : index
    %c24_128 = arith.constant 24 : index
    %124 = vector.load %arg12[%c0_127, %c24_128] : memref<24x288xf32, #tpu.memory_space<vmem>>, vector<24x8xf32>
    tpu.vector_store %arg12[%c0_127, %c24_128], %123 {strides = array<i32>} : memref<24x288xf32, #tpu.memory_space<vmem>>, vector<24x8xf32>,
    %c7_129 = arith.constant 7 : index
    %c0_130 = arith.constant 0 : index
    %125 = vector.load %arg11[%c7_129, %c0_130] : memref<42x8xf32, #tpu.memory_space<vmem>>, vector<24x8xf32>
    %c0_131 = arith.constant 0 : index
    %c32_132 = arith.constant 32 : index
    %126 = vector.load %arg12[%c0_131, %c32_132] : memref<24x288xf32, #tpu.memory_space<vmem>>, vector<24x8xf32>
    tpu.vector_store %arg12[%c0_131, %c32_132], %125 {strides = array<i32>} : memref<24x288xf32, #tpu.memory_space<vmem>>, vector<24x8xf32>,
    %c8_133 = arith.constant 8 : index
    %c0_134 = arith.constant 0 : index
    %127 = vector.load %arg11[%c8_133, %c0_134] : memref<42x8xf32, #tpu.memory_space<vmem>>, vector<24x8xf32>
    %c0_135 = arith.constant 0 : index
    %c40_136 = arith.constant 40 : index
    %128 = vector.load %arg12[%c0_135, %c40_136] : memref<24x288xf32, #tpu.memory_space<vmem>>, vector<24x8xf32>
    tpu.vector_store %arg12[%c0_135, %c40_136], %127 {strides = array<i32>} : memref<24x288xf32, #tpu.memory_space<vmem>>, vector<24x8xf32>,
    %c12_137 = arith.constant 12 : index
    %c0_138 = arith.constant 0 : index
    %129 = vector.load %arg11[%c12_137, %c0_138] : memref<42x8xf32, #tpu.memory_space<vmem>>, vector<24x8xf32>
    %c0_139 = arith.constant 0 : index
    %c48_140 = arith.constant 48 : index
    %130 = vector.load %arg12[%c0_139, %c48_140] : memref<24x288xf32, #tpu.memory_space<vmem>>, vector<24x8xf32>
    tpu.vector_store %arg12[%c0_139, %c48_140], %129 {strides = array<i32>} : memref<24x288xf32, #tpu.memory_space<vmem>>, vector<24x8xf32>,
    %c13_141 = arith.constant 13 : index
    %c0_142 = arith.constant 0 : index
    %131 = vector.load %arg11[%c13_141, %c0_142] : memref<42x8xf32, #tpu.memory_space<vmem>>, vector<24x8xf32>
    %c0_143 = arith.constant 0 : index
    %c56_144 = arith.constant 56 : index
    %132 = vector.load %arg12[%c0_143, %c56_144] : memref<24x288xf32, #tpu.memory_space<vmem>>, vector<24x8xf32>
    tpu.vector_store %arg12[%c0_143, %c56_144], %131 {strides = array<i32>} : memref<24x288xf32, #tpu.memory_space<vmem>>, vector<24x8xf32>,
    %c14_145 = arith.constant 14 : index
    %c0_146 = arith.constant 0 : index
    %133 = vector.load %arg11[%c14_145, %c0_146] : memref<42x8xf32, #tpu.memory_space<vmem>>, vector<24x8xf32>
    %c0_147 = arith.constant 0 : index
    %c64_148 = arith.constant 64 : index
    %134 = vector.load %arg12[%c0_147, %c64_148] : memref<24x288xf32, #tpu.memory_space<vmem>>, vector<24x8xf32>
    tpu.vector_store %arg12[%c0_147, %c64_148], %133 {strides = array<i32>} : memref<24x288xf32, #tpu.memory_space<vmem>>, vector<24x8xf32>,
    %c0_149 = arith.constant 0 : index
    %c0_150 = arith.constant 0 : index
    %135 = vector.load %arg12[%c0_149, %c0_150] : memref<24x288xf32, #tpu.memory_space<vmem>>, vector<24x72xf32>
    %cst_151 = arith.constant dense<0.000000e+00> : vector<24x8xf32>
    %136 = tpu.matmul %135, %112, %cst_151 {dimension_numbers = #tpu.dot_dimension_numbers<[1], [0], [0], [1], [0, 0, 1, 1], [], []>} : vector<24x72xf32>, vector<72x8xf32>, vector<24x8xf32> -> vector<24x8xf32>
    %137 = vector.broadcast %114 : vector<1x8xf32> to vector<24x8xf32>
    %138 = arith.mulf %136, %137 : vector<24x8xf32>
    %139 = vector.broadcast %116 : vector<1x8xf32> to vector<24x8xf32>
    %140 = arith.addf %138, %139 : vector<24x8xf32>
    %cst_152 = arith.constant 0.000000e+00 : f32
    %141 = vector.broadcast %cst_152 : f32 to vector<24x8xf32>
    %142 = arith.maximumf %140, %141 : vector<24x8xf32>
    %cst_153 = arith.constant 0.000000e+00 : f32
    %143 = vector.shape_cast %18 : vector<24x1xi1> to vector<24x1xi1>
    %144 = vector.broadcast %143 : vector<24x1xi1> to vector<24x8xi1>
    %145 = vector.broadcast %cst_153 : f32 to vector<24x8xf32>
    %146 = arith.select %144, %142, %145 : vector<24x8xi1>, vector<24x8xf32>
    %c2_154 = arith.constant 2 : index
    %c0_155 = arith.constant 0 : index
    %c0_156 = arith.constant 0 : index
    %147 = vector.load %arg13[%c2_154, %c0_155, %c0_156] : memref<3x24x8xf32, #tpu.memory_space<vmem>>, vector<1x24x8xf32>
    %148 = vector.shape_cast %147 : vector<1x24x8xf32> to vector<24x8xf32>
    %149 = vector.shape_cast %146 : vector<24x8xf32> to vector<1x24x8xf32>
    tpu.vector_store %arg13[%c2_154, %c0_155, %c0_156], %149 {strides = array<i32>} : memref<3x24x8xf32, #tpu.memory_space<vmem>>, vector<1x24x8xf32>,
    %c7_157 = arith.constant 7 : index
    %c0_158 = arith.constant 0 : index
    %150 = vector.load %arg10[%c7_157, %c0_158] : memref<42x8xf32, #tpu.memory_space<vmem>>, vector<24x8xf32>
    tpu.vector_store %arg10[%c7_157, %c0_158], %146 {strides = array<i32>} : memref<42x8xf32, #tpu.memory_space<vmem>>, vector<24x8xf32>,
    %c2_159 = arith.constant 2 : index
    %c0_160 = arith.constant 0 : index
    %c0_161 = arith.constant 0 : index
    %151 = vector.load %arg3[%c2_159, %c0_160, %c0_161] : memref<6x72x8xf32, #tpu.memory_space<vmem>>, vector<1x72x8xf32>
    %152 = vector.shape_cast %151 : vector<1x72x8xf32> to vector<72x8xf32>
    %c3 = arith.constant 3 : index
    %c0_162 = arith.constant 0 : index
    %c0_163 = arith.constant 0 : index
    %153 = vector.load %arg5[%c3, %c0_162, %c0_163] : memref<7x1x8xf32, #tpu.memory_space<vmem>>, vector<1x1x8xf32>
    %154 = vector.shape_cast %153 : vector<1x1x8xf32> to vector<1x8xf32>
    %c3_164 = arith.constant 3 : index
    %c0_165 = arith.constant 0 : index
    %c0_166 = arith.constant 0 : index
    %155 = vector.load %arg6[%c3_164, %c0_165, %c0_166] : memref<7x1x8xf32, #tpu.memory_space<vmem>>, vector<1x1x8xf32>
    %156 = vector.shape_cast %155 : vector<1x1x8xf32> to vector<1x8xf32>
    %c0_167 = arith.constant 0 : index
    %c0_168 = arith.constant 0 : index
    %157 = vector.load %arg10[%c0_167, %c0_168] : memref<42x8xf32, #tpu.memory_space<vmem>>, vector<24x8xf32>
    %c0_169 = arith.constant 0 : index
    %c0_170 = arith.constant 0 : index
    %158 = vector.load %arg12[%c0_169, %c0_170] : memref<24x288xf32, #tpu.memory_space<vmem>>, vector<24x8xf32>
    tpu.vector_store %arg12[%c0_169, %c0_170], %157 {strides = array<i32>} : memref<24x288xf32, #tpu.memory_space<vmem>>, vector<24x8xf32>,
    %c1_171 = arith.constant 1 : index
    %c0_172 = arith.constant 0 : index
    %159 = vector.load %arg10[%c1_171, %c0_172] : memref<42x8xf32, #tpu.memory_space<vmem>>, vector<24x8xf32>
    %c0_173 = arith.constant 0 : index
    %c8_174 = arith.constant 8 : index
    %160 = vector.load %arg12[%c0_173, %c8_174] : memref<24x288xf32, #tpu.memory_space<vmem>>, vector<24x8xf32>
    tpu.vector_store %arg12[%c0_173, %c8_174], %159 {strides = array<i32>} : memref<24x288xf32, #tpu.memory_space<vmem>>, vector<24x8xf32>,
    %c2_175 = arith.constant 2 : index
    %c0_176 = arith.constant 0 : index
    %161 = vector.load %arg10[%c2_175, %c0_176] : memref<42x8xf32, #tpu.memory_space<vmem>>, vector<24x8xf32>
    %c0_177 = arith.constant 0 : index
    %c16_178 = arith.constant 16 : index
    %162 = vector.load %arg12[%c0_177, %c16_178] : memref<24x288xf32, #tpu.memory_space<vmem>>, vector<24x8xf32>
    tpu.vector_store %arg12[%c0_177, %c16_178], %161 {strides = array<i32>} : memref<24x288xf32, #tpu.memory_space<vmem>>, vector<24x8xf32>,
    %c6_179 = arith.constant 6 : index
    %c0_180 = arith.constant 0 : index
    %163 = vector.load %arg10[%c6_179, %c0_180] : memref<42x8xf32, #tpu.memory_space<vmem>>, vector<24x8xf32>
    %c0_181 = arith.constant 0 : index
    %c24_182 = arith.constant 24 : index
    %164 = vector.load %arg12[%c0_181, %c24_182] : memref<24x288xf32, #tpu.memory_space<vmem>>, vector<24x8xf32>
    tpu.vector_store %arg12[%c0_181, %c24_182], %163 {strides = array<i32>} : memref<24x288xf32, #tpu.memory_space<vmem>>, vector<24x8xf32>,
    %c7_183 = arith.constant 7 : index
    %c0_184 = arith.constant 0 : index
    %165 = vector.load %arg10[%c7_183, %c0_184] : memref<42x8xf32, #tpu.memory_space<vmem>>, vector<24x8xf32>
    %c0_185 = arith.constant 0 : index
    %c32_186 = arith.constant 32 : index
    %166 = vector.load %arg12[%c0_185, %c32_186] : memref<24x288xf32, #tpu.memory_space<vmem>>, vector<24x8xf32>
    tpu.vector_store %arg12[%c0_185, %c32_186], %165 {strides = array<i32>} : memref<24x288xf32, #tpu.memory_space<vmem>>, vector<24x8xf32>,
    %c8_187 = arith.constant 8 : index
    %c0_188 = arith.constant 0 : index
    %167 = vector.load %arg10[%c8_187, %c0_188] : memref<42x8xf32, #tpu.memory_space<vmem>>, vector<24x8xf32>
    %c0_189 = arith.constant 0 : index
    %c40_190 = arith.constant 40 : index
    %168 = vector.load %arg12[%c0_189, %c40_190] : memref<24x288xf32, #tpu.memory_space<vmem>>, vector<24x8xf32>
    tpu.vector_store %arg12[%c0_189, %c40_190], %167 {strides = array<i32>} : memref<24x288xf32, #tpu.memory_space<vmem>>, vector<24x8xf32>,
    %c12_191 = arith.constant 12 : index
    %c0_192 = arith.constant 0 : index
    %169 = vector.load %arg10[%c12_191, %c0_192] : memref<42x8xf32, #tpu.memory_space<vmem>>, vector<24x8xf32>
    %c0_193 = arith.constant 0 : index
    %c48_194 = arith.constant 48 : index
    %170 = vector.load %arg12[%c0_193, %c48_194] : memref<24x288xf32, #tpu.memory_space<vmem>>, vector<24x8xf32>
    tpu.vector_store %arg12[%c0_193, %c48_194], %169 {strides = array<i32>} : memref<24x288xf32, #tpu.memory_space<vmem>>, vector<24x8xf32>,
    %c13_195 = arith.constant 13 : index
    %c0_196 = arith.constant 0 : index
    %171 = vector.load %arg10[%c13_195, %c0_196] : memref<42x8xf32, #tpu.memory_space<vmem>>, vector<24x8xf32>
    %c0_197 = arith.constant 0 : index
    %c56_198 = arith.constant 56 : index
    %172 = vector.load %arg12[%c0_197, %c56_198] : memref<24x288xf32, #tpu.memory_space<vmem>>, vector<24x8xf32>
    tpu.vector_store %arg12[%c0_197, %c56_198], %171 {strides = array<i32>} : memref<24x288xf32, #tpu.memory_space<vmem>>, vector<24x8xf32>,
    %c14_199 = arith.constant 14 : index
    %c0_200 = arith.constant 0 : index
    %173 = vector.load %arg10[%c14_199, %c0_200] : memref<42x8xf32, #tpu.memory_space<vmem>>, vector<24x8xf32>
    %c0_201 = arith.constant 0 : index
    %c64_202 = arith.constant 64 : index
    %174 = vector.load %arg12[%c0_201, %c64_202] : memref<24x288xf32, #tpu.memory_space<vmem>>, vector<24x8xf32>
    tpu.vector_store %arg12[%c0_201, %c64_202], %173 {strides = array<i32>} : memref<24x288xf32, #tpu.memory_space<vmem>>, vector<24x8xf32>,
    %c0_203 = arith.constant 0 : index
    %c0_204 = arith.constant 0 : index
    %175 = vector.load %arg12[%c0_203, %c0_204] : memref<24x288xf32, #tpu.memory_space<vmem>>, vector<24x72xf32>
    %cst_205 = arith.constant dense<0.000000e+00> : vector<24x8xf32>
    %176 = tpu.matmul %175, %152, %cst_205 {dimension_numbers = #tpu.dot_dimension_numbers<[1], [0], [0], [1], [0, 0, 1, 1], [], []>} : vector<24x72xf32>, vector<72x8xf32>, vector<24x8xf32> -> vector<24x8xf32>
    %177 = vector.broadcast %154 : vector<1x8xf32> to vector<24x8xf32>
    %178 = arith.mulf %176, %177 : vector<24x8xf32>
    %179 = vector.broadcast %156 : vector<1x8xf32> to vector<24x8xf32>
    %180 = arith.addf %178, %179 : vector<24x8xf32>
    %cst_206 = arith.constant 0.000000e+00 : f32
    %181 = vector.broadcast %cst_206 : f32 to vector<24x8xf32>
    %182 = arith.maximumf %180, %181 : vector<24x8xf32>
    %cst_207 = arith.constant 0.000000e+00 : f32
    %183 = vector.shape_cast %18 : vector<24x1xi1> to vector<24x1xi1>
    %184 = vector.broadcast %183 : vector<24x1xi1> to vector<24x8xi1>
    %185 = vector.broadcast %cst_207 : f32 to vector<24x8xf32>
    %186 = arith.select %184, %182, %185 : vector<24x8xi1>, vector<24x8xf32>
    %c7_208 = arith.constant 7 : index
    %c0_209 = arith.constant 0 : index
    %187 = vector.load %arg11[%c7_208, %c0_209] : memref<42x8xf32, #tpu.memory_space<vmem>>, vector<24x8xf32>
    tpu.vector_store %arg11[%c7_208, %c0_209], %186 {strides = array<i32>} : memref<42x8xf32, #tpu.memory_space<vmem>>, vector<24x8xf32>,
    %c2_210 = arith.constant 2 : index
    %c0_211 = arith.constant 0 : index
    %c0_212 = arith.constant 0 : index
    %188 = vector.load %arg13[%c2_210, %c0_211, %c0_212] : memref<3x24x8xf32, #tpu.memory_space<vmem>>, vector<1x24x8xf32>
    %189 = vector.shape_cast %188 : vector<1x24x8xf32> to vector<24x8xf32>
    %c3_213 = arith.constant 3 : index
    %c0_214 = arith.constant 0 : index
    %c0_215 = arith.constant 0 : index
    %190 = vector.load %arg3[%c3_213, %c0_214, %c0_215] : memref<6x72x8xf32, #tpu.memory_space<vmem>>, vector<1x72x8xf32>
    %191 = vector.shape_cast %190 : vector<1x72x8xf32> to vector<72x8xf32>
    %c4 = arith.constant 4 : index
    %c0_216 = arith.constant 0 : index
    %c0_217 = arith.constant 0 : index
    %192 = vector.load %arg5[%c4, %c0_216, %c0_217] : memref<7x1x8xf32, #tpu.memory_space<vmem>>, vector<1x1x8xf32>
    %193 = vector.shape_cast %192 : vector<1x1x8xf32> to vector<1x8xf32>
    %c4_218 = arith.constant 4 : index
    %c0_219 = arith.constant 0 : index
    %c0_220 = arith.constant 0 : index
    %194 = vector.load %arg6[%c4_218, %c0_219, %c0_220] : memref<7x1x8xf32, #tpu.memory_space<vmem>>, vector<1x1x8xf32>
    %195 = vector.shape_cast %194 : vector<1x1x8xf32> to vector<1x8xf32>
    %c0_221 = arith.constant 0 : index
    %c0_222 = arith.constant 0 : index
    %196 = vector.load %arg11[%c0_221, %c0_222] : memref<42x8xf32, #tpu.memory_space<vmem>>, vector<24x8xf32>
    %c0_223 = arith.constant 0 : index
    %c0_224 = arith.constant 0 : index
    %197 = vector.load %arg12[%c0_223, %c0_224] : memref<24x288xf32, #tpu.memory_space<vmem>>, vector<24x8xf32>
    tpu.vector_store %arg12[%c0_223, %c0_224], %196 {strides = array<i32>} : memref<24x288xf32, #tpu.memory_space<vmem>>, vector<24x8xf32>,
    %c1_225 = arith.constant 1 : index
    %c0_226 = arith.constant 0 : index
    %198 = vector.load %arg11[%c1_225, %c0_226] : memref<42x8xf32, #tpu.memory_space<vmem>>, vector<24x8xf32>
    %c0_227 = arith.constant 0 : index
    %c8_228 = arith.constant 8 : index
    %199 = vector.load %arg12[%c0_227, %c8_228] : memref<24x288xf32, #tpu.memory_space<vmem>>, vector<24x8xf32>
    tpu.vector_store %arg12[%c0_227, %c8_228], %198 {strides = array<i32>} : memref<24x288xf32, #tpu.memory_space<vmem>>, vector<24x8xf32>,
    %c2_229 = arith.constant 2 : index
    %c0_230 = arith.constant 0 : index
    %200 = vector.load %arg11[%c2_229, %c0_230] : memref<42x8xf32, #tpu.memory_space<vmem>>, vector<24x8xf32>
    %c0_231 = arith.constant 0 : index
    %c16_232 = arith.constant 16 : index
    %201 = vector.load %arg12[%c0_231, %c16_232] : memref<24x288xf32, #tpu.memory_space<vmem>>, vector<24x8xf32>
    tpu.vector_store %arg12[%c0_231, %c16_232], %200 {strides = array<i32>} : memref<24x288xf32, #tpu.memory_space<vmem>>, vector<24x8xf32>,
    %c6_233 = arith.constant 6 : index
    %c0_234 = arith.constant 0 : index
    %202 = vector.load %arg11[%c6_233, %c0_234] : memref<42x8xf32, #tpu.memory_space<vmem>>, vector<24x8xf32>
    %c0_235 = arith.constant 0 : index
    %c24_236 = arith.constant 24 : index
    %203 = vector.load %arg12[%c0_235, %c24_236] : memref<24x288xf32, #tpu.memory_space<vmem>>, vector<24x8xf32>
    tpu.vector_store %arg12[%c0_235, %c24_236], %202 {strides = array<i32>} : memref<24x288xf32, #tpu.memory_space<vmem>>, vector<24x8xf32>,
    %c7_237 = arith.constant 7 : index
    %c0_238 = arith.constant 0 : index
    %204 = vector.load %arg11[%c7_237, %c0_238] : memref<42x8xf32, #tpu.memory_space<vmem>>, vector<24x8xf32>
    %c0_239 = arith.constant 0 : index
    %c32_240 = arith.constant 32 : index
    %205 = vector.load %arg12[%c0_239, %c32_240] : memref<24x288xf32, #tpu.memory_space<vmem>>, vector<24x8xf32>
    tpu.vector_store %arg12[%c0_239, %c32_240], %204 {strides = array<i32>} : memref<24x288xf32, #tpu.memory_space<vmem>>, vector<24x8xf32>,
    %c8_241 = arith.constant 8 : index
    %c0_242 = arith.constant 0 : index
    %206 = vector.load %arg11[%c8_241, %c0_242] : memref<42x8xf32, #tpu.memory_space<vmem>>, vector<24x8xf32>
    %c0_243 = arith.constant 0 : index
    %c40_244 = arith.constant 40 : index
    %207 = vector.load %arg12[%c0_243, %c40_244] : memref<24x288xf32, #tpu.memory_space<vmem>>, vector<24x8xf32>
    tpu.vector_store %arg12[%c0_243, %c40_244], %206 {strides = array<i32>} : memref<24x288xf32, #tpu.memory_space<vmem>>, vector<24x8xf32>,
    %c12_245 = arith.constant 12 : index
    %c0_246 = arith.constant 0 : index
    %208 = vector.load %arg11[%c12_245, %c0_246] : memref<42x8xf32, #tpu.memory_space<vmem>>, vector<24x8xf32>
    %c0_247 = arith.constant 0 : index
    %c48_248 = arith.constant 48 : index
    %209 = vector.load %arg12[%c0_247, %c48_248] : memref<24x288xf32, #tpu.memory_space<vmem>>, vector<24x8xf32>
    tpu.vector_store %arg12[%c0_247, %c48_248], %208 {strides = array<i32>} : memref<24x288xf32, #tpu.memory_space<vmem>>, vector<24x8xf32>,
    %c13_249 = arith.constant 13 : index
    %c0_250 = arith.constant 0 : index
    %210 = vector.load %arg11[%c13_249, %c0_250] : memref<42x8xf32, #tpu.memory_space<vmem>>, vector<24x8xf32>
    %c0_251 = arith.constant 0 : index
    %c56_252 = arith.constant 56 : index
    %211 = vector.load %arg12[%c0_251, %c56_252] : memref<24x288xf32, #tpu.memory_space<vmem>>, vector<24x8xf32>
    tpu.vector_store %arg12[%c0_251, %c56_252], %210 {strides = array<i32>} : memref<24x288xf32, #tpu.memory_space<vmem>>, vector<24x8xf32>,
    %c14_253 = arith.constant 14 : index
    %c0_254 = arith.constant 0 : index
    %212 = vector.load %arg11[%c14_253, %c0_254] : memref<42x8xf32, #tpu.memory_space<vmem>>, vector<24x8xf32>
    %c0_255 = arith.constant 0 : index
    %c64_256 = arith.constant 64 : index
    %213 = vector.load %arg12[%c0_255, %c64_256] : memref<24x288xf32, #tpu.memory_space<vmem>>, vector<24x8xf32>
    tpu.vector_store %arg12[%c0_255, %c64_256], %212 {strides = array<i32>} : memref<24x288xf32, #tpu.memory_space<vmem>>, vector<24x8xf32>,
    %c0_257 = arith.constant 0 : index
    %c0_258 = arith.constant 0 : index
    %214 = vector.load %arg12[%c0_257, %c0_258] : memref<24x288xf32, #tpu.memory_space<vmem>>, vector<24x72xf32>
    %cst_259 = arith.constant dense<0.000000e+00> : vector<24x8xf32>
    %215 = tpu.matmul %214, %191, %cst_259 {dimension_numbers = #tpu.dot_dimension_numbers<[1], [0], [0], [1], [0, 0, 1, 1], [], []>} : vector<24x72xf32>, vector<72x8xf32>, vector<24x8xf32> -> vector<24x8xf32>
    %216 = vector.broadcast %193 : vector<1x8xf32> to vector<24x8xf32>
    %217 = arith.mulf %215, %216 : vector<24x8xf32>
    %218 = vector.broadcast %195 : vector<1x8xf32> to vector<24x8xf32>
    %219 = arith.addf %217, %218 : vector<24x8xf32>
    %cst_260 = arith.constant 0.000000e+00 : f32
    %220 = vector.broadcast %cst_260 : f32 to vector<24x8xf32>
    %221 = arith.maximumf %219, %220 : vector<24x8xf32>
    %222 = arith.addf %221, %189 : vector<24x8xf32>
    %cst_261 = arith.constant 0.000000e+00 : f32
    %223 = vector.shape_cast %18 : vector<24x1xi1> to vector<24x1xi1>
    %224 = vector.broadcast %223 : vector<24x1xi1> to vector<24x8xi1>
    %225 = vector.broadcast %cst_261 : f32 to vector<24x8xf32>
    %226 = arith.select %224, %222, %225 : vector<24x8xi1>, vector<24x8xf32>
    %c7_262 = arith.constant 7 : index
    %c0_263 = arith.constant 0 : index
    %227 = vector.load %arg10[%c7_262, %c0_263] : memref<42x8xf32, #tpu.memory_space<vmem>>, vector<24x8xf32>
    tpu.vector_store %arg10[%c7_262, %c0_263], %226 {strides = array<i32>} : memref<42x8xf32, #tpu.memory_space<vmem>>, vector<24x8xf32>,
    %c1_264 = arith.constant 1 : index
    %c0_265 = arith.constant 0 : index
    %c0_266 = arith.constant 0 : index
    %228 = vector.load %arg13[%c1_264, %c0_265, %c0_266] : memref<3x24x8xf32, #tpu.memory_space<vmem>>, vector<1x24x8xf32>
    %229 = vector.shape_cast %228 : vector<1x24x8xf32> to vector<24x8xf32>
    %c4_267 = arith.constant 4 : index
    %c0_268 = arith.constant 0 : index
    %c0_269 = arith.constant 0 : index
    %230 = vector.load %arg3[%c4_267, %c0_268, %c0_269] : memref<6x72x8xf32, #tpu.memory_space<vmem>>, vector<1x72x8xf32>
    %231 = vector.shape_cast %230 : vector<1x72x8xf32> to vector<72x8xf32>
    %c5 = arith.constant 5 : index
    %c0_270 = arith.constant 0 : index
    %c0_271 = arith.constant 0 : index
    %232 = vector.load %arg5[%c5, %c0_270, %c0_271] : memref<7x1x8xf32, #tpu.memory_space<vmem>>, vector<1x1x8xf32>
    %233 = vector.shape_cast %232 : vector<1x1x8xf32> to vector<1x8xf32>
    %c5_272 = arith.constant 5 : index
    %c0_273 = arith.constant 0 : index
    %c0_274 = arith.constant 0 : index
    %234 = vector.load %arg6[%c5_272, %c0_273, %c0_274] : memref<7x1x8xf32, #tpu.memory_space<vmem>>, vector<1x1x8xf32>
    %235 = vector.shape_cast %234 : vector<1x1x8xf32> to vector<1x8xf32>
    %c0_275 = arith.constant 0 : index
    %c0_276 = arith.constant 0 : index
    %236 = vector.load %arg10[%c0_275, %c0_276] : memref<42x8xf32, #tpu.memory_space<vmem>>, vector<24x8xf32>
    %c0_277 = arith.constant 0 : index
    %c0_278 = arith.constant 0 : index
    %237 = vector.load %arg12[%c0_277, %c0_278] : memref<24x288xf32, #tpu.memory_space<vmem>>, vector<24x8xf32>
    tpu.vector_store %arg12[%c0_277, %c0_278], %236 {strides = array<i32>} : memref<24x288xf32, #tpu.memory_space<vmem>>, vector<24x8xf32>,
    %c1_279 = arith.constant 1 : index
    %c0_280 = arith.constant 0 : index
    %238 = vector.load %arg10[%c1_279, %c0_280] : memref<42x8xf32, #tpu.memory_space<vmem>>, vector<24x8xf32>
    %c0_281 = arith.constant 0 : index
    %c8_282 = arith.constant 8 : index
    %239 = vector.load %arg12[%c0_281, %c8_282] : memref<24x288xf32, #tpu.memory_space<vmem>>, vector<24x8xf32>
    tpu.vector_store %arg12[%c0_281, %c8_282], %238 {strides = array<i32>} : memref<24x288xf32, #tpu.memory_space<vmem>>, vector<24x8xf32>,
    %c2_283 = arith.constant 2 : index
    %c0_284 = arith.constant 0 : index
    %240 = vector.load %arg10[%c2_283, %c0_284] : memref<42x8xf32, #tpu.memory_space<vmem>>, vector<24x8xf32>
    %c0_285 = arith.constant 0 : index
    %c16_286 = arith.constant 16 : index
    %241 = vector.load %arg12[%c0_285, %c16_286] : memref<24x288xf32, #tpu.memory_space<vmem>>, vector<24x8xf32>
    tpu.vector_store %arg12[%c0_285, %c16_286], %240 {strides = array<i32>} : memref<24x288xf32, #tpu.memory_space<vmem>>, vector<24x8xf32>,
    %c6_287 = arith.constant 6 : index
    %c0_288 = arith.constant 0 : index
    %242 = vector.load %arg10[%c6_287, %c0_288] : memref<42x8xf32, #tpu.memory_space<vmem>>, vector<24x8xf32>
    %c0_289 = arith.constant 0 : index
    %c24_290 = arith.constant 24 : index
    %243 = vector.load %arg12[%c0_289, %c24_290] : memref<24x288xf32, #tpu.memory_space<vmem>>, vector<24x8xf32>
    tpu.vector_store %arg12[%c0_289, %c24_290], %242 {strides = array<i32>} : memref<24x288xf32, #tpu.memory_space<vmem>>, vector<24x8xf32>,
    %c7_291 = arith.constant 7 : index
    %c0_292 = arith.constant 0 : index
    %244 = vector.load %arg10[%c7_291, %c0_292] : memref<42x8xf32, #tpu.memory_space<vmem>>, vector<24x8xf32>
    %c0_293 = arith.constant 0 : index
    %c32_294 = arith.constant 32 : index
    %245 = vector.load %arg12[%c0_293, %c32_294] : memref<24x288xf32, #tpu.memory_space<vmem>>, vector<24x8xf32>
    tpu.vector_store %arg12[%c0_293, %c32_294], %244 {strides = array<i32>} : memref<24x288xf32, #tpu.memory_space<vmem>>, vector<24x8xf32>,
    %c8_295 = arith.constant 8 : index
    %c0_296 = arith.constant 0 : index
    %246 = vector.load %arg10[%c8_295, %c0_296] : memref<42x8xf32, #tpu.memory_space<vmem>>, vector<24x8xf32>
    %c0_297 = arith.constant 0 : index
    %c40_298 = arith.constant 40 : index
    %247 = vector.load %arg12[%c0_297, %c40_298] : memref<24x288xf32, #tpu.memory_space<vmem>>, vector<24x8xf32>
    tpu.vector_store %arg12[%c0_297, %c40_298], %246 {strides = array<i32>} : memref<24x288xf32, #tpu.memory_space<vmem>>, vector<24x8xf32>,
    %c12_299 = arith.constant 12 : index
    %c0_300 = arith.constant 0 : index
    %248 = vector.load %arg10[%c12_299, %c0_300] : memref<42x8xf32, #tpu.memory_space<vmem>>, vector<24x8xf32>
    %c0_301 = arith.constant 0 : index
    %c48_302 = arith.constant 48 : index
    %249 = vector.load %arg12[%c0_301, %c48_302] : memref<24x288xf32, #tpu.memory_space<vmem>>, vector<24x8xf32>
    tpu.vector_store %arg12[%c0_301, %c48_302], %248 {strides = array<i32>} : memref<24x288xf32, #tpu.memory_space<vmem>>, vector<24x8xf32>,
    %c13_303 = arith.constant 13 : index
    %c0_304 = arith.constant 0 : index
    %250 = vector.load %arg10[%c13_303, %c0_304] : memref<42x8xf32, #tpu.memory_space<vmem>>, vector<24x8xf32>
    %c0_305 = arith.constant 0 : index
    %c56_306 = arith.constant 56 : index
    %251 = vector.load %arg12[%c0_305, %c56_306] : memref<24x288xf32, #tpu.memory_space<vmem>>, vector<24x8xf32>
    tpu.vector_store %arg12[%c0_305, %c56_306], %250 {strides = array<i32>} : memref<24x288xf32, #tpu.memory_space<vmem>>, vector<24x8xf32>,
    %c14_307 = arith.constant 14 : index
    %c0_308 = arith.constant 0 : index
    %252 = vector.load %arg10[%c14_307, %c0_308] : memref<42x8xf32, #tpu.memory_space<vmem>>, vector<24x8xf32>
    %c0_309 = arith.constant 0 : index
    %c64_310 = arith.constant 64 : index
    %253 = vector.load %arg12[%c0_309, %c64_310] : memref<24x288xf32, #tpu.memory_space<vmem>>, vector<24x8xf32>
    tpu.vector_store %arg12[%c0_309, %c64_310], %252 {strides = array<i32>} : memref<24x288xf32, #tpu.memory_space<vmem>>, vector<24x8xf32>,
    %c0_311 = arith.constant 0 : index
    %c0_312 = arith.constant 0 : index
    %254 = vector.load %arg12[%c0_311, %c0_312] : memref<24x288xf32, #tpu.memory_space<vmem>>, vector<24x72xf32>
    %cst_313 = arith.constant dense<0.000000e+00> : vector<24x8xf32>
    %255 = tpu.matmul %254, %231, %cst_313 {dimension_numbers = #tpu.dot_dimension_numbers<[1], [0], [0], [1], [0, 0, 1, 1], [], []>} : vector<24x72xf32>, vector<72x8xf32>, vector<24x8xf32> -> vector<24x8xf32>
    %256 = vector.broadcast %233 : vector<1x8xf32> to vector<24x8xf32>
    %257 = arith.mulf %255, %256 : vector<24x8xf32>
    %258 = vector.broadcast %235 : vector<1x8xf32> to vector<24x8xf32>
    %259 = arith.addf %257, %258 : vector<24x8xf32>
    %cst_314 = arith.constant 0.000000e+00 : f32
    %260 = vector.broadcast %cst_314 : f32 to vector<24x8xf32>
    %261 = arith.maximumf %259, %260 : vector<24x8xf32>
    %262 = arith.addf %261, %229 : vector<24x8xf32>
    %cst_315 = arith.constant 0.000000e+00 : f32
    %263 = vector.shape_cast %18 : vector<24x1xi1> to vector<24x1xi1>
    %264 = vector.broadcast %263 : vector<24x1xi1> to vector<24x8xi1>
    %265 = vector.broadcast %cst_315 : f32 to vector<24x8xf32>
    %266 = arith.select %264, %262, %265 : vector<24x8xi1>, vector<24x8xf32>
    %c7_316 = arith.constant 7 : index
    %c0_317 = arith.constant 0 : index
    %267 = vector.load %arg11[%c7_316, %c0_317] : memref<42x8xf32, #tpu.memory_space<vmem>>, vector<24x8xf32>
    tpu.vector_store %arg11[%c7_316, %c0_317], %266 {strides = array<i32>} : memref<42x8xf32, #tpu.memory_space<vmem>>, vector<24x8xf32>,
    %c0_318 = arith.constant 0 : index
    %c0_319 = arith.constant 0 : index
    %c0_320 = arith.constant 0 : index
    %268 = vector.load %arg13[%c0_318, %c0_319, %c0_320] : memref<3x24x8xf32, #tpu.memory_space<vmem>>, vector<1x24x8xf32>
    %269 = vector.shape_cast %268 : vector<1x24x8xf32> to vector<24x8xf32>
    %c5_321 = arith.constant 5 : index
    %c0_322 = arith.constant 0 : index
    %c0_323 = arith.constant 0 : index
    %270 = vector.load %arg3[%c5_321, %c0_322, %c0_323] : memref<6x72x8xf32, #tpu.memory_space<vmem>>, vector<1x72x8xf32>
    %271 = vector.shape_cast %270 : vector<1x72x8xf32> to vector<72x8xf32>
    %c6_324 = arith.constant 6 : index
    %c0_325 = arith.constant 0 : index
    %c0_326 = arith.constant 0 : index
    %272 = vector.load %arg5[%c6_324, %c0_325, %c0_326] : memref<7x1x8xf32, #tpu.memory_space<vmem>>, vector<1x1x8xf32>
    %273 = vector.shape_cast %272 : vector<1x1x8xf32> to vector<1x8xf32>
    %c6_327 = arith.constant 6 : index
    %c0_328 = arith.constant 0 : index
    %c0_329 = arith.constant 0 : index
    %274 = vector.load %arg6[%c6_327, %c0_328, %c0_329] : memref<7x1x8xf32, #tpu.memory_space<vmem>>, vector<1x1x8xf32>
    %275 = vector.shape_cast %274 : vector<1x1x8xf32> to vector<1x8xf32>
    %c0_330 = arith.constant 0 : index
    %c0_331 = arith.constant 0 : index
    %276 = vector.load %arg11[%c0_330, %c0_331] : memref<42x8xf32, #tpu.memory_space<vmem>>, vector<24x8xf32>
    %c0_332 = arith.constant 0 : index
    %c0_333 = arith.constant 0 : index
    %277 = vector.load %arg12[%c0_332, %c0_333] : memref<24x288xf32, #tpu.memory_space<vmem>>, vector<24x8xf32>
    tpu.vector_store %arg12[%c0_332, %c0_333], %276 {strides = array<i32>} : memref<24x288xf32, #tpu.memory_space<vmem>>, vector<24x8xf32>,
    %c1_334 = arith.constant 1 : index
    %c0_335 = arith.constant 0 : index
    %278 = vector.load %arg11[%c1_334, %c0_335] : memref<42x8xf32, #tpu.memory_space<vmem>>, vector<24x8xf32>
    %c0_336 = arith.constant 0 : index
    %c8_337 = arith.constant 8 : index
    %279 = vector.load %arg12[%c0_336, %c8_337] : memref<24x288xf32, #tpu.memory_space<vmem>>, vector<24x8xf32>
    tpu.vector_store %arg12[%c0_336, %c8_337], %278 {strides = array<i32>} : memref<24x288xf32, #tpu.memory_space<vmem>>, vector<24x8xf32>,
    %c2_338 = arith.constant 2 : index
    %c0_339 = arith.constant 0 : index
    %280 = vector.load %arg11[%c2_338, %c0_339] : memref<42x8xf32, #tpu.memory_space<vmem>>, vector<24x8xf32>
    %c0_340 = arith.constant 0 : index
    %c16_341 = arith.constant 16 : index
    %281 = vector.load %arg12[%c0_340, %c16_341] : memref<24x288xf32, #tpu.memory_space<vmem>>, vector<24x8xf32>
    tpu.vector_store %arg12[%c0_340, %c16_341], %280 {strides = array<i32>} : memref<24x288xf32, #tpu.memory_space<vmem>>, vector<24x8xf32>,
    %c6_342 = arith.constant 6 : index
    %c0_343 = arith.constant 0 : index
    %282 = vector.load %arg11[%c6_342, %c0_343] : memref<42x8xf32, #tpu.memory_space<vmem>>, vector<24x8xf32>
    %c0_344 = arith.constant 0 : index
    %c24_345 = arith.constant 24 : index
    %283 = vector.load %arg12[%c0_344, %c24_345] : memref<24x288xf32, #tpu.memory_space<vmem>>, vector<24x8xf32>
    tpu.vector_store %arg12[%c0_344, %c24_345], %282 {strides = array<i32>} : memref<24x288xf32, #tpu.memory_space<vmem>>, vector<24x8xf32>,
    %c7_346 = arith.constant 7 : index
    %c0_347 = arith.constant 0 : index
    %284 = vector.load %arg11[%c7_346, %c0_347] : memref<42x8xf32, #tpu.memory_space<vmem>>, vector<24x8xf32>
    %c0_348 = arith.constant 0 : index
    %c32_349 = arith.constant 32 : index
    %285 = vector.load %arg12[%c0_348, %c32_349] : memref<24x288xf32, #tpu.memory_space<vmem>>, vector<24x8xf32>
    tpu.vector_store %arg12[%c0_348, %c32_349], %284 {strides = array<i32>} : memref<24x288xf32, #tpu.memory_space<vmem>>, vector<24x8xf32>,
    %c8_350 = arith.constant 8 : index
    %c0_351 = arith.constant 0 : index
    %286 = vector.load %arg11[%c8_350, %c0_351] : memref<42x8xf32, #tpu.memory_space<vmem>>, vector<24x8xf32>
    %c0_352 = arith.constant 0 : index
    %c40_353 = arith.constant 40 : index
    %287 = vector.load %arg12[%c0_352, %c40_353] : memref<24x288xf32, #tpu.memory_space<vmem>>, vector<24x8xf32>
    tpu.vector_store %arg12[%c0_352, %c40_353], %286 {strides = array<i32>} : memref<24x288xf32, #tpu.memory_space<vmem>>, vector<24x8xf32>,
    %c12_354 = arith.constant 12 : index
    %c0_355 = arith.constant 0 : index
    %288 = vector.load %arg11[%c12_354, %c0_355] : memref<42x8xf32, #tpu.memory_space<vmem>>, vector<24x8xf32>
    %c0_356 = arith.constant 0 : index
    %c48_357 = arith.constant 48 : index
    %289 = vector.load %arg12[%c0_356, %c48_357] : memref<24x288xf32, #tpu.memory_space<vmem>>, vector<24x8xf32>
    tpu.vector_store %arg12[%c0_356, %c48_357], %288 {strides = array<i32>} : memref<24x288xf32, #tpu.memory_space<vmem>>, vector<24x8xf32>,
    %c13_358 = arith.constant 13 : index
    %c0_359 = arith.constant 0 : index
    %290 = vector.load %arg11[%c13_358, %c0_359] : memref<42x8xf32, #tpu.memory_space<vmem>>, vector<24x8xf32>
    %c0_360 = arith.constant 0 : index
    %c56_361 = arith.constant 56 : index
    %291 = vector.load %arg12[%c0_360, %c56_361] : memref<24x288xf32, #tpu.memory_space<vmem>>, vector<24x8xf32>
    tpu.vector_store %arg12[%c0_360, %c56_361], %290 {strides = array<i32>} : memref<24x288xf32, #tpu.memory_space<vmem>>, vector<24x8xf32>,
    %c14_362 = arith.constant 14 : index
    %c0_363 = arith.constant 0 : index
    %292 = vector.load %arg11[%c14_362, %c0_363] : memref<42x8xf32, #tpu.memory_space<vmem>>, vector<24x8xf32>
    %c0_364 = arith.constant 0 : index
    %c64_365 = arith.constant 64 : index
    %293 = vector.load %arg12[%c0_364, %c64_365] : memref<24x288xf32, #tpu.memory_space<vmem>>, vector<24x8xf32>
    tpu.vector_store %arg12[%c0_364, %c64_365], %292 {strides = array<i32>} : memref<24x288xf32, #tpu.memory_space<vmem>>, vector<24x8xf32>,
    %c0_366 = arith.constant 0 : index
    %c0_367 = arith.constant 0 : index
    %294 = vector.load %arg12[%c0_366, %c0_367] : memref<24x288xf32, #tpu.memory_space<vmem>>, vector<24x72xf32>
    %cst_368 = arith.constant dense<0.000000e+00> : vector<24x8xf32>
    %295 = tpu.matmul %294, %271, %cst_368 {dimension_numbers = #tpu.dot_dimension_numbers<[1], [0], [0], [1], [0, 0, 1, 1], [], []>} : vector<24x72xf32>, vector<72x8xf32>, vector<24x8xf32> -> vector<24x8xf32>
    %296 = vector.broadcast %273 : vector<1x8xf32> to vector<24x8xf32>
    %297 = arith.mulf %295, %296 : vector<24x8xf32>
    %298 = vector.broadcast %275 : vector<1x8xf32> to vector<24x8xf32>
    %299 = arith.addf %297, %298 : vector<24x8xf32>
    %cst_369 = arith.constant 0.000000e+00 : f32
    %300 = vector.broadcast %cst_369 : f32 to vector<24x8xf32>
    %301 = arith.maximumf %299, %300 : vector<24x8xf32>
    %302 = arith.addf %301, %269 : vector<24x8xf32>
    %cst_370 = arith.constant 0.000000e+00 : f32
    %303 = vector.shape_cast %18 : vector<24x1xi1> to vector<24x1xi1>
    %304 = vector.broadcast %303 : vector<24x1xi1> to vector<24x8xi1>
    %305 = vector.broadcast %cst_370 : f32 to vector<24x8xf32>
    %306 = arith.select %304, %302, %305 : vector<24x8xi1>, vector<24x8xf32>
    %c7_371 = arith.constant 7 : index
    %c0_372 = arith.constant 0 : index
    %307 = vector.load %arg10[%c7_371, %c0_372] : memref<42x8xf32, #tpu.memory_space<vmem>>, vector<24x8xf32>
    tpu.vector_store %arg10[%c7_371, %c0_372], %306 {strides = array<i32>} : memref<42x8xf32, #tpu.memory_space<vmem>>, vector<24x8xf32>,
    %c0_373 = arith.constant 0 : index
    %c0_374 = arith.constant 0 : index
    %308 = vector.load %arg4[%c0_373, %c0_374] : memref<72x32xf32, #tpu.memory_space<vmem>>, vector<72x32xf32>
    %c0_375 = arith.constant 0 : index
    %c0_376 = arith.constant 0 : index
    %309 = vector.load %arg7[%c0_375, %c0_376] : memref<1x32xf32, #tpu.memory_space<vmem>>, vector<1x32xf32>
    %c0_377 = arith.constant 0 : index
    %c0_378 = arith.constant 0 : index
    %310 = vector.load %arg8[%c0_377, %c0_378] : memref<1x32xf32, #tpu.memory_space<vmem>>, vector<1x32xf32>
    %c0_379 = arith.constant 0 : index
    %c0_380 = arith.constant 0 : index
    %311 = vector.load %arg10[%c0_379, %c0_380] : memref<42x8xf32, #tpu.memory_space<vmem>>, vector<24x8xf32>
    %c0_381 = arith.constant 0 : index
    %c0_382 = arith.constant 0 : index
    %312 = vector.load %arg12[%c0_381, %c0_382] : memref<24x288xf32, #tpu.memory_space<vmem>>, vector<24x8xf32>
    tpu.vector_store %arg12[%c0_381, %c0_382], %311 {strides = array<i32>} : memref<24x288xf32, #tpu.memory_space<vmem>>, vector<24x8xf32>,
    %c1_383 = arith.constant 1 : index
    %c0_384 = arith.constant 0 : index
    %313 = vector.load %arg10[%c1_383, %c0_384] : memref<42x8xf32, #tpu.memory_space<vmem>>, vector<24x8xf32>
    %c0_385 = arith.constant 0 : index
    %c8_386 = arith.constant 8 : index
    %314 = vector.load %arg12[%c0_385, %c8_386] : memref<24x288xf32, #tpu.memory_space<vmem>>, vector<24x8xf32>
    tpu.vector_store %arg12[%c0_385, %c8_386], %313 {strides = array<i32>} : memref<24x288xf32, #tpu.memory_space<vmem>>, vector<24x8xf32>,
    %c2_387 = arith.constant 2 : index
    %c0_388 = arith.constant 0 : index
    %315 = vector.load %arg10[%c2_387, %c0_388] : memref<42x8xf32, #tpu.memory_space<vmem>>, vector<24x8xf32>
    %c0_389 = arith.constant 0 : index
    %c16_390 = arith.constant 16 : index
    %316 = vector.load %arg12[%c0_389, %c16_390] : memref<24x288xf32, #tpu.memory_space<vmem>>, vector<24x8xf32>
    tpu.vector_store %arg12[%c0_389, %c16_390], %315 {strides = array<i32>} : memref<24x288xf32, #tpu.memory_space<vmem>>, vector<24x8xf32>,
    %c6_391 = arith.constant 6 : index
    %c0_392 = arith.constant 0 : index
    %317 = vector.load %arg10[%c6_391, %c0_392] : memref<42x8xf32, #tpu.memory_space<vmem>>, vector<24x8xf32>
    %c0_393 = arith.constant 0 : index
    %c24_394 = arith.constant 24 : index
    %318 = vector.load %arg12[%c0_393, %c24_394] : memref<24x288xf32, #tpu.memory_space<vmem>>, vector<24x8xf32>
    tpu.vector_store %arg12[%c0_393, %c24_394], %317 {strides = array<i32>} : memref<24x288xf32, #tpu.memory_space<vmem>>, vector<24x8xf32>,
    %c7_395 = arith.constant 7 : index
    %c0_396 = arith.constant 0 : index
    %319 = vector.load %arg10[%c7_395, %c0_396] : memref<42x8xf32, #tpu.memory_space<vmem>>, vector<24x8xf32>
    %c0_397 = arith.constant 0 : index
    %c32_398 = arith.constant 32 : index
    %320 = vector.load %arg12[%c0_397, %c32_398] : memref<24x288xf32, #tpu.memory_space<vmem>>, vector<24x8xf32>
    tpu.vector_store %arg12[%c0_397, %c32_398], %319 {strides = array<i32>} : memref<24x288xf32, #tpu.memory_space<vmem>>, vector<24x8xf32>,
    %c8_399 = arith.constant 8 : index
    %c0_400 = arith.constant 0 : index
    %321 = vector.load %arg10[%c8_399, %c0_400] : memref<42x8xf32, #tpu.memory_space<vmem>>, vector<24x8xf32>
    %c0_401 = arith.constant 0 : index
    %c40_402 = arith.constant 40 : index
    %322 = vector.load %arg12[%c0_401, %c40_402] : memref<24x288xf32, #tpu.memory_space<vmem>>, vector<24x8xf32>
    tpu.vector_store %arg12[%c0_401, %c40_402], %321 {strides = array<i32>} : memref<24x288xf32, #tpu.memory_space<vmem>>, vector<24x8xf32>,
    %c12_403 = arith.constant 12 : index
    %c0_404 = arith.constant 0 : index
    %323 = vector.load %arg10[%c12_403, %c0_404] : memref<42x8xf32, #tpu.memory_space<vmem>>, vector<24x8xf32>
    %c0_405 = arith.constant 0 : index
    %c48_406 = arith.constant 48 : index
    %324 = vector.load %arg12[%c0_405, %c48_406] : memref<24x288xf32, #tpu.memory_space<vmem>>, vector<24x8xf32>
    tpu.vector_store %arg12[%c0_405, %c48_406], %323 {strides = array<i32>} : memref<24x288xf32, #tpu.memory_space<vmem>>, vector<24x8xf32>,
    %c13_407 = arith.constant 13 : index
    %c0_408 = arith.constant 0 : index
    %325 = vector.load %arg10[%c13_407, %c0_408] : memref<42x8xf32, #tpu.memory_space<vmem>>, vector<24x8xf32>
    %c0_409 = arith.constant 0 : index
    %c56_410 = arith.constant 56 : index
    %326 = vector.load %arg12[%c0_409, %c56_410] : memref<24x288xf32, #tpu.memory_space<vmem>>, vector<24x8xf32>
    tpu.vector_store %arg12[%c0_409, %c56_410], %325 {strides = array<i32>} : memref<24x288xf32, #tpu.memory_space<vmem>>, vector<24x8xf32>,
    %c14_411 = arith.constant 14 : index
    %c0_412 = arith.constant 0 : index
    %327 = vector.load %arg10[%c14_411, %c0_412] : memref<42x8xf32, #tpu.memory_space<vmem>>, vector<24x8xf32>
    %c0_413 = arith.constant 0 : index
    %c64_414 = arith.constant 64 : index
    %328 = vector.load %arg12[%c0_413, %c64_414] : memref<24x288xf32, #tpu.memory_space<vmem>>, vector<24x8xf32>
    tpu.vector_store %arg12[%c0_413, %c64_414], %327 {strides = array<i32>} : memref<24x288xf32, #tpu.memory_space<vmem>>, vector<24x8xf32>,
    %c0_415 = arith.constant 0 : index
    %c0_416 = arith.constant 0 : index
    %329 = vector.load %arg12[%c0_415, %c0_416] : memref<24x288xf32, #tpu.memory_space<vmem>>, vector<24x72xf32>
    %cst_417 = arith.constant dense<0.000000e+00> : vector<24x32xf32>
    %330 = tpu.matmul %329, %308, %cst_417 {dimension_numbers = #tpu.dot_dimension_numbers<[1], [0], [0], [1], [0, 0, 1, 1], [], []>} : vector<24x72xf32>, vector<72x32xf32>, vector<24x32xf32> -> vector<24x32xf32>
    %331 = vector.broadcast %309 : vector<1x32xf32> to vector<24x32xf32>
    %332 = arith.mulf %330, %331 : vector<24x32xf32>
    %333 = vector.broadcast %310 : vector<1x32xf32> to vector<24x32xf32>
    %334 = arith.addf %332, %333 : vector<24x32xf32>
    %cst_418 = arith.constant 0.000000e+00 : f32
    %335 = vector.broadcast %cst_418 : f32 to vector<24x32xf32>
    %336 = arith.maximumf %334, %335 : vector<24x32xf32>
    %cst_419 = arith.constant 0.000000e+00 : f32
    %337 = vector.shape_cast %18 : vector<24x1xi1> to vector<24x1xi1>
    %338 = vector.broadcast %337 : vector<24x1xi1> to vector<24x32xi1>
    %339 = vector.broadcast %cst_419 : f32 to vector<24x32xf32>
    %340 = arith.select %338, %336, %339 : vector<24x32xi1>, vector<24x32xf32>
    %c0_420 = arith.constant 0 : index
    %c0_421 = arith.constant 0 : index
    %c0_422 = arith.constant 0 : index
    %341 = vector.load %arg9[%c0_420, %c0_421, %c0_422] : memref<1x24x32xf32, #tpu.memory_space<vmem>>, vector<1x24x32xf32>
    %342 = vector.shape_cast %341 : vector<1x24x32xf32> to vector<24x32xf32>
    %343 = vector.shape_cast %340 : vector<24x32xf32> to vector<1x24x32xf32>
    tpu.vector_store %arg9[%c0_420, %c0_421, %c0_422], %343 {strides = array<i32>} : memref<1x24x32xf32, #tpu.memory_space<vmem>>, vector<1x24x32xf32>,
    return
  }
  func.func @transform_0(%arg0: i32) -> (i32, i32, i32) {
    %c0_i32 = arith.constant 0 : i32
    %c0_i32_0 = arith.constant 0 : i32
    %c0_i32_1 = arith.constant 0 : i32
    return %arg0, %c0_i32, %c0_i32_0 : i32, i32, i32
  }
  func.func @transform_1(%arg0: i32) -> (i32, i32) {
    %c0_i32 = arith.constant 0 : i32
    %c0_i32_0 = arith.constant 0 : i32
    %c0_i32_1 = arith.constant 0 : i32
    return %c0_i32, %c0_i32_0 : i32, i32
  }
  func.func @transform_2(%arg0: i32) -> (i32, i32, i32) {
    %c0_i32 = arith.constant 0 : i32
    %c0_i32_0 = arith.constant 0 : i32
    %c0_i32_1 = arith.constant 0 : i32
    %c0_i32_2 = arith.constant 0 : i32
    return %c0_i32, %c0_i32_0, %c0_i32_1 : i32, i32, i32
  }
  func.func @transform_3(%arg0: i32) -> (i32, i32) {
    %c0_i32 = arith.constant 0 : i32
    %c0_i32_0 = arith.constant 0 : i32
    %c0_i32_1 = arith.constant 0 : i32
    return %c0_i32, %c0_i32_0 : i32, i32
  }
  func.func @transform_4(%arg0: i32) -> (i32, i32, i32) {
    %c0_i32 = arith.constant 0 : i32
    %c0_i32_0 = arith.constant 0 : i32
    %c0_i32_1 = arith.constant 0 : i32
    %c0_i32_2 = arith.constant 0 : i32
    return %c0_i32, %c0_i32_0, %c0_i32_1 : i32, i32, i32
  }
  func.func @transform_5(%arg0: i32) -> (i32, i32, i32) {
    %c0_i32 = arith.constant 0 : i32
    %c0_i32_0 = arith.constant 0 : i32
    %c0_i32_1 = arith.constant 0 : i32
    %c0_i32_2 = arith.constant 0 : i32
    return %c0_i32, %c0_i32_0, %c0_i32_1 : i32, i32, i32
  }
  func.func @transform_6(%arg0: i32) -> (i32, i32) {
    %c0_i32 = arith.constant 0 : i32
    %c0_i32_0 = arith.constant 0 : i32
    %c0_i32_1 = arith.constant 0 : i32
    return %c0_i32, %c0_i32_0 : i32, i32
  }
  func.func @transform_7(%arg0: i32) -> (i32, i32) {
    %c0_i32 = arith.constant 0 : i32
    %c0_i32_0 = arith.constant 0 : i32
    %c0_i32_1 = arith.constant 0 : i32
    return %c0_i32, %c0_i32_0 : i32, i32
  }
  func.func @transform_8(%arg0: i32) -> (i32, i32, i32) {
    %c0_i32 = arith.constant 0 : i32
    %c0_i32_0 = arith.constant 0 : i32
    %c0_i32_1 = arith.constant 0 : i32
    return %arg0, %c0_i32, %c0_i32_0 : i32, i32, i32
  }
}

</mosaic_0001>

<llo_original>
// kernel: tpu_custom_call.1
$region0: #{tpu_custom_call.1}
  #allocation0 [shape = 'u32[]', space=smem, size = 0x4, offset = 0x4, fixed_abs, tag = 'smem constant byte address 0x4 - core index']
  #allocation1 [shape = 'u32[144,128]{1,0:T(1,128)}', space=vmem, size = 0x12000, scoped, tag = 'internal scratch']
  #allocation2 [shape = 'f32[42,8]{1,0:T(8,128)}', space=vmem, size = 0x6000, scoped, tag = 'scratch operand']
  #allocation3 [shape = 'f32[42,8]{1,0:T(8,128)}', space=vmem, size = 0x6000, scoped, tag = 'scratch operand']
  #allocation4 [shape = 'f32[24,288]{1,0:T(8,128)}', space=vmem, size = 0x9000, scoped, tag = 'scratch operand']
  #allocation5 [shape = 'f32[3,24,8]{2,1,0:T(8,128)}', space=vmem, size = 0x9000, scoped, tag = 'scratch operand']
  %s0 = inlined_call_operand.vmem [shape: f32[2,42,32], index: 0, kind: input, shape index: {}]
  %s1 = inlined_call_operand.vmem [shape: f32[288,8], index: 1, kind: input, shape index: {}]
  %s2 = inlined_call_operand.vmem [shape: f32[6,72,8], index: 2, kind: input, shape index: {}]
  %s3 = inlined_call_operand.vmem [shape: f32[72,32], index: 3, kind: input, shape index: {}]
  %s4 = inlined_call_operand.vmem [shape: f32[7,1,8], index: 4, kind: input, shape index: {}]
  %s5 = inlined_call_operand.vmem [shape: f32[7,1,8], index: 5, kind: input, shape index: {}]
  %s6 = inlined_call_operand.vmem [shape: f32[1,32], index: 6, kind: input, shape index: {}]
  %s7 = inlined_call_operand.vmem [shape: f32[1,32], index: 7, kind: input, shape index: {}]
  %s8 = inlined_call_operand.hbm [shape: f32[2,24,32], index: 8, kind: output, shape index: {}]
  %s9 = sld [smem:[#allocation0]]
  $region65: #{tpu_custom_call.1} parent=0
    _
  %s11 = ssub.s32 1, %s9
  %s12 = scalar_select 0, %s11, %s9
  $region1: #{tpu_custom_call.1} parent=0
    #allocation6 [shape = 'u8[24576]{0}', space=vmem, size = 0x6000, scoped, tag = 'output window, operand 0']
    #allocation7 [shape = 's32[2]{0}', space=sflag, size = 0x8, scoped, tag = 'scoped memory for tpu_custom_call.1']
    %13 = vsyncpa [#allocation7], 0
    %s14 = scalar_lea.sflag [#allocation7], 1
    %15 = vsyncpa %s14, 0
    loop: start=0, step=1, limit=4
    $region2: #{tpu_custom_call.1} parent=1 // loop_pre_header
      _
    $region3: #{tpu_custom_call.1} parent=1 // loop_header
      %s17 = sphi 0, %s21
      %p18 = scmp.ge.s32.totalorder %s17, 4
      %s27 = sphi 0, %s29
      %s30 = sphi 0, %s27
      %s31 = sphi 0, %s30
      %s47 = sphi 0, %s31
      %s51 = sphi 0, %s51
      %s53 = sphi 0, %s51
      %s54 = sphi 0, %s53
      %s68 = sphi 0, %s54
      %s72 = sphi 0, %s72
      %s74 = sphi 0, %s72
      %s75 = sphi 0, %s74
      %s89 = sphi 0, %s75
      %s93 = sphi 0, %s93
      %s95 = sphi 0, %s93
      %s96 = sphi 0, %s95
      %s110 = sphi 0, %s96
      %s114 = sphi 0, %s114
      %s116 = sphi 0, %s114
      %s117 = sphi 0, %s116
      %s131 = sphi 0, %s117
      %s135 = sphi 0, %s135
      %s137 = sphi 0, %s135
      %s138 = sphi 0, %s137
      %s152 = sphi 0, %s138
      %s156 = sphi 0, %s156
      %s158 = sphi 0, %s156
      %s159 = sphi 0, %s158
      %s173 = sphi 0, %s159
      %s177 = sphi 0, %s177
      %s179 = sphi 0, %s177
      %s180 = sphi 0, %s179
      %s194 = sphi 0, %s180
      %s200 = sphi 0, %s202
      %s203 = sphi 0, %s200
      %s204 = sphi 0, %s203
      %s220 = sphi 0, %s204
    $region4: #{tpu_custom_call.1} parent=1 // loop_header_branch
      %20 = sbr.rel (%p18) target = $region8
    $region5: #{tpu_custom_call.1} parent=1 // loop_body
      %s22 = ssub.s32 %s17, 1
      %s23 = ssub.s32 %s17, 2
      %s24 = sadd.s32 %s17, 1
      %s25 = ssub.s32 %s17, %s24
      %p26 = scmp.eq.s32.totalorder %s25, 0
      %s28 = sadd.s32 %s27, 1
      %s29 = scalar_select %p26, %s27, %s28
      %p32 = pneg %p26
      %p33 = scmp.eq.s32.totalorder %s17, 1
      %p34 = por %p32, %p33
      %p35 = scmp.ne.s32.totalorder %s27, %s30
      %p36 = scmp.eq.s32.totalorder %s17, 0
      %p37 = por %p35, %p36
      %p38 = scmp.ne.s32.totalorder %s27, %s30
      %p39 = scmp.eq.s32.totalorder %s22, 1
      %p40 = por %p38, %p39
      %p41 = scmp.ne.s32.totalorder %s30, %s31
      %p42 = scmp.eq.s32.totalorder %s22, 0
      %p43 = por %p41, %p42
      %p44 = scmp.ne.s32.totalorder %s30, %s31
      %p45 = scmp.eq.s32.totalorder %s23, 1
      %p46 = por %p44, %p45
      %p48 = scmp.ne.s32.totalorder %s31, %s47
      %p49 = scmp.eq.s32.totalorder %s23, 0
      %p50 = por %p48, %p49
      %s52 = sadd.s32 %s51, 1
      %p55 = scmp.eq.s32.totalorder %s17, 1
      %p56 = scmp.ne.s32.totalorder %s51, %s53
      %p57 = scmp.eq.s32.totalorder %s17, 0
      %p58 = por %p56, %p57
      %p59 = scmp.ne.s32.totalorder %s51, %s53
      %p60 = scmp.eq.s32.totalorder %s22, 1
      %p61 = por %p59, %p60
      %p62 = scmp.ne.s32.totalorder %s53, %s54
      %p63 = scmp.eq.s32.totalorder %s22, 0
      %p64 = por %p62, %p63
      %p65 = scmp.ne.s32.totalorder %s53, %s54
      %p66 = scmp.eq.s32.totalorder %s23, 1
      %p67 = por %p65, %p66
      %p69 = scmp.ne.s32.totalorder %s54, %s68
      %p70 = scmp.eq.s32.totalorder %s23, 0
      %p71 = por %p69, %p70
      %s73 = sadd.s32 %s72, 1
      %p76 = scmp.eq.s32.totalorder %s17, 1
      %p77 = scmp.ne.s32.totalorder %s72, %s74
      %p78 = scmp.eq.s32.totalorder %s17, 0
      %p79 = por %p77, %p78
      %p80 = scmp.ne.s32.totalorder %s72, %s74
      %p81 = scmp.eq.s32.totalorder %s22, 1
      %p82 = por %p80, %p81
      %p83 = scmp.ne.s32.totalorder %s74, %s75
      %p84 = scmp.eq.s32.totalorder %s22, 0
      %p85 = por %p83, %p84
      %p86 = scmp.ne.s32.totalorder %s74, %s75
      %p87 = scmp.eq.s32.totalorder %s23, 1
      %p88 = por %p86, %p87
      %p90 = scmp.ne.s32.totalorder %s75, %s89
      %p91 = scmp.eq.s32.totalorder %s23, 0
      %p92 = por %p90, %p91
      %s94 = sadd.s32 %s93, 1
      %p97 = scmp.eq.s32.totalorder %s17, 1
      %p98 = scmp.ne.s32.totalorder %s93, %s95
      %p99 = scmp.eq.s32.totalorder %s17, 0
      %p100 = por %p98, %p99
      %p101 = scmp.ne.s32.totalorder %s93, %s95
      %p102 = scmp.eq.s32.totalorder %s22, 1
      %p103 = por %p101, %p102
      %p104 = scmp.ne.s32.totalorder %s95, %s96
      %p105 = scmp.eq.s32.totalorder %s22, 0
      %p106 = por %p104, %p105
      %p107 = scmp.ne.s32.totalorder %s95, %s96
      %p108 = scmp.eq.s32.totalorder %s23, 1
      %p109 = por %p107, %p108
      %p111 = scmp.ne.s32.totalorder %s96, %s110
      %p112 = scmp.eq.s32.totalorder %s23, 0
      %p113 = por %p111, %p112
      %s115 = sadd.s32 %s114, 1
      %p118 = scmp.eq.s32.totalorder %s17, 1
      %p119 = scmp.ne.s32.totalorder %s114, %s116
      %p120 = scmp.eq.s32.totalorder %s17, 0
      %p121 = por %p119, %p120
      %p122 = scmp.ne.s32.totalorder %s114, %s116
      %p123 = scmp.eq.s32.totalorder %s22, 1
      %p124 = por %p122, %p123
      %p125 = scmp.ne.s32.totalorder %s116, %s117
      %p126 = scmp.eq.s32.totalorder %s22, 0
      %p127 = por %p125, %p126
      %p128 = scmp.ne.s32.totalorder %s116, %s117
      %p129 = scmp.eq.s32.totalorder %s23, 1
      %p130 = por %p128, %p129
      %p132 = scmp.ne.s32.totalorder %s117, %s131
      %p133 = scmp.eq.s32.totalorder %s23, 0
      %p134 = por %p132, %p133
      %s136 = sadd.s32 %s135, 1
      %p139 = scmp.eq.s32.totalorder %s17, 1
      %p140 = scmp.ne.s32.totalorder %s135, %s137
      %p141 = scmp.eq.s32.totalorder %s17, 0
      %p142 = por %p140, %p141
      %p143 = scmp.ne.s32.totalorder %s135, %s137
      %p144 = scmp.eq.s32.totalorder %s22, 1
      %p145 = por %p143, %p144
      %p146 = scmp.ne.s32.totalorder %s137, %s138
      %p147 = scmp.eq.s32.totalorder %s22, 0
      %p148 = por %p146, %p147
      %p149 = scmp.ne.s32.totalorder %s137, %s138
      %p150 = scmp.eq.s32.totalorder %s23, 1
      %p151 = por %p149, %p150
      %p153 = scmp.ne.s32.totalorder %s138, %s152
      %p154 = scmp.eq.s32.totalorder %s23, 0
      %p155 = por %p153, %p154
      %s157 = sadd.s32 %s156, 1
      %p160 = scmp.eq.s32.totalorder %s17, 1
      %p161 = scmp.ne.s32.totalorder %s156, %s158
      %p162 = scmp.eq.s32.totalorder %s17, 0
      %p163 = por %p161, %p162
      %p164 = scmp.ne.s32.totalorder %s156, %s158
      %p165 = scmp.eq.s32.totalorder %s22, 1
      %p166 = por %p164, %p165
      %p167 = scmp.ne.s32.totalorder %s158, %s159
      %p168 = scmp.eq.s32.totalorder %s22, 0
      %p169 = por %p167, %p168
      %p170 = scmp.ne.s32.totalorder %s158, %s159
      %p171 = scmp.eq.s32.totalorder %s23, 1
      %p172 = por %p170, %p171
      %p174 = scmp.ne.s32.totalorder %s159, %s173
      %p175 = scmp.eq.s32.totalorder %s23, 0
      %p176 = por %p174, %p175
      %s178 = sadd.s32 %s177, 1
      %p181 = scmp.eq.s32.totalorder %s17, 1
      %p182 = scmp.ne.s32.totalorder %s177, %s179
      %p183 = scmp.eq.s32.totalorder %s17, 0
      %p184 = por %p182, %p183
      %p185 = scmp.ne.s32.totalorder %s177, %s179
      %p186 = scmp.eq.s32.totalorder %s22, 1
      %p187 = por %p185, %p186
      %p188 = scmp.ne.s32.totalorder %s179, %s180
      %p189 = scmp.eq.s32.totalorder %s22, 0
      %p190 = por %p188, %p189
      %p191 = scmp.ne.s32.totalorder %s179, %s180
      %p192 = scmp.eq.s32.totalorder %s23, 1
      %p193 = por %p191, %p192
      %p195 = scmp.ne.s32.totalorder %s180, %s194
      %p196 = scmp.eq.s32.totalorder %s23, 0
      %p197 = por %p195, %p196
      %s198 = ssub.s32 %s17, %s24
      %p199 = scmp.eq.s32.totalorder %s198, 0
      %s201 = sadd.s32 %s200, 1
      %s202 = scalar_select %p199, %s200, %s201
      %p205 = pneg %p199
      %p206 = scmp.eq.s32.totalorder %s17, 1
      %p207 = por %p205, %p206
      %p208 = scmp.ne.s32.totalorder %s200, %s203
      %p209 = scmp.eq.s32.totalorder %s17, 0
      %p210 = por %p208, %p209
      %p211 = scmp.ne.s32.totalorder %s200, %s203
      %p212 = scmp.eq.s32.totalorder %s22, 1
      %p213 = por %p211, %p212
      %p214 = scmp.ne.s32.totalorder %s203, %s204
      %p215 = scmp.eq.s32.totalorder %s22, 0
      %p216 = por %p214, %p215
      %p217 = scmp.ne.s32.totalorder %s203, %s204
      %p218 = scmp.eq.s32.totalorder %s23, 1
      %p219 = por %p217, %p218
      %p221 = scmp.ne.s32.totalorder %s204, %s220
      %p222 = scmp.eq.s32.totalorder %s23, 0
      %p223 = por %p221, %p222
      %p224 = scmp.le.s32.totalorder 1, %s17
      %p225 = scmp.lt.s32.totalorder %s17, 3
      %p226 = pnand %p224, %p225
      %p227 = pneg %p226
      // Predicated region
      $region9: #{tpu_custom_call.1} parent=5 // pred_check
        _
      $region10: #{tpu_custom_call.1} parent=5 // pred_check_branch
        %229 = sbr.rel (%p226) target = $region12
      $region11: #{tpu_custom_call.1} parent=5 // pred_region
        %s230 = ssub.s32 %s17, 1
        // Predicated region
        $region13: #{tpu_custom_call.1} parent=11 // pred_check
          %p231 = pneg %p64
        $region14: #{tpu_custom_call.1} parent=11 // pred_check_branch
          %233 = sbr.rel (%p231) target = $region16
        $region15: #{tpu_custom_call.1} parent=11 // pred_region
          _
        $region16: #{tpu_custom_call.1} parent=11 // pred_fallthru
          _
        // Predicated region
        $region17: #{tpu_custom_call.1} parent=11 // pred_check
          %p234 = pneg %p85
        $region18: #{tpu_custom_call.1} parent=11 // pred_check_branch
          %236 = sbr.rel (%p234) target = $region20
        $region19: #{tpu_custom_call.1} parent=11 // pred_region
          _
        $region20: #{tpu_custom_call.1} parent=11 // pred_fallthru
          _
        // Predicated region
        $region21: #{tpu_custom_call.1} parent=11 // pred_check
          %p237 = pneg %p106
        $region22: #{tpu_custom_call.1} parent=11 // pred_check_branch
          %239 = sbr.rel (%p237) target = $region24
        $region23: #{tpu_custom_call.1} parent=11 // pred_region
          _
        $region24: #{tpu_custom_call.1} parent=11 // pred_fallthru
          _
        // Predicated region
        $region25: #{tpu_custom_call.1} parent=11 // pred_check
          %p240 = pneg %p127
        $region26: #{tpu_custom_call.1} parent=11 // pred_check_branch
          %242 = sbr.rel (%p240) target = $region28
        $region27: #{tpu_custom_call.1} parent=11 // pred_region
          _
        $region28: #{tpu_custom_call.1} parent=11 // pred_fallthru
          _
        // Predicated region
        $region29: #{tpu_custom_call.1} parent=11 // pred_check
          %p243 = pneg %p148
        $region30: #{tpu_custom_call.1} parent=11 // pred_check_branch
          %245 = sbr.rel (%p243) target = $region32
        $region31: #{tpu_custom_call.1} parent=11 // pred_region
          _
        $region32: #{tpu_custom_call.1} parent=11 // pred_fallthru
          _
        // Predicated region
        $region33: #{tpu_custom_call.1} parent=11 // pred_check
          %p246 = pneg %p169
        $region34: #{tpu_custom_call.1} parent=11 // pred_check_branch
          %248 = sbr.rel (%p246) target = $region36
        $region35: #{tpu_custom_call.1} parent=11 // pred_region
          _
        $region36: #{tpu_custom_call.1} parent=11 // pred_fallthru
          _
        // Predicated region
        $region37: #{tpu_custom_call.1} parent=11 // pred_check
          %p249 = pneg %p190
        $region38: #{tpu_custom_call.1} parent=11 // pred_check_branch
          %251 = sbr.rel (%p249) target = $region40
        $region39: #{tpu_custom_call.1} parent=11 // pred_region
          _
        $region40: #{tpu_custom_call.1} parent=11 // pred_fallthru
          _
      $region12: #{tpu_custom_call.1} parent=5 // pred_fallthru
        _
      %p252 = scmp.lt.s32.totalorder %s17, 2
      // Predicated region
      $region41: #{tpu_custom_call.1} parent=5 // pred_check
        %p253 = pneg %p252
      $region42: #{tpu_custom_call.1} parent=5 // pred_check_branch
        %255 = sbr.rel (%p253) target = $region44
      $region43: #{tpu_custom_call.1} parent=5 // pred_region
        // Predicated region
        $region45: #{tpu_custom_call.1} parent=43 // pred_check
          %p256 = pneg %p37
        $region46: #{tpu_custom_call.1} parent=43 // pred_check_branch
          %258 = sbr.rel (%p256) target = $region48
        $region47: #{tpu_custom_call.1} parent=43 // pred_region
          %p259 = scmp.lt.s32.totalorder %s17, 1
          %s260 = scalar_select %p259, %s17, 1
          %s261 = smul.addr %s260, 6
          %s262 = smul.addr %s261, 8
          %s263 = scalar_lea.vmem %s0, %s262
        $region48: #{tpu_custom_call.1} parent=43 // pred_fallthru
          _
      $region44: #{tpu_custom_call.1} parent=5 // pred_fallthru
        _
      %p264 = scmp.le.s32.totalorder 1, %s17
      %p265 = scmp.lt.s32.totalorder %s17, 3
      %p266 = pnand %p264, %p265
      %p267 = pneg %p266
      // Predicated region
      $region49: #{tpu_custom_call.1} parent=5 // pred_check
        _
      $region50: #{tpu_custom_call.1} parent=5 // pred_check_branch
        %269 = sbr.rel (%p266) target = $region52
      $region51: #{tpu_custom_call.1} parent=5 // pred_region
        %s270 = ssub.s32 %s17, 1
        %p271 = scmp.lt.s32.totalorder %s22, 1
        %s272 = scalar_select %p271, %s22, 1
        %s273 = smul.addr %s272, 6
        %s274 = smul.addr %s273, 8
        %s275 = scalar_lea.vmem %s0, %s274
        %p276 = pneg %p43
        %p277 = pneg %p40
        %p278 = pneg %p64
        %p279 = pneg %p61
        %p280 = pneg %p85
        %p281 = pneg %p82
        %p282 = pneg %p106
        %p283 = pneg %p103
        %p284 = pneg %p127
        %p285 = pneg %p124
        %p286 = pneg %p148
        %p287 = pneg %p145
        %p288 = pneg %p169
        %p289 = pneg %p166
        %p290 = pneg %p190
        %p291 = pneg %p187
        %p292 = pneg %p216
        %p293 = pneg %p213
        %s294 = sand.u32 %s203, 1
        %s295 = scalar_lea.sflag [#allocation7], %s294
        %s296 = sand.u32 %s203, 1
        %s297 = smul.addr %s296, 24
        %s298 = scalar_lea.vmem [#allocation6], %s297
        %p299 = scmp.lt.s32.totalorder %s22, 1
        %s300 = scalar_select %p299, %s22, 1
        %s301 = smul.addr %s300, 6
        %s302 = smul.addr %s301, 8
        %s303 = scalar_lea.vmem %s0, %s302
        %v304 = vlaneseq
        %v305 = vshrl.u32 %v304, 7
        %v306 = vadd.s32 %v305, 8
        %v307 = vadd.s32 %v305, 16
        %vm308 = vcmp.lt.s32.totalorder %v305, 0
        %v309 = vsub.s32 0, %v305
        %v310 = vsel %vm308, %v309, %v305
        %v311 = vmul.u32.u64.compose %v310, 2863311531
        %v312 = vextract.low.u32 %v311
        %v313 = vextract.high.u32 %v311
        %v314 = vshrl.u32 %v313, 2
        %v315 = vmul.u32 %v314, 6
        %v316 = vsub.s32 %v310, %v315
        %v317 = vsub.s32 0, %v316
        %v318 = vsel %vm308, %v317, %v316
        %vm319 = vcmp.lt.s32.totalorder %v306, 0
        %v320 = vsub.s32 0, %v306
        %v321 = vsel %vm319, %v320, %v306
        %v322 = vmul.u32.u64.compose %v321, 2863311531
        %v323 = vextract.low.u32 %v322
        %v324 = vextract.high.u32 %v322
        %v325 = vshrl.u32 %v324, 2
        %v326 = vmul.u32 %v325, 6
        %v327 = vsub.s32 %v321, %v326
        %v328 = vsub.s32 0, %v327
        %v329 = vsel %vm319, %v328, %v327
        %vm330 = vcmp.lt.s32.totalorder %v307, 0
        %v331 = vsub.s32 0, %v307
        %v332 = vsel %vm330, %v331, %v307
        %v333 = vmul.u32.u64.compose %v332, 2863311531
        %v334 = vextract.low.u32 %v333
        %v335 = vextract.high.u32 %v333
        %v336 = vshrl.u32 %v335, 2
        %v337 = vmul.u32 %v336, 6
        %v338 = vsub.s32 %v332, %v337
        %v339 = vsub.s32 0, %v338
        %v340 = vsel %vm330, %v339, %v338
        %vm341 = vcmp.ne.s32.totalorder %v318, 0
        %vm342 = vcmp.ne.s32.totalorder %v329, 0
        %vm343 = vcmp.ne.s32.totalorder %v340, 0
        %vm344 = vcmp.lt.s32.totalorder %v318, 0
        %vm345 = vcmp.lt.s32.totalorder %v329, 0
        %vm346 = vcmp.lt.s32.totalorder %v340, 0
        %vm347 = vmand %vm344, %vm341
        %vm348 = vmand %vm345, %vm342
        %vm349 = vmand %vm346, %vm343
        %v350 = vadd.s32 %v318, 6
        %v351 = vadd.s32 %v329, 6
        %v352 = vadd.s32 %v340, 6
        %v353 = vsel %vm347, %v350, %v318
        %v354 = vsel %vm348, %v351, %v329
        %v355 = vsel %vm349, %v352, %v340
        %vm356 = vcmp.lt.s32.totalorder %v353, 4
        %vm357 = vcmp.lt.s32.totalorder %v354, 4
        %vm358 = vcmp.lt.s32.totalorder %v355, 4
        %vm359 = vcmask 64512
        %360 = vst.msk [vmem:[#allocation2] sm:$0xff] %vm359, 0.0
        %361 = vst.msk [vmem:[#allocation2 + $0x8] sm:$0xff] %vm359, 0.0
        %362 = vst.msk [vmem:[#allocation2 + $0x10] sm:$0xff] %vm359, 0.0
        %363 = vst.msk [vmem:[#allocation2 + $0x18] sm:$0xff] %vm359, 0.0
        %364 = vst.msk [vmem:[#allocation2 + $0x20] sm:$0xff] %vm359, 0.0
        %vm365 = vcmask 58368
        %366 = vst.msk [vmem:[#allocation2 + $0x28] sm:$0x3] %vm365, 0.0
        %367 = vst.msk [vmem:[#allocation3] sm:$0xff] %vm359, 0.0
        %368 = vst.msk [vmem:[#allocation3 + $0x8] sm:$0xff] %vm359, 0.0
        %369 = vst.msk [vmem:[#allocation3 + $0x10] sm:$0xff] %vm359, 0.0
        %370 = vst.msk [vmem:[#allocation3 + $0x18] sm:$0xff] %vm359, 0.0
        %371 = vst.msk [vmem:[#allocation3 + $0x20] sm:$0xff] %vm359, 0.0
        %372 = vst.msk [vmem:[#allocation3 + $0x28] sm:$0x3] %vm365, 0.0
        %v373 = vld [vmem:[%s1] sm:$0xff]
        %v374 = vld [vmem:[%s1 + $0x8] sm:$0xff]
        %v375 = vld [vmem:[%s1 + $0x10] sm:$0xff]
        %v376 = vld [vmem:[%s1 + $0x18] sm:$0xff]
        %v377 = vld [vmem:[%s1 + $0x20] sm:$0xff]
        %v378 = vld [vmem:[%s1 + $0x28] sm:$0xff]
        %v379 = vld [vmem:[%s1 + $0x30] sm:$0xff]
        %v380 = vld [vmem:[%s1 + $0x38] sm:$0xff]
        %v381 = vld [vmem:[%s1 + $0x40] sm:$0xff]
        %v382 = vld [vmem:[%s1 + $0x48] sm:$0xff]
        %v383 = vld [vmem:[%s1 + $0x50] sm:$0xff]
        %v384 = vld [vmem:[%s1 + $0x58] sm:$0xff]
        %v385 = vld [vmem:[%s1 + $0x60] sm:$0xff]
        %v386 = vld [vmem:[%s1 + $0x68] sm:$0xff]
        %v387 = vld [vmem:[%s1 + $0x70] sm:$0xff]
        %v388 = vld [vmem:[%s1 + $0x78] sm:$0xff]
        %v389 = vld [vmem:[%s1 + $0x80] sm:$0xff]
        %v390 = vld [vmem:[%s1 + $0x88] sm:$0xff]
        %v391 = vld [vmem:[%s1 + $0x90] sm:$0xff]
        %v392 = vld [vmem:[%s1 + $0x98] sm:$0xff]
        %v393 = vld [vmem:[%s1 + $0xa0] sm:$0xff]
        %v394 = vld [vmem:[%s1 + $0xa8] sm:$0xff]
        %v395 = vld [vmem:[%s1 + $0xb0] sm:$0xff]
        %v396 = vld [vmem:[%s1 + $0xb8] sm:$0xff]
        %v397 = vld [vmem:[%s1 + $0xc0] sm:$0xff]
        %v398 = vld [vmem:[%s1 + $0xc8] sm:$0xff]
        %v399 = vld [vmem:[%s1 + $0xd0] sm:$0xff]
        %v400 = vld [vmem:[%s1 + $0xd8] sm:$0xff]
        %v401 = vld [vmem:[%s1 + $0xe0] sm:$0xff]
        %v402 = vld [vmem:[%s1 + $0xe8] sm:$0xff]
        %v403 = vld [vmem:[%s1 + $0xf0] sm:$0xff]
        %v404 = vld [vmem:[%s1 + $0xf8] sm:$0xff]
        %v405 = vld [vmem:[%s1 + $0x100] sm:$0xff]
        %v406 = vld [vmem:[%s1 + $0x108] sm:$0xff]
        %v407 = vld [vmem:[%s1 + $0x110] sm:$0xff]
        %v408 = vld [vmem:[%s1 + $0x118] sm:$0xff]
        %v409 = vld [vmem:[%s4] sm:$0x1]
        %v410 = vld [vmem:[%s5] sm:$0x1]
        %v411 = vld [vmem:[%s303] sm:$0xff]
        %v412 = vld [vmem:[%s303 + $0x8] sm:$0xff]
        %v413 = vld [vmem:[%s303 + $0x10] sm:$0xff]
        %vm414 = vcmask 261120
        %415 = vst.msk [vmem:[#allocation4] sm:$0xff] %vm414, %v411
        %416 = vst.msk [vmem:[#allocation4 + $0x18] sm:$0xff] %vm414, %v412
        %417 = vst.msk [vmem:[#allocation4 + $0x30] sm:$0xff] %vm414, %v413
        %v418 = vld [vmem:[%s303 + $0x1] sm:$0xff]
        %v419 = vld [vmem:[%s303 + $0x9] sm:$0xff]
        %v420 = vld [vmem:[%s303 + $0x11] sm:$0xff]
        %424 = vrot.lane.b32.xlu0 %v418, 32
        %v425 = vpop.permute.xlu0 %424
        %426 = vrot.lane.b32.xlu0 %v419, 32
        %v427 = vpop.permute.xlu0 %426
        %428 = vrot.lane.b32.xlu0 %v420, 32
        %v429 = vpop.permute.xlu0 %428
        %vm433 = vcmask 523520
        %434 = vst.msk [vmem:[#allocation4] sm:$0xff] %vm433, %v425
        %435 = vst.msk [vmem:[#allocation4 + $0x18] sm:$0xff] %vm433, %v427
        %436 = vst.msk [vmem:[#allocation4 + $0x30] sm:$0xff] %vm433, %v429
        %v437 = vld [vmem:[%s303 + $0x2] sm:$0xff]
        %v438 = vld [vmem:[%s303 + $0xa] sm:$0xff]
        %v439 = vld [vmem:[%s303 + $0x12] sm:$0xff]
        %443 = vrot.lane.b32.xlu0 %v437, 64
        %v444 = vpop.permute.xlu0 %443
        %445 = vrot.lane.b32.xlu0 %v438, 64
        %v446 = vpop.permute.xlu0 %445
        %447 = vrot.lane.b32.xlu0 %v439, 64
        %v448 = vpop.permute.xlu0 %447
        %vm452 = vcmask 785920
        %453 = vst.msk [vmem:[#allocation4] sm:$0xff] %vm452, %v444
        %454 = vst.msk [vmem:[#allocation4 + $0x18] sm:$0xff] %vm452, %v446
        %455 = vst.msk [vmem:[#allocation4 + $0x30] sm:$0xff] %vm452, %v448
        %v456 = vld [vmem:[%s303 + $0x6] sm:$0xff]
        %v457 = vld [vmem:[%s303 + $0xe] sm:$0xff]
        %v458 = vld [vmem:[%s303 + $0x16] sm:$0xff]
        %462 = vrot.lane.b32.xlu0 %v456, 96
        %v463 = vpop.permute.xlu0 %462
        %464 = vrot.lane.b32.xlu0 %v457, 96
        %v465 = vpop.permute.xlu0 %464
        %466 = vrot.lane.b32.xlu0 %v458, 96
        %v467 = vpop.permute.xlu0 %466
        %vm471 = vcmask 1048320
        %472 = vst.msk [vmem:[#allocation4] sm:$0xff] %vm471, %v463
        %473 = vst.msk [vmem:[#allocation4 + $0x18] sm:$0xff] %vm471, %v465
        %474 = vst.msk [vmem:[#allocation4 + $0x30] sm:$0xff] %vm471, %v467
        %v475 = vld [vmem:[%s303 + $0x7] sm:$0xff]
        %v476 = vld [vmem:[%s303 + $0xf] sm:$0xff]
        %v477 = vld [vmem:[%s303 + $0x17] sm:$0xff]
        %478 = vst.msk [vmem:[#allocation4 + $0x8] sm:$0xff] %vm414, %v475
        %479 = vst.msk [vmem:[#allocation4 + $0x20] sm:$0xff] %vm414, %v476
        %480 = vst.msk [vmem:[#allocation4 + $0x38] sm:$0xff] %vm414, %v477
        %v481 = vld [vmem:[%s303 + $0x8] sm:$0xff]
        %v482 = vld [vmem:[%s303 + $0x10] sm:$0xff]
        %v483 = vld [vmem:[%s303 + $0x18] sm:$0xff]
        %487 = vrot.lane.b32.xlu0 %v481, 32
        %v488 = vpop.permute.xlu0 %487
        %489 = vrot.lane.b32.xlu0 %v482, 32
        %v490 = vpop.permute.xlu0 %489
        %491 = vrot.lane.b32.xlu0 %v483, 32
        %v492 = vpop.permute.xlu0 %491
        %496 = vst.msk [vmem:[#allocation4 + $0x8] sm:$0xff] %vm433, %v488
        %497 = vst.msk [vmem:[#allocation4 + $0x20] sm:$0xff] %vm433, %v490
        %498 = vst.msk [vmem:[#allocation4 + $0x38] sm:$0xff] %vm433, %v492
        %v499 = vld [vmem:[%s303 + $0xc] sm:$0xff]
        %v500 = vld [vmem:[%s303 + $0x14] sm:$0xff]
        %v501 = vld [vmem:[%s303 + $0x1c] sm:$0xff]
        %505 = vrot.lane.b32.xlu0 %v499, 64
        %v506 = vpop.permute.xlu0 %505
        %507 = vrot.lane.b32.xlu0 %v500, 64
        %v508 = vpop.permute.xlu0 %507
        %509 = vrot.lane.b32.xlu0 %v501, 64
        %v510 = vpop.permute.xlu0 %509
        %514 = vst.msk [vmem:[#allocation4 + $0x8] sm:$0xff] %vm452, %v506
        %515 = vst.msk [vmem:[#allocation4 + $0x20] sm:$0xff] %vm452, %v508
        %516 = vst.msk [vmem:[#allocation4 + $0x38] sm:$0xff] %vm452, %v510
        %v517 = vld [vmem:[%s303 + $0xd] sm:$0xff]
        %v518 = vld [vmem:[%s303 + $0x15] sm:$0xff]
        %v519 = vld [vmem:[%s303 + $0x1d] sm:$0xff]
        %523 = vrot.lane.b32.xlu0 %v517, 96
        %v524 = vpop.permute.xlu0 %523
        %525 = vrot.lane.b32.xlu0 %v518, 96
        %v526 = vpop.permute.xlu0 %525
        %527 = vrot.lane.b32.xlu0 %v519, 96
        %v528 = vpop.permute.xlu0 %527
        %532 = vst.msk [vmem:[#allocation4 + $0x8] sm:$0xff] %vm471, %v524
        %533 = vst.msk [vmem:[#allocation4 + $0x20] sm:$0xff] %vm471, %v526
        %534 = vst.msk [vmem:[#allocation4 + $0x38] sm:$0xff] %vm471, %v528
        %v535 = vld [vmem:[%s303 + $0xe] sm:$0xff]
        %v536 = vld [vmem:[%s303 + $0x16] sm:$0xff]
        %v537 = vld [vmem:[%s303 + $0x1e] sm:$0xff]
        %538 = vst.msk [vmem:[#allocation4 + $0x10] sm:$0xff] %vm414, %v535
        %539 = vst.msk [vmem:[#allocation4 + $0x28] sm:$0xff] %vm414, %v536
        %540 = vst.msk [vmem:[#allocation4 + $0x40] sm:$0xff] %vm414, %v537
        %v541 = vld [vmem:[#allocation4] sm:$0xff]
        %v542 = vld [vmem:[#allocation4 + $0x8] sm:$0xff]
        %v543 = vld [vmem:[#allocation4 + $0x10] sm:$0xff]
        %v544 = vld [vmem:[#allocation4 + $0x18] sm:$0xff]
        %v545 = vld [vmem:[#allocation4 + $0x20] sm:$0xff]
        %v546 = vld [vmem:[#allocation4 + $0x28] sm:$0xff]
        %v547 = vld [vmem:[#allocation4 + $0x30] sm:$0xff]
        %v548 = vld [vmem:[#allocation4 + $0x38] sm:$0xff]
        %v549 = vld [vmem:[#allocation4 + $0x40] sm:$0xff]
        %v551 = vsel %vm414, %v543, 0
        %v554 = vsel %vm414, %v546, 0
        %v557 = vsel %vm414, %v549, 0
        %559 = vmatprep.subr.mxu0 0.0
        %560 = vmatpush1.msra.mxu0 %v373
        %561 = vmatprep.subr.mxu0 0.0
        %562 = vmatpush1.msra.mxu0 %v374
        %563 = vmatprep.subr.mxu0 0.0
        %564 = vmatpush1.msra.mxu0 %v375
        %565 = vmatprep.subr.mxu0 0.0
        %566 = vmatpush1.msra.mxu0 %v376
        %567 = vmatprep.subr.mxu0 0.0
        %568 = vmatpush1.msra.mxu0 %v377
        %569 = vmatprep.subr.mxu0 0.0
        %570 = vmatpush1.msra.mxu0 %v378
        %571 = vmatprep.subr.mxu0 0.0
        %572 = vmatpush1.msra.mxu0 %v379
        %573 = vmatprep.subr.mxu0 0.0
        %574 = vmatpush1.msra.mxu0 %v380
        %575 = vmatprep.subr.mxu0 0.0
        %576 = vmatpush1.msra.mxu0 %v381
        %577 = vmatprep.subr.mxu0 0.0
        %578 = vmatpush1.msra.mxu0 %v382
        %579 = vmatprep.subr.mxu0 0.0
        %580 = vmatpush1.msra.mxu0 %v383
        %581 = vmatprep.subr.mxu0 0.0
        %582 = vmatpush1.msra.mxu0 %v384
        %583 = vmatprep.subr.mxu0 0.0
        %584 = vmatpush1.msra.mxu0 %v385
        %585 = vmatprep.subr.mxu0 0.0
        %586 = vmatpush1.msra.mxu0 %v386
        %587 = vmatprep.subr.mxu0 0.0
        %588 = vmatpush1.msra.mxu0 %v387
        %589 = vmatprep.subr.mxu0 0.0
        %590 = vmatpush1.msra.mxu0 %v388
        %591 = vmatprep.subr.mxu0 0.0
        %592 = vmatpush1.msra.mxu0 %v389
        %593 = vmatprep.subr.mxu0 0.0
        %594 = vmatpush1.msra.mxu0 %v390
        %595 = vmatprep.subr.mxu0 0.0
        %596 = vmatpush1.msra.mxu0 %v391
        %597 = vmatprep.subr.mxu0 0.0
        %598 = vmatpush1.msra.mxu0 %v392
        %599 = vmatprep.subr.mxu0 0.0
        %600 = vmatpush1.msra.mxu0 %v393
        %601 = vmatprep.subr.mxu0 0.0
        %602 = vmatpush1.msra.mxu0 %v394
        %603 = vmatprep.subr.mxu0 0.0
        %604 = vmatpush1.msra.mxu0 %v395
        %605 = vmatprep.subr.mxu0 0.0
        %606 = vmatpush1.msra.mxu0 %v396
        %607 = vmatprep.subr.mxu0 0.0
        %608 = vmatpush1.msra.mxu0 %v397
        %609 = vmatprep.subr.mxu0 0.0
        %610 = vmatpush1.msra.mxu0 %v398
        %611 = vmatprep.subr.mxu0 0.0
        %612 = vmatpush1.msra.mxu0 %v399
        %613 = vmatprep.subr.mxu0 0.0
        %614 = vmatpush1.msra.mxu0 %v400
        %615 = vmatprep.subr.mxu0 0.0
        %616 = vmatpush1.msra.mxu0 %v401
        %617 = vmatprep.subr.mxu0 0.0
        %618 = vmatpush1.msra.mxu0 %v402
        %619 = vmatprep.subr.mxu0 0.0
        %620 = vmatpush1.msra.mxu0 %v403
        %621 = vmatprep.subr.mxu0 0.0
        %622 = vmatpush1.msra.mxu0 %v404
        %623 = vmatprep.mubr.f32.mxu0 %v542
        %624 = vmatmul.mubr.f32.gmra.mrb[0].mxu0 %v541
        %v625 = vpop.f32.mrb[0].mxu0
        %v626 = vadd.f32 0.0, %v625
        %v627 = vpop.f32.mrb[0].mxu0
        %628 = vmatprep.mubr.f32.mxu0 %v545
        %629 = vmatmul.mubr.f32.gmra.mrb[0].mxu0 %v544
        %v630 = vpop.f32.mrb[0].mxu0
        %v631 = vadd.f32 0.0, %v630
        %v632 = vpop.f32.mrb[0].mxu0
        %633 = vmatprep.mubr.f32.mxu0 %v548
        %634 = vmatmul.mubr.f32.gmra.mrb[0].mxu0 %v547
        %v635 = vpop.f32.mrb[0].mxu0
        %v636 = vadd.f32 0.0, %v635
        %v637 = vpop.f32.mrb[0].mxu0
        %638 = vdwg.mxu0
        %639 = vmatprep.subr.mxu0 0.0
        %640 = vmatpush1.msra.mxu0 %v405
        %641 = vmatprep.subr.mxu0 0.0
        %642 = vmatpush1.msra.mxu0 %v406
        %643 = vmatprep.subr.mxu0 0.0
        %644 = vmatpush1.msra.mxu0 %v407
        %645 = vmatprep.subr.mxu0 0.0
        %646 = vmatpush1.msra.mxu0 %v408
        %647 = vmatprep.subr.mxu0 0.0
        %648 = vmatpush1.msra.mxu0 0.0
        %649 = vmatprep.subr.mxu0 0.0
        %650 = vmatpush1.msra.mxu0 0.0
        %651 = vmatprep.subr.mxu0 0.0
        %652 = vmatpush1.msra.mxu0 0.0
        %653 = vmatprep.subr.mxu0 0.0
        %654 = vmatpush1.msra.mxu0 0.0
        %655 = vmatprep.subr.mxu0 0.0
        %656 = vmatpush1.msra.mxu0 0.0
        %657 = vmatprep.subr.mxu0 0.0
        %658 = vmatpush1.msra.mxu0 0.0
        %659 = vmatprep.subr.mxu0 0.0
        %660 = vmatpush1.msra.mxu0 0.0
        %661 = vmatprep.subr.mxu0 0.0
        %662 = vmatpush1.msra.mxu0 0.0
        %663 = vmatprep.subr.mxu0 0.0
        %664 = vmatpush1.msra.mxu0 0.0
        %665 = vmatprep.subr.mxu0 0.0
        %666 = vmatpush1.msra.mxu0 0.0
        %667 = vmatprep.subr.mxu0 0.0
        %668 = vmatpush1.msra.mxu0 0.0
        %669 = vmatprep.subr.mxu0 0.0
        %670 = vmatpush1.msra.mxu0 0.0
        %671 = vmatprep.subr.mxu0 0.0
        %672 = vmatpush1.msra.mxu0 0.0
        %673 = vmatprep.subr.mxu0 0.0
        %674 = vmatpush1.msra.mxu0 0.0
        %675 = vmatprep.subr.mxu0 0.0
        %676 = vmatpush1.msra.mxu0 0.0
        %677 = vmatprep.subr.mxu0 0.0
        %678 = vmatpush1.msra.mxu0 0.0
        %679 = vmatprep.subr.mxu0 0.0
        %680 = vmatpush1.msra.mxu0 0.0
        %681 = vmatprep.subr.mxu0 0.0
        %682 = vmatpush1.msra.mxu0 0.0
        %683 = vmatprep.subr.mxu0 0.0
        %684 = vmatpush1.msra.mxu0 0.0
        %685 = vmatprep.subr.mxu0 0.0
        %686 = vmatpush1.msra.mxu0 0.0
        %687 = vmatprep.subr.mxu0 0.0
        %688 = vmatpush1.msra.mxu0 0.0
        %689 = vmatprep.subr.mxu0 0.0
        %690 = vmatpush1.msra.mxu0 0.0
        %691 = vmatprep.subr.mxu0 0.0
        %692 = vmatpush1.msra.mxu0 0.0
        %693 = vmatprep.subr.mxu0 0.0
        %694 = vmatpush1.msra.mxu0 0.0
        %695 = vmatprep.subr.mxu0 0.0
        %696 = vmatpush1.msra.mxu0 0.0
        %697 = vmatprep.subr.mxu0 0.0
        %698 = vmatpush1.msra.mxu0 0.0
        %699 = vmatprep.subr.mxu0 0.0
        %700 = vmatpush1.msra.mxu0 0.0
        %701 = vmatprep.subr.mxu0 0.0
        %702 = vmatpush1.msra.mxu0 0.0
        %703 = vmatprep.mubr.f32.mxu0 0.0
        %704 = vmatmul.mubr.f32.gmra.mrb[0].mxu0 %v551
        %v705 = vpop.f32.mrb[0].mxu0
        %v706 = vadd.f32 %v626, %v705
        %v707 = vpop.f32.mrb[0].mxu0
        %708 = vmatprep.mubr.f32.mxu0 0.0
        %709 = vmatmul.mubr.f32.gmra.mrb[0].mxu0 %v554
        %v710 = vpop.f32.mrb[0].mxu0
        %v711 = vadd.f32 %v631, %v710
        %v712 = vpop.f32.mrb[0].mxu0
        %713 = vmatprep.mubr.f32.mxu0 0.0
        %714 = vmatmul.mubr.f32.gmra.mrb[0].mxu0 %v557
        %v715 = vpop.f32.mrb[0].mxu0
        %v716 = vadd.f32 %v636, %v715
        %v717 = vpop.f32.mrb[0].mxu0
        %718 = vdwg.mxu0
        %v720 = vlaneseq
        %v721 = vshrl.u32 %v720, 7
        %v722 = vsub.s32 0, %v721
        %v723 = vrot.slane %v409, %v722
        %v725 = vmul.f32 %v706, %v723
        %v726 = vmul.f32 %v711, %v723
        %v727 = vmul.f32 %v716, %v723
        %v729 = vlaneseq
        %v730 = vshrl.u32 %v729, 7
        %v731 = vsub.s32 0, %v730
        %v732 = vrot.slane %v410, %v731
        %v734 = vadd.f32 %v725, %v732
        %v735 = vadd.f32 %v726, %v732
        %v736 = vadd.f32 %v727, %v732
        %v737 = vmax.f32 %v734, 0.0
        %v738 = vmax.f32 %v735, 0.0
        %v739 = vmax.f32 %v736, 0.0
        %v740 = vsel %vm356, 1, 0
        %v741 = vsel %vm357, 1, 0
        %v742 = vsel %vm358, 1, 0
        %vm743 = vcmp.eq.s32.totalorder %v740, 1
        %vm744 = vcmp.eq.s32.totalorder %v741, 1
        %vm745 = vcmp.eq.s32.totalorder %v742, 1
        %v746 = vsel %vm743, %v737, 0.0
        %v747 = vsel %vm744, %v738, 0.0
        %v748 = vsel %vm745, %v739, 0.0
        %749 = vst.msk [vmem:[#allocation5] sm:$0xff] %vm359, %v746
        %750 = vst.msk [vmem:[#allocation5 + $0x8] sm:$0xff] %vm359, %v747
        %751 = vst.msk [vmem:[#allocation5 + $0x10] sm:$0xff] %vm359, %v748
        %752 = vst.msk [vmem:[#allocation2 + $0x7] sm:$0xff] %vm359, %v746
        %753 = vst.msk [vmem:[#allocation2 + $0xf] sm:$0xff] %vm359, %v747
        %754 = vst.msk [vmem:[#allocation2 + $0x17] sm:$0xff] %vm359, %v748
        %v755 = vld [vmem:[%s2] sm:$0xff]
        %v756 = vld [vmem:[%s2 + $0x8] sm:$0xff]
        %v757 = vld [vmem:[%s2 + $0x10] sm:$0xff]
        %v758 = vld [vmem:[%s2 + $0x18] sm:$0xff]
        %v759 = vld [vmem:[%s2 + $0x20] sm:$0xff]
        %v760 = vld [vmem:[%s2 + $0x28] sm:$0xff]
        %v761 = vld [vmem:[%s2 + $0x30] sm:$0xff]
        %v762 = vld [vmem:[%s2 + $0x38] sm:$0xff]
        %v763 = vld [vmem:[%s2 + $0x40] sm:$0xff]
        %s764 = scalar_lea.vmem %s4, 1
        %v765 = vld [vmem:[%s764] sm:$0x1]
        %s766 = scalar_lea.vmem %s5, 1
        %v767 = vld [vmem:[%s766] sm:$0x1]
        %v768 = vld [vmem:[#allocation2] sm:$0xff]
        %v769 = vld [vmem:[#allocation2 + $0x8] sm:$0xff]
        %v770 = vld [vmem:[#allocation2 + $0x10] sm:$0xff]
        %771 = vst.msk [vmem:[#allocation4] sm:$0xff] %vm359, %v768
        %772 = vst.msk [vmem:[#allocation4 + $0x18] sm:$0xff] %vm359, %v769
        %773 = vst.msk [vmem:[#allocation4 + $0x30] sm:$0xff] %vm359, %v770
        %v774 = vld [vmem:[#allocation2 + $0x1] sm:$0xff]
        %v775 = vld [vmem:[#allocation2 + $0x9] sm:$0xff]
        %v776 = vld [vmem:[#allocation2 + $0x11] sm:$0xff]
        %780 = vrot.lane.b32.xlu0 %v774, 8
        %v781 = vpop.permute.xlu0 %780
        %782 = vrot.lane.b32.xlu0 %v775, 8
        %v783 = vpop.permute.xlu0 %782
        %784 = vrot.lane.b32.xlu0 %v776, 8
        %v785 = vpop.permute.xlu0 %784
        %vm789 = vcmask 130112
        %790 = vst.msk [vmem:[#allocation4] sm:$0xff] %vm789, %v781
        %791 = vst.msk [vmem:[#allocation4 + $0x18] sm:$0xff] %vm789, %v783
        %792 = vst.msk [vmem:[#allocation4 + $0x30] sm:$0xff] %vm789, %v785
        %v793 = vld [vmem:[#allocation2 + $0x2] sm:$0xff]
        %v794 = vld [vmem:[#allocation2 + $0xa] sm:$0xff]
        %v795 = vld [vmem:[#allocation2 + $0x12] sm:$0xff]
        %799 = vrot.lane.b32.xlu0 %v793, 16
        %v800 = vpop.permute.xlu0 %799
        %801 = vrot.lane.b32.xlu0 %v794, 16
        %v802 = vpop.permute.xlu0 %801
        %803 = vrot.lane.b32.xlu0 %v795, 16
        %v804 = vpop.permute.xlu0 %803
        %vm808 = vcmask 195712
        %809 = vst.msk [vmem:[#allocation4] sm:$0xff] %vm808, %v800
        %810 = vst.msk [vmem:[#allocation4 + $0x18] sm:$0xff] %vm808, %v802
        %811 = vst.msk [vmem:[#allocation4 + $0x30] sm:$0xff] %vm808, %v804
        %v812 = vld [vmem:[#allocation2 + $0x6] sm:$0xff]
        %v813 = vld [vmem:[#allocation2 + $0xe] sm:$0xff]
        %v814 = vld [vmem:[#allocation2 + $0x16] sm:$0xff]
        %818 = vrot.lane.b32.xlu0 %v812, 24
        %v819 = vpop.permute.xlu0 %818
        %820 = vrot.lane.b32.xlu0 %v813, 24
        %v821 = vpop.permute.xlu0 %820
        %822 = vrot.lane.b32.xlu0 %v814, 24
        %v823 = vpop.permute.xlu0 %822
        %vm827 = vcmask 261312
        %828 = vst.msk [vmem:[#allocation4] sm:$0xff] %vm827, %v819
        %829 = vst.msk [vmem:[#allocation4 + $0x18] sm:$0xff] %vm827, %v821
        %830 = vst.msk [vmem:[#allocation4 + $0x30] sm:$0xff] %vm827, %v823
        %v831 = vld [vmem:[#allocation2 + $0x7] sm:$0xff]
        %v832 = vld [vmem:[#allocation2 + $0xf] sm:$0xff]
        %v833 = vld [vmem:[#allocation2 + $0x17] sm:$0xff]
        %837 = vrot.lane.b32.xlu0 %v831, 32
        %v838 = vpop.permute.xlu0 %837
        %839 = vrot.lane.b32.xlu0 %v832, 32
        %v840 = vpop.permute.xlu0 %839
        %841 = vrot.lane.b32.xlu0 %v833, 32
        %v842 = vpop.permute.xlu0 %841
        %vm846 = vcmask 326912
        %847 = vst.msk [vmem:[#allocation4] sm:$0xff] %vm846, %v838
        %848 = vst.msk [vmem:[#allocation4 + $0x18] sm:$0xff] %vm846, %v840
        %849 = vst.msk [vmem:[#allocation4 + $0x30] sm:$0xff] %vm846, %v842
        %v850 = vld [vmem:[#allocation2 + $0x8] sm:$0xff]
        %v851 = vld [vmem:[#allocation2 + $0x10] sm:$0xff]
        %v852 = vld [vmem:[#allocation2 + $0x18] sm:$0xff]
        %856 = vrot.lane.b32.xlu0 %v850, 40
        %v857 = vpop.permute.xlu0 %856
        %858 = vrot.lane.b32.xlu0 %v851, 40
        %v859 = vpop.permute.xlu0 %858
        %860 = vrot.lane.b32.xlu0 %v852, 40
        %v861 = vpop.permute.xlu0 %860
        %vm865 = vcmask 392512
        %866 = vst.msk [vmem:[#allocation4] sm:$0xff] %vm865, %v857
        %867 = vst.msk [vmem:[#allocation4 + $0x18] sm:$0xff] %vm865, %v859
        %868 = vst.msk [vmem:[#allocation4 + $0x30] sm:$0xff] %vm865, %v861
        %v869 = vld [vmem:[#allocation2 + $0xc] sm:$0xff]
        %v870 = vld [vmem:[#allocation2 + $0x14] sm:$0xff]
        %v871 = vld [vmem:[#allocation2 + $0x1c] sm:$0xff]
        %875 = vrot.lane.b32.xlu0 %v869, 48
        %v876 = vpop.permute.xlu0 %875
        %877 = vrot.lane.b32.xlu0 %v870, 48
        %v878 = vpop.permute.xlu0 %877
        %879 = vrot.lane.b32.xlu0 %v871, 48
        %v880 = vpop.permute.xlu0 %879
        %vm884 = vcmask 458112
        %885 = vst.msk [vmem:[#allocation4] sm:$0xff] %vm884, %v876
        %886 = vst.msk [vmem:[#allocation4 + $0x18] sm:$0xff] %vm884, %v878
        %887 = vst.msk [vmem:[#allocation4 + $0x30] sm:$0xff] %vm884, %v880
        %v888 = vld [vmem:[#allocation2 + $0xd] sm:$0xff]
        %v889 = vld [vmem:[#allocation2 + $0x15] sm:$0xff]
        %v890 = vld [vmem:[#allocation2 + $0x1d] sm:$0xff]
        %894 = vrot.lane.b32.xlu0 %v888, 56
        %v895 = vpop.permute.xlu0 %894
        %896 = vrot.lane.b32.xlu0 %v889, 56
        %v897 = vpop.permute.xlu0 %896
        %898 = vrot.lane.b32.xlu0 %v890, 56
        %v899 = vpop.permute.xlu0 %898
        %vm903 = vcmask 523712
        %904 = vst.msk [vmem:[#allocation4] sm:$0xff] %vm903, %v895
        %905 = vst.msk [vmem:[#allocation4 + $0x18] sm:$0xff] %vm903, %v897
        %906 = vst.msk [vmem:[#allocation4 + $0x30] sm:$0xff] %vm903, %v899
        %v907 = vld [vmem:[#allocation2 + $0xe] sm:$0xff]
        %v908 = vld [vmem:[#allocation2 + $0x16] sm:$0xff]
        %v909 = vld [vmem:[#allocation2 + $0x1e] sm:$0xff]
        %913 = vrot.lane.b32.xlu0 %v907, 64
        %v914 = vpop.permute.xlu0 %913
        %915 = vrot.lane.b32.xlu0 %v908, 64
        %v916 = vpop.permute.xlu0 %915
        %917 = vrot.lane.b32.xlu0 %v909, 64
        %v918 = vpop.permute.xlu0 %917
        %vm922 = vcmask 589312
        %923 = vst.msk [vmem:[#allocation4] sm:$0xff] %vm922, %v914
        %924 = vst.msk [vmem:[#allocation4 + $0x18] sm:$0xff] %vm922, %v916
        %925 = vst.msk [vmem:[#allocation4 + $0x30] sm:$0xff] %vm922, %v918
        %v926 = vld [vmem:[#allocation4] sm:$0xff]
        %v927 = vld [vmem:[#allocation4 + $0x18] sm:$0xff]
        %v928 = vld [vmem:[#allocation4 + $0x30] sm:$0xff]
        %vm929 = vcmask 588800
        %v931 = vsel %vm929, %v926, 0
        %v934 = vsel %vm929, %v927, 0
        %v937 = vsel %vm929, %v928, 0
        %939 = vmatprep.subr.mxu0 0.0
        %940 = vmatpush1.msra.mxu0 %v755
        %941 = vmatprep.subr.mxu0 0.0
        %942 = vmatpush1.msra.mxu0 %v756
        %943 = vmatprep.subr.mxu0 0.0
        %944 = vmatpush1.msra.mxu0 %v757
        %945 = vmatprep.subr.mxu0 0.0
        %946 = vmatpush1.msra.mxu0 %v758
        %947 = vmatprep.subr.mxu0 0.0
        %948 = vmatpush1.msra.mxu0 %v759
        %949 = vmatprep.subr.mxu0 0.0
        %950 = vmatpush1.msra.mxu0 %v760
        %951 = vmatprep.subr.mxu0 0.0
        %952 = vmatpush1.msra.mxu0 %v761
        %953 = vmatprep.subr.mxu0 0.0
        %954 = vmatpush1.msra.mxu0 %v762
        %955 = vmatprep.subr.mxu0 0.0
        %956 = vmatpush1.msra.mxu0 %v763
        %957 = vmatprep.subr.mxu0 0.0
        %958 = vmatpush1.msra.mxu0 0.0
        %959 = vmatprep.subr.mxu0 0.0
        %960 = vmatpush1.msra.mxu0 0.0
        %961 = vmatprep.subr.mxu0 0.0
        %962 = vmatpush1.msra.mxu0 0.0
        %963 = vmatprep.subr.mxu0 0.0
        %964 = vmatpush1.msra.mxu0 0.0
        %965 = vmatprep.subr.mxu0 0.0
        %966 = vmatpush1.msra.mxu0 0.0
        %967 = vmatprep.subr.mxu0 0.0
        %968 = vmatpush1.msra.mxu0 0.0
        %969 = vmatprep.subr.mxu0 0.0
        %970 = vmatpush1.msra.mxu0 0.0
        %971 = vmatprep.subr.mxu0 0.0
        %972 = vmatpush1.msra.mxu0 0.0
        %973 = vmatprep.subr.mxu0 0.0
        %974 = vmatpush1.msra.mxu0 0.0
        %975 = vmatprep.subr.mxu0 0.0
        %976 = vmatpush1.msra.mxu0 0.0
        %977 = vmatprep.subr.mxu0 0.0
        %978 = vmatpush1.msra.mxu0 0.0
        %979 = vmatprep.subr.mxu0 0.0
        %980 = vmatpush1.msra.mxu0 0.0
        %981 = vmatprep.subr.mxu0 0.0
        %982 = vmatpush1.msra.mxu0 0.0
        %983 = vmatprep.subr.mxu0 0.0
        %984 = vmatpush1.msra.mxu0 0.0
        %985 = vmatprep.subr.mxu0 0.0
        %986 = vmatpush1.msra.mxu0 0.0
        %987 = vmatprep.subr.mxu0 0.0
        %988 = vmatpush1.msra.mxu0 0.0
        %989 = vmatprep.subr.mxu0 0.0
        %990 = vmatpush1.msra.mxu0 0.0
        %991 = vmatprep.subr.mxu0 0.0
        %992 = vmatpush1.msra.mxu0 0.0
        %993 = vmatprep.subr.mxu0 0.0
        %994 = vmatpush1.msra.mxu0 0.0
        %995 = vmatprep.subr.mxu0 0.0
        %996 = vmatpush1.msra.mxu0 0.0
        %997 = vmatprep.subr.mxu0 0.0
        %998 = vmatpush1.msra.mxu0 0.0
        %999 = vmatprep.subr.mxu0 0.0
        %1000 = vmatpush1.msra.mxu0 0.0
        %1001 = vmatprep.subr.mxu0 0.0
        %1002 = vmatpush1.msra.mxu0 0.0
        %1003 = vmatprep.mubr.f32.mxu0 0.0
        %1004 = vmatmul.mubr.f32.gmra.mrb[0].mxu0 %v931
        %v1005 = vpop.f32.mrb[0].mxu0
        %v1006 = vadd.f32 0.0, %v1005
        %v1007 = vpop.f32.mrb[0].mxu0
        %1008 = vmatprep.mubr.f32.mxu0 0.0
        %1009 = vmatmul.mubr.f32.gmra.mrb[0].mxu0 %v934
        %v1010 = vpop.f32.mrb[0].mxu0
        %v1011 = vadd.f32 0.0, %v1010
        %v1012 = vpop.f32.mrb[0].mxu0
        %1013 = vmatprep.mubr.f32.mxu0 0.0
        %1014 = vmatmul.mubr.f32.gmra.mrb[0].mxu0 %v937
        %v1015 = vpop.f32.mrb[0].mxu0
        %v1016 = vadd.f32 0.0, %v1015
        %v1017 = vpop.f32.mrb[0].mxu0
        %1018 = vdwg.mxu0
        %v1020 = vlaneseq
        %v1021 = vshrl.u32 %v1020, 7
        %v1022 = vsub.s32 0, %v1021
        %v1023 = vrot.slane %v765, %v1022
        %v1025 = vmul.f32 %v1006, %v1023
        %v1026 = vmul.f32 %v1011, %v1023
        %v1027 = vmul.f32 %v1016, %v1023
        %v1029 = vlaneseq
        %v1030 = vshrl.u32 %v1029, 7
        %v1031 = vsub.s32 0, %v1030
        %v1032 = vrot.slane %v767, %v1031
        %v1034 = vadd.f32 %v1025, %v1032
        %v1035 = vadd.f32 %v1026, %v1032
        %v1036 = vadd.f32 %v1027, %v1032
        %v1037 = vmax.f32 %v1034, 0.0
        %v1038 = vmax.f32 %v1035, 0.0
        %v1039 = vmax.f32 %v1036, 0.0
        %v1040 = vsel %vm743, %v1037, 0.0
        %v1041 = vsel %vm744, %v1038, 0.0
        %v1042 = vsel %vm745, %v1039, 0.0
        %s1043 = scalar_lea.vmem [#allocation5], 24
        %1044 = vst.msk [vmem:[%s1043] sm:$0xff] %vm359, %v1040
        %1045 = vst.msk [vmem:[%s1043 + $0x8] sm:$0xff] %vm359, %v1041
        %1046 = vst.msk [vmem:[%s1043 + $0x10] sm:$0xff] %vm359, %v1042
        %1047 = vst.msk [vmem:[#allocation3 + $0x7] sm:$0xff] %vm359, %v1040
        %1048 = vst.msk [vmem:[#allocation3 + $0xf] sm:$0xff] %vm359, %v1041
        %1049 = vst.msk [vmem:[#allocation3 + $0x17] sm:$0xff] %vm359, %v1042
        %s1050 = scalar_lea.vmem %s2, 72
        %v1051 = vld [vmem:[%s1050] sm:$0xff]
        %v1052 = vld [vmem:[%s1050 + $0x8] sm:$0xff]
        %v1053 = vld [vmem:[%s1050 + $0x10] sm:$0xff]
        %v1054 = vld [vmem:[%s1050 + $0x18] sm:$0xff]
        %v1055 = vld [vmem:[%s1050 + $0x20] sm:$0xff]
        %v1056 = vld [vmem:[%s1050 + $0x28] sm:$0xff]
        %v1057 = vld [vmem:[%s1050 + $0x30] sm:$0xff]
        %v1058 = vld [vmem:[%s1050 + $0x38] sm:$0xff]
        %v1059 = vld [vmem:[%s1050 + $0x40] sm:$0xff]
        %s1060 = scalar_lea.vmem %s4, 2
        %v1061 = vld [vmem:[%s1060] sm:$0x1]
        %s1062 = scalar_lea.vmem %s5, 2
        %v1063 = vld [vmem:[%s1062] sm:$0x1]
        %v1064 = vld [vmem:[#allocation3] sm:$0xff]
        %v1065 = vld [vmem:[#allocation3 + $0x8] sm:$0xff]
        %v1066 = vld [vmem:[#allocation3 + $0x10] sm:$0xff]
        %1067 = vst.msk [vmem:[#allocation4] sm:$0xff] %vm359, %v1064
        %1068 = vst.msk [vmem:[#allocation4 + $0x18] sm:$0xff] %vm359, %v1065
        %1069 = vst.msk [vmem:[#allocation4 + $0x30] sm:$0xff] %vm359, %v1066
        %v1070 = vld [vmem:[#allocation3 + $0x1] sm:$0xff]
        %v1071 = vld [vmem:[#allocation3 + $0x9] sm:$0xff]
        %v1072 = vld [vmem:[#allocation3 + $0x11] sm:$0xff]
        %1076 = vrot.lane.b32.xlu0 %v1070, 8
        %v1077 = vpop.permute.xlu0 %1076
        %1078 = vrot.lane.b32.xlu0 %v1071, 8
        %v1079 = vpop.permute.xlu0 %1078
        %1080 = vrot.lane.b32.xlu0 %v1072, 8
        %v1081 = vpop.permute.xlu0 %1080
        %1085 = vst.msk [vmem:[#allocation4] sm:$0xff] %vm789, %v1077
        %1086 = vst.msk [vmem:[#allocation4 + $0x18] sm:$0xff] %vm789, %v1079
        %1087 = vst.msk [vmem:[#allocation4 + $0x30] sm:$0xff] %vm789, %v1081
        %v1088 = vld [vmem:[#allocation3 + $0x2] sm:$0xff]
        %v1089 = vld [vmem:[#allocation3 + $0xa] sm:$0xff]
        %v1090 = vld [vmem:[#allocation3 + $0x12] sm:$0xff]
        %1094 = vrot.lane.b32.xlu0 %v1088, 16
        %v1095 = vpop.permute.xlu0 %1094
        %1096 = vrot.lane.b32.xlu0 %v1089, 16
        %v1097 = vpop.permute.xlu0 %1096
        %1098 = vrot.lane.b32.xlu0 %v1090, 16
        %v1099 = vpop.permute.xlu0 %1098
        %1103 = vst.msk [vmem:[#allocation4] sm:$0xff] %vm808, %v1095
        %1104 = vst.msk [vmem:[#allocation4 + $0x18] sm:$0xff] %vm808, %v1097
        %1105 = vst.msk [vmem:[#allocation4 + $0x30] sm:$0xff] %vm808, %v1099
        %v1106 = vld [vmem:[#allocation3 + $0x6] sm:$0xff]
        %v1107 = vld [vmem:[#allocation3 + $0xe] sm:$0xff]
        %v1108 = vld [vmem:[#allocation3 + $0x16] sm:$0xff]
        %1112 = vrot.lane.b32.xlu0 %v1106, 24
        %v1113 = vpop.permute.xlu0 %1112
        %1114 = vrot.lane.b32.xlu0 %v1107, 24
        %v1115 = vpop.permute.xlu0 %1114
        %1116 = vrot.lane.b32.xlu0 %v1108, 24
        %v1117 = vpop.permute.xlu0 %1116
        %1121 = vst.msk [vmem:[#allocation4] sm:$0xff] %vm827, %v1113
        %1122 = vst.msk [vmem:[#allocation4 + $0x18] sm:$0xff] %vm827, %v1115
        %1123 = vst.msk [vmem:[#allocation4 + $0x30] sm:$0xff] %vm827, %v1117
        %v1124 = vld [vmem:[#allocation3 + $0x7] sm:$0xff]
        %v1125 = vld [vmem:[#allocation3 + $0xf] sm:$0xff]
        %v1126 = vld [vmem:[#allocation3 + $0x17] sm:$0xff]
        %1130 = vrot.lane.b32.xlu0 %v1124, 32
        %v1131 = vpop.permute.xlu0 %1130
        %1132 = vrot.lane.b32.xlu0 %v1125, 32
        %v1133 = vpop.permute.xlu0 %1132
        %1134 = vrot.lane.b32.xlu0 %v1126, 32
        %v1135 = vpop.permute.xlu0 %1134
        %1139 = vst.msk [vmem:[#allocation4] sm:$0xff] %vm846, %v1131
        %1140 = vst.msk [vmem:[#allocation4 + $0x18] sm:$0xff] %vm846, %v1133
        %1141 = vst.msk [vmem:[#allocation4 + $0x30] sm:$0xff] %vm846, %v1135
        %v1142 = vld [vmem:[#allocation3 + $0x8] sm:$0xff]
        %v1143 = vld [vmem:[#allocation3 + $0x10] sm:$0xff]
        %v1144 = vld [vmem:[#allocation3 + $0x18] sm:$0xff]
        %1148 = vrot.lane.b32.xlu0 %v1142, 40
        %v1149 = vpop.permute.xlu0 %1148
        %1150 = vrot.lane.b32.xlu0 %v1143, 40
        %v1151 = vpop.permute.xlu0 %1150
        %1152 = vrot.lane.b32.xlu0 %v1144, 40
        %v1153 = vpop.permute.xlu0 %1152
        %1157 = vst.msk [vmem:[#allocation4] sm:$0xff] %vm865, %v1149
        %1158 = vst.msk [vmem:[#allocation4 + $0x18] sm:$0xff] %vm865, %v1151
        %1159 = vst.msk [vmem:[#allocation4 + $0x30] sm:$0xff] %vm865, %v1153
        %v1160 = vld [vmem:[#allocation3 + $0xc] sm:$0xff]
        %v1161 = vld [vmem:[#allocation3 + $0x14] sm:$0xff]
        %v1162 = vld [vmem:[#allocation3 + $0x1c] sm:$0xff]
        %1166 = vrot.lane.b32.xlu0 %v1160, 48
        %v1167 = vpop.permute.xlu0 %1166
        %1168 = vrot.lane.b32.xlu0 %v1161, 48
        %v1169 = vpop.permute.xlu0 %1168
        %1170 = vrot.lane.b32.xlu0 %v1162, 48
        %v1171 = vpop.permute.xlu0 %1170
        %1175 = vst.msk [vmem:[#allocation4] sm:$0xff] %vm884, %v1167
        %1176 = vst.msk [vmem:[#allocation4 + $0x18] sm:$0xff] %vm884, %v1169
        %1177 = vst.msk [vmem:[#allocation4 + $0x30] sm:$0xff] %vm884, %v1171
        %v1178 = vld [vmem:[#allocation3 + $0xd] sm:$0xff]
        %v1179 = vld [vmem:[#allocation3 + $0x15] sm:$0xff]
        %v1180 = vld [vmem:[#allocation3 + $0x1d] sm:$0xff]
        %1184 = vrot.lane.b32.xlu0 %v1178, 56
        %v1185 = vpop.permute.xlu0 %1184
        %1186 = vrot.lane.b32.xlu0 %v1179, 56
        %v1187 = vpop.permute.xlu0 %1186
        %1188 = vrot.lane.b32.xlu0 %v1180, 56
        %v1189 = vpop.permute.xlu0 %1188
        %1193 = vst.msk [vmem:[#allocation4] sm:$0xff] %vm903, %v1185
        %1194 = vst.msk [vmem:[#allocation4 + $0x18] sm:$0xff] %vm903, %v1187
        %1195 = vst.msk [vmem:[#allocation4 + $0x30] sm:$0xff] %vm903, %v1189
        %v1196 = vld [vmem:[#allocation3 + $0xe] sm:$0xff]
        %v1197 = vld [vmem:[#allocation3 + $0x16] sm:$0xff]
        %v1198 = vld [vmem:[#allocation3 + $0x1e] sm:$0xff]
        %1202 = vrot.lane.b32.xlu0 %v1196, 64
        %v1203 = vpop.permute.xlu0 %1202
        %1204 = vrot.lane.b32.xlu0 %v1197, 64
        %v1205 = vpop.permute.xlu0 %1204
        %1206 = vrot.lane.b32.xlu0 %v1198, 64
        %v1207 = vpop.permute.xlu0 %1206
        %1211 = vst.msk [vmem:[#allocation4] sm:$0xff] %vm922, %v1203
        %1212 = vst.msk [vmem:[#allocation4 + $0x18] sm:$0xff] %vm922, %v1205
        %1213 = vst.msk [vmem:[#allocation4 + $0x30] sm:$0xff] %vm922, %v1207
        %v1214 = vld [vmem:[#allocation4] sm:$0xff]
        %v1215 = vld [vmem:[#allocation4 + $0x18] sm:$0xff]
        %v1216 = vld [vmem:[#allocation4 + $0x30] sm:$0xff]
        %v1218 = vsel %vm929, %v1214, 0
        %v1221 = vsel %vm929, %v1215, 0
        %v1224 = vsel %vm929, %v1216, 0
        %1226 = vmatprep.subr.mxu0 0.0
        %1227 = vmatpush1.msra.mxu0 %v1051
        %1228 = vmatprep.subr.mxu0 0.0
        %1229 = vmatpush1.msra.mxu0 %v1052
        %1230 = vmatprep.subr.mxu0 0.0
        %1231 = vmatpush1.msra.mxu0 %v1053
        %1232 = vmatprep.subr.mxu0 0.0
        %1233 = vmatpush1.msra.mxu0 %v1054
        %1234 = vmatprep.subr.mxu0 0.0
        %1235 = vmatpush1.msra.mxu0 %v1055
        %1236 = vmatprep.subr.mxu0 0.0
        %1237 = vmatpush1.msra.mxu0 %v1056
        %1238 = vmatprep.subr.mxu0 0.0
        %1239 = vmatpush1.msra.mxu0 %v1057
        %1240 = vmatprep.subr.mxu0 0.0
        %1241 = vmatpush1.msra.mxu0 %v1058
        %1242 = vmatprep.subr.mxu0 0.0
        %1243 = vmatpush1.msra.mxu0 %v1059
        %1244 = vmatprep.subr.mxu0 0.0
        %1245 = vmatpush1.msra.mxu0 0.0
        %1246 = vmatprep.subr.mxu0 0.0
        %1247 = vmatpush1.msra.mxu0 0.0
        %1248 = vmatprep.subr.mxu0 0.0
        %1249 = vmatpush1.msra.mxu0 0.0
        %1250 = vmatprep.subr.mxu0 0.0
        %1251 = vmatpush1.msra.mxu0 0.0
        %1252 = vmatprep.subr.mxu0 0.0
        %1253 = vmatpush1.msra.mxu0 0.0
        %1254 = vmatprep.subr.mxu0 0.0
        %1255 = vmatpush1.msra.mxu0 0.0
        %1256 = vmatprep.subr.mxu0 0.0
        %1257 = vmatpush1.msra.mxu0 0.0
        %1258 = vmatprep.subr.mxu0 0.0
        %1259 = vmatpush1.msra.mxu0 0.0
        %1260 = vmatprep.subr.mxu0 0.0
        %1261 = vmatpush1.msra.mxu0 0.0
        %1262 = vmatprep.subr.mxu0 0.0
        %1263 = vmatpush1.msra.mxu0 0.0
        %1264 = vmatprep.subr.mxu0 0.0
        %1265 = vmatpush1.msra.mxu0 0.0
        %1266 = vmatprep.subr.mxu0 0.0
        %1267 = vmatpush1.msra.mxu0 0.0
        %1268 = vmatprep.subr.mxu0 0.0
        %1269 = vmatpush1.msra.mxu0 0.0
        %1270 = vmatprep.subr.mxu0 0.0
        %1271 = vmatpush1.msra.mxu0 0.0
        %1272 = vmatprep.subr.mxu0 0.0
        %1273 = vmatpush1.msra.mxu0 0.0
        %1274 = vmatprep.subr.mxu0 0.0
        %1275 = vmatpush1.msra.mxu0 0.0
        %1276 = vmatprep.subr.mxu0 0.0
        %1277 = vmatpush1.msra.mxu0 0.0
        %1278 = vmatprep.subr.mxu0 0.0
        %1279 = vmatpush1.msra.mxu0 0.0
        %1280 = vmatprep.subr.mxu0 0.0
        %1281 = vmatpush1.msra.mxu0 0.0
        %1282 = vmatprep.subr.mxu0 0.0
        %1283 = vmatpush1.msra.mxu0 0.0
        %1284 = vmatprep.subr.mxu0 0.0
        %1285 = vmatpush1.msra.mxu0 0.0
        %1286 = vmatprep.subr.mxu0 0.0
        %1287 = vmatpush1.msra.mxu0 0.0
        %1288 = vmatprep.subr.mxu0 0.0
        %1289 = vmatpush1.msra.mxu0 0.0
        %1290 = vmatprep.mubr.f32.mxu0 0.0
        %1291 = vmatmul.mubr.f32.gmra.mrb[0].mxu0 %v1218
        %v1292 = vpop.f32.mrb[0].mxu0
        %v1293 = vadd.f32 0.0, %v1292
        %v1294 = vpop.f32.mrb[0].mxu0
        %1295 = vmatprep.mubr.f32.mxu0 0.0
        %1296 = vmatmul.mubr.f32.gmra.mrb[0].mxu0 %v1221
        %v1297 = vpop.f32.mrb[0].mxu0
        %v1298 = vadd.f32 0.0, %v1297
        %v1299 = vpop.f32.mrb[0].mxu0
        %1300 = vmatprep.mubr.f32.mxu0 0.0
        %1301 = vmatmul.mubr.f32.gmra.mrb[0].mxu0 %v1224
        %v1302 = vpop.f32.mrb[0].mxu0
        %v1303 = vadd.f32 0.0, %v1302
        %v1304 = vpop.f32.mrb[0].mxu0
        %1305 = vdwg.mxu0
        %v1307 = vlaneseq
        %v1308 = vshrl.u32 %v1307, 7
        %v1309 = vsub.s32 0, %v1308
        %v1310 = vrot.slane %v1061, %v1309
        %v1312 = vmul.f32 %v1293, %v1310
        %v1313 = vmul.f32 %v1298, %v1310
        %v1314 = vmul.f32 %v1303, %v1310
        %v1316 = vlaneseq
        %v1317 = vshrl.u32 %v1316, 7
        %v1318 = vsub.s32 0, %v1317
        %v1319 = vrot.slane %v1063, %v1318
        %v1321 = vadd.f32 %v1312, %v1319
        %v1322 = vadd.f32 %v1313, %v1319
        %v1323 = vadd.f32 %v1314, %v1319
        %v1324 = vmax.f32 %v1321, 0.0
        %v1325 = vmax.f32 %v1322, 0.0
        %v1326 = vmax.f32 %v1323, 0.0
        %v1327 = vsel %vm743, %v1324, 0.0
        %v1328 = vsel %vm744, %v1325, 0.0
        %v1329 = vsel %vm745, %v1326, 0.0
        %s1330 = scalar_lea.vmem [#allocation5], 48
        %1331 = vst.msk [vmem:[%s1330] sm:$0xff] %vm359, %v1327
        %1332 = vst.msk [vmem:[%s1330 + $0x8] sm:$0xff] %vm359, %v1328
        %1333 = vst.msk [vmem:[%s1330 + $0x10] sm:$0xff] %vm359, %v1329
        %1334 = vst.msk [vmem:[#allocation2 + $0x7] sm:$0xff] %vm359, %v1327
        %1335 = vst.msk [vmem:[#allocation2 + $0xf] sm:$0xff] %vm359, %v1328
        %1336 = vst.msk [vmem:[#allocation2 + $0x17] sm:$0xff] %vm359, %v1329
        %s1337 = scalar_lea.vmem %s2, 144
        %v1338 = vld [vmem:[%s1337] sm:$0xff]
        %v1339 = vld [vmem:[%s1337 + $0x8] sm:$0xff]
        %v1340 = vld [vmem:[%s1337 + $0x10] sm:$0xff]
        %v1341 = vld [vmem:[%s1337 + $0x18] sm:$0xff]
        %v1342 = vld [vmem:[%s1337 + $0x20] sm:$0xff]
        %v1343 = vld [vmem:[%s1337 + $0x28] sm:$0xff]
        %v1344 = vld [vmem:[%s1337 + $0x30] sm:$0xff]
        %v1345 = vld [vmem:[%s1337 + $0x38] sm:$0xff]
        %v1346 = vld [vmem:[%s1337 + $0x40] sm:$0xff]
        %s1347 = scalar_lea.vmem %s4, 3
        %v1348 = vld [vmem:[%s1347] sm:$0x1]
        %s1349 = scalar_lea.vmem %s5, 3
        %v1350 = vld [vmem:[%s1349] sm:$0x1]
        %v1351 = vld [vmem:[#allocation2] sm:$0xff]
        %v1352 = vld [vmem:[#allocation2 + $0x8] sm:$0xff]
        %v1353 = vld [vmem:[#allocation2 + $0x10] sm:$0xff]
        %1354 = vst.msk [vmem:[#allocation4] sm:$0xff] %vm359, %v1351
        %1355 = vst.msk [vmem:[#allocation4 + $0x18] sm:$0xff] %vm359, %v1352
        %1356 = vst.msk [vmem:[#allocation4 + $0x30] sm:$0xff] %vm359, %v1353
        %v1357 = vld [vmem:[#allocation2 + $0x1] sm:$0xff]
        %v1358 = vld [vmem:[#allocation2 + $0x9] sm:$0xff]
        %v1359 = vld [vmem:[#allocation2 + $0x11] sm:$0xff]
        %1363 = vrot.lane.b32.xlu0 %v1357, 8
        %v1364 = vpop.permute.xlu0 %1363
        %1365 = vrot.lane.b32.xlu0 %v1358, 8
        %v1366 = vpop.permute.xlu0 %1365
        %1367 = vrot.lane.b32.xlu0 %v1359, 8
        %v1368 = vpop.permute.xlu0 %1367
        %1372 = vst.msk [vmem:[#allocation4] sm:$0xff] %vm789, %v1364
        %1373 = vst.msk [vmem:[#allocation4 + $0x18] sm:$0xff] %vm789, %v1366
        %1374 = vst.msk [vmem:[#allocation4 + $0x30] sm:$0xff] %vm789, %v1368
        %v1375 = vld [vmem:[#allocation2 + $0x2] sm:$0xff]
        %v1376 = vld [vmem:[#allocation2 + $0xa] sm:$0xff]
        %v1377 = vld [vmem:[#allocation2 + $0x12] sm:$0xff]
        %1381 = vrot.lane.b32.xlu0 %v1375, 16
        %v1382 = vpop.permute.xlu0 %1381
        %1383 = vrot.lane.b32.xlu0 %v1376, 16
        %v1384 = vpop.permute.xlu0 %1383
        %1385 = vrot.lane.b32.xlu0 %v1377, 16
        %v1386 = vpop.permute.xlu0 %1385
        %1390 = vst.msk [vmem:[#allocation4] sm:$0xff] %vm808, %v1382
        %1391 = vst.msk [vmem:[#allocation4 + $0x18] sm:$0xff] %vm808, %v1384
        %1392 = vst.msk [vmem:[#allocation4 + $0x30] sm:$0xff] %vm808, %v1386
        %v1393 = vld [vmem:[#allocation2 + $0x6] sm:$0xff]
        %v1394 = vld [vmem:[#allocation2 + $0xe] sm:$0xff]
        %v1395 = vld [vmem:[#allocation2 + $0x16] sm:$0xff]
        %1399 = vrot.lane.b32.xlu0 %v1393, 24
        %v1400 = vpop.permute.xlu0 %1399
        %1401 = vrot.lane.b32.xlu0 %v1394, 24
        %v1402 = vpop.permute.xlu0 %1401
        %1403 = vrot.lane.b32.xlu0 %v1395, 24
        %v1404 = vpop.permute.xlu0 %1403
        %1408 = vst.msk [vmem:[#allocation4] sm:$0xff] %vm827, %v1400
        %1409 = vst.msk [vmem:[#allocation4 + $0x18] sm:$0xff] %vm827, %v1402
        %1410 = vst.msk [vmem:[#allocation4 + $0x30] sm:$0xff] %vm827, %v1404
        %v1411 = vld [vmem:[#allocation2 + $0x7] sm:$0xff]
        %v1412 = vld [vmem:[#allocation2 + $0xf] sm:$0xff]
        %v1413 = vld [vmem:[#allocation2 + $0x17] sm:$0xff]
        %1417 = vrot.lane.b32.xlu0 %v1411, 32
        %v1418 = vpop.permute.xlu0 %1417
        %1419 = vrot.lane.b32.xlu0 %v1412, 32
        %v1420 = vpop.permute.xlu0 %1419
        %1421 = vrot.lane.b32.xlu0 %v1413, 32
        %v1422 = vpop.permute.xlu0 %1421
        %1426 = vst.msk [vmem:[#allocation4] sm:$0xff] %vm846, %v1418
        %1427 = vst.msk [vmem:[#allocation4 + $0x18] sm:$0xff] %vm846, %v1420
        %1428 = vst.msk [vmem:[#allocation4 + $0x30] sm:$0xff] %vm846, %v1422
        %v1429 = vld [vmem:[#allocation2 + $0x8] sm:$0xff]
        %v1430 = vld [vmem:[#allocation2 + $0x10] sm:$0xff]
        %v1431 = vld [vmem:[#allocation2 + $0x18] sm:$0xff]
        %1435 = vrot.lane.b32.xlu0 %v1429, 40
        %v1436 = vpop.permute.xlu0 %1435
        %1437 = vrot.lane.b32.xlu0 %v1430, 40
        %v1438 = vpop.permute.xlu0 %1437
        %1439 = vrot.lane.b32.xlu0 %v1431, 40
        %v1440 = vpop.permute.xlu0 %1439
        %1444 = vst.msk [vmem:[#allocation4] sm:$0xff] %vm865, %v1436
        %1445 = vst.msk [vmem:[#allocation4 + $0x18] sm:$0xff] %vm865, %v1438
        %1446 = vst.msk [vmem:[#allocation4 + $0x30] sm:$0xff] %vm865, %v1440
        %v1447 = vld [vmem:[#allocation2 + $0xc] sm:$0xff]
        %v1448 = vld [vmem:[#allocation2 + $0x14] sm:$0xff]
        %v1449 = vld [vmem:[#allocation2 + $0x1c] sm:$0xff]
        %1453 = vrot.lane.b32.xlu0 %v1447, 48
        %v1454 = vpop.permute.xlu0 %1453
        %1455 = vrot.lane.b32.xlu0 %v1448, 48
        %v1456 = vpop.permute.xlu0 %1455
        %1457 = vrot.lane.b32.xlu0 %v1449, 48
        %v1458 = vpop.permute.xlu0 %1457
        %1462 = vst.msk [vmem:[#allocation4] sm:$0xff] %vm884, %v1454
        %1463 = vst.msk [vmem:[#allocation4 + $0x18] sm:$0xff] %vm884, %v1456
        %1464 = vst.msk [vmem:[#allocation4 + $0x30] sm:$0xff] %vm884, %v1458
        %v1465 = vld [vmem:[#allocation2 + $0xd] sm:$0xff]
        %v1466 = vld [vmem:[#allocation2 + $0x15] sm:$0xff]
        %v1467 = vld [vmem:[#allocation2 + $0x1d] sm:$0xff]
        %1471 = vrot.lane.b32.xlu0 %v1465, 56
        %v1472 = vpop.permute.xlu0 %1471
        %1473 = vrot.lane.b32.xlu0 %v1466, 56
        %v1474 = vpop.permute.xlu0 %1473
        %1475 = vrot.lane.b32.xlu0 %v1467, 56
        %v1476 = vpop.permute.xlu0 %1475
        %1480 = vst.msk [vmem:[#allocation4] sm:$0xff] %vm903, %v1472
        %1481 = vst.msk [vmem:[#allocation4 + $0x18] sm:$0xff] %vm903, %v1474
        %1482 = vst.msk [vmem:[#allocation4 + $0x30] sm:$0xff] %vm903, %v1476
        %v1483 = vld [vmem:[#allocation2 + $0xe] sm:$0xff]
        %v1484 = vld [vmem:[#allocation2 + $0x16] sm:$0xff]
        %v1485 = vld [vmem:[#allocation2 + $0x1e] sm:$0xff]
        %1489 = vrot.lane.b32.xlu0 %v1483, 64
        %v1490 = vpop.permute.xlu0 %1489
        %1491 = vrot.lane.b32.xlu0 %v1484, 64
        %v1492 = vpop.permute.xlu0 %1491
        %1493 = vrot.lane.b32.xlu0 %v1485, 64
        %v1494 = vpop.permute.xlu0 %1493
        %1498 = vst.msk [vmem:[#allocation4] sm:$0xff] %vm922, %v1490
        %1499 = vst.msk [vmem:[#allocation4 + $0x18] sm:$0xff] %vm922, %v1492
        %1500 = vst.msk [vmem:[#allocation4 + $0x30] sm:$0xff] %vm922, %v1494
        %v1501 = vld [vmem:[#allocation4] sm:$0xff]
        %v1502 = vld [vmem:[#allocation4 + $0x18] sm:$0xff]
        %v1503 = vld [vmem:[#allocation4 + $0x30] sm:$0xff]
        %v1505 = vsel %vm929, %v1501, 0
        %v1508 = vsel %vm929, %v1502, 0
        %v1511 = vsel %vm929, %v1503, 0
        %1513 = vmatprep.subr.mxu0 0.0
        %1514 = vmatpush1.msra.mxu0 %v1338
        %1515 = vmatprep.subr.mxu0 0.0
        %1516 = vmatpush1.msra.mxu0 %v1339
        %1517 = vmatprep.subr.mxu0 0.0
        %1518 = vmatpush1.msra.mxu0 %v1340
        %1519 = vmatprep.subr.mxu0 0.0
        %1520 = vmatpush1.msra.mxu0 %v1341
        %1521 = vmatprep.subr.mxu0 0.0
        %1522 = vmatpush1.msra.mxu0 %v1342
        %1523 = vmatprep.subr.mxu0 0.0
        %1524 = vmatpush1.msra.mxu0 %v1343
        %1525 = vmatprep.subr.mxu0 0.0
        %1526 = vmatpush1.msra.mxu0 %v1344
        %1527 = vmatprep.subr.mxu0 0.0
        %1528 = vmatpush1.msra.mxu0 %v1345
        %1529 = vmatprep.subr.mxu0 0.0
        %1530 = vmatpush1.msra.mxu0 %v1346
        %1531 = vmatprep.subr.mxu0 0.0
        %1532 = vmatpush1.msra.mxu0 0.0
        %1533 = vmatprep.subr.mxu0 0.0
        %1534 = vmatpush1.msra.mxu0 0.0
        %1535 = vmatprep.subr.mxu0 0.0
        %1536 = vmatpush1.msra.mxu0 0.0
        %1537 = vmatprep.subr.mxu0 0.0
        %1538 = vmatpush1.msra.mxu0 0.0
        %1539 = vmatprep.subr.mxu0 0.0
        %1540 = vmatpush1.msra.mxu0 0.0
        %1541 = vmatprep.subr.mxu0 0.0
        %1542 = vmatpush1.msra.mxu0 0.0
        %1543 = vmatprep.subr.mxu0 0.0
        %1544 = vmatpush1.msra.mxu0 0.0
        %1545 = vmatprep.subr.mxu0 0.0
        %1546 = vmatpush1.msra.mxu0 0.0
        %1547 = vmatprep.subr.mxu0 0.0
        %1548 = vmatpush1.msra.mxu0 0.0
        %1549 = vmatprep.subr.mxu0 0.0
        %1550 = vmatpush1.msra.mxu0 0.0
        %1551 = vmatprep.subr.mxu0 0.0
        %1552 = vmatpush1.msra.mxu0 0.0
        %1553 = vmatprep.subr.mxu0 0.0
        %1554 = vmatpush1.msra.mxu0 0.0
        %1555 = vmatprep.subr.mxu0 0.0
        %1556 = vmatpush1.msra.mxu0 0.0
        %1557 = vmatprep.subr.mxu0 0.0
        %1558 = vmatpush1.msra.mxu0 0.0
        %1559 = vmatprep.subr.mxu0 0.0
        %1560 = vmatpush1.msra.mxu0 0.0
        %1561 = vmatprep.subr.mxu0 0.0
        %1562 = vmatpush1.msra.mxu0 0.0
        %1563 = vmatprep.subr.mxu0 0.0
        %1564 = vmatpush1.msra.mxu0 0.0
        %1565 = vmatprep.subr.mxu0 0.0
        %1566 = vmatpush1.msra.mxu0 0.0
        %1567 = vmatprep.subr.mxu0 0.0
        %1568 = vmatpush1.msra.mxu0 0.0
        %1569 = vmatprep.subr.mxu0 0.0
        %1570 = vmatpush1.msra.mxu0 0.0
        %1571 = vmatprep.subr.mxu0 0.0
        %1572 = vmatpush1.msra.mxu0 0.0
        %1573 = vmatprep.subr.mxu0 0.0
        %1574 = vmatpush1.msra.mxu0 0.0
        %1575 = vmatprep.subr.mxu0 0.0
        %1576 = vmatpush1.msra.mxu0 0.0
        %1577 = vmatprep.mubr.f32.mxu0 0.0
        %1578 = vmatmul.mubr.f32.gmra.mrb[0].mxu0 %v1505
        %v1579 = vpop.f32.mrb[0].mxu0
        %v1580 = vadd.f32 0.0, %v1579
        %v1581 = vpop.f32.mrb[0].mxu0
        %1582 = vmatprep.mubr.f32.mxu0 0.0
        %1583 = vmatmul.mubr.f32.gmra.mrb[0].mxu0 %v1508
        %v1584 = vpop.f32.mrb[0].mxu0
        %v1585 = vadd.f32 0.0, %v1584
        %v1586 = vpop.f32.mrb[0].mxu0
        %1587 = vmatprep.mubr.f32.mxu0 0.0
        %1588 = vmatmul.mubr.f32.gmra.mrb[0].mxu0 %v1511
        %v1589 = vpop.f32.mrb[0].mxu0
        %v1590 = vadd.f32 0.0, %v1589
        %v1591 = vpop.f32.mrb[0].mxu0
        %1592 = vdwg.mxu0
        %v1594 = vlaneseq
        %v1595 = vshrl.u32 %v1594, 7
        %v1596 = vsub.s32 0, %v1595
        %v1597 = vrot.slane %v1348, %v1596
        %v1599 = vmul.f32 %v1580, %v1597
        %v1600 = vmul.f32 %v1585, %v1597
        %v1601 = vmul.f32 %v1590, %v1597
        %v1603 = vlaneseq
        %v1604 = vshrl.u32 %v1603, 7
        %v1605 = vsub.s32 0, %v1604
        %v1606 = vrot.slane %v1350, %v1605
        %v1608 = vadd.f32 %v1599, %v1606
        %v1609 = vadd.f32 %v1600, %v1606
        %v1610 = vadd.f32 %v1601, %v1606
        %v1611 = vmax.f32 %v1608, 0.0
        %v1612 = vmax.f32 %v1609, 0.0
        %v1613 = vmax.f32 %v1610, 0.0
        %v1614 = vsel %vm743, %v1611, 0.0
        %v1615 = vsel %vm744, %v1612, 0.0
        %v1616 = vsel %vm745, %v1613, 0.0
        %1617 = vst.msk [vmem:[#allocation3 + $0x7] sm:$0xff] %vm359, %v1614
        %1618 = vst.msk [vmem:[#allocation3 + $0xf] sm:$0xff] %vm359, %v1615
        %1619 = vst.msk [vmem:[#allocation3 + $0x17] sm:$0xff] %vm359, %v1616
        %v1620 = vld [vmem:[%s1330] sm:$0xff]
        %v1621 = vld [vmem:[%s1330 + $0x8] sm:$0xff]
        %v1622 = vld [vmem:[%s1330 + $0x10] sm:$0xff]
        %s1623 = scalar_lea.vmem %s2, 216
        %v1624 = vld [vmem:[%s1623] sm:$0xff]
        %v1625 = vld [vmem:[%s1623 + $0x8] sm:$0xff]
        %v1626 = vld [vmem:[%s1623 + $0x10] sm:$0xff]
        %v1627 = vld [vmem:[%s1623 + $0x18] sm:$0xff]
        %v1628 = vld [vmem:[%s1623 + $0x20] sm:$0xff]
        %v1629 = vld [vmem:[%s1623 + $0x28] sm:$0xff]
        %v1630 = vld [vmem:[%s1623 + $0x30] sm:$0xff]
        %v1631 = vld [vmem:[%s1623 + $0x38] sm:$0xff]
        %v1632 = vld [vmem:[%s1623 + $0x40] sm:$0xff]
        %s1633 = scalar_lea.vmem %s4, 4
        %v1634 = vld [vmem:[%s1633] sm:$0x1]
        %s1635 = scalar_lea.vmem %s5, 4
        %v1636 = vld [vmem:[%s1635] sm:$0x1]
        %v1637 = vld [vmem:[#allocation3] sm:$0xff]
        %v1638 = vld [vmem:[#allocation3 + $0x8] sm:$0xff]
        %v1639 = vld [vmem:[#allocation3 + $0x10] sm:$0xff]
        %1640 = vst.msk [vmem:[#allocation4] sm:$0xff] %vm359, %v1637
        %1641 = vst.msk [vmem:[#allocation4 + $0x18] sm:$0xff] %vm359, %v1638
        %1642 = vst.msk [vmem:[#allocation4 + $0x30] sm:$0xff] %vm359, %v1639
        %v1643 = vld [vmem:[#allocation3 + $0x1] sm:$0xff]
        %v1644 = vld [vmem:[#allocation3 + $0x9] sm:$0xff]
        %v1645 = vld [vmem:[#allocation3 + $0x11] sm:$0xff]
        %1649 = vrot.lane.b32.xlu0 %v1643, 8
        %v1650 = vpop.permute.xlu0 %1649
        %1651 = vrot.lane.b32.xlu0 %v1644, 8
        %v1652 = vpop.permute.xlu0 %1651
        %1653 = vrot.lane.b32.xlu0 %v1645, 8
        %v1654 = vpop.permute.xlu0 %1653
        %1658 = vst.msk [vmem:[#allocation4] sm:$0xff] %vm789, %v1650
        %1659 = vst.msk [vmem:[#allocation4 + $0x18] sm:$0xff] %vm789, %v1652
        %1660 = vst.msk [vmem:[#allocation4 + $0x30] sm:$0xff] %vm789, %v1654
        %v1661 = vld [vmem:[#allocation3 + $0x2] sm:$0xff]
        %v1662 = vld [vmem:[#allocation3 + $0xa] sm:$0xff]
        %v1663 = vld [vmem:[#allocation3 + $0x12] sm:$0xff]
        %1667 = vrot.lane.b32.xlu0 %v1661, 16
        %v1668 = vpop.permute.xlu0 %1667
        %1669 = vrot.lane.b32.xlu0 %v1662, 16
        %v1670 = vpop.permute.xlu0 %1669
        %1671 = vrot.lane.b32.xlu0 %v1663, 16
        %v1672 = vpop.permute.xlu0 %1671
        %1676 = vst.msk [vmem:[#allocation4] sm:$0xff] %vm808, %v1668
        %1677 = vst.msk [vmem:[#allocation4 + $0x18] sm:$0xff] %vm808, %v1670
        %1678 = vst.msk [vmem:[#allocation4 + $0x30] sm:$0xff] %vm808, %v1672
        %v1679 = vld [vmem:[#allocation3 + $0x6] sm:$0xff]
        %v1680 = vld [vmem:[#allocation3 + $0xe] sm:$0xff]
        %v1681 = vld [vmem:[#allocation3 + $0x16] sm:$0xff]
        %1685 = vrot.lane.b32.xlu0 %v1679, 24
        %v1686 = vpop.permute.xlu0 %1685
        %1687 = vrot.lane.b32.xlu0 %v1680, 24
        %v1688 = vpop.permute.xlu0 %1687
        %1689 = vrot.lane.b32.xlu0 %v1681, 24
        %v1690 = vpop.permute.xlu0 %1689
        %1694 = vst.msk [vmem:[#allocation4] sm:$0xff] %vm827, %v1686
        %1695 = vst.msk [vmem:[#allocation4 + $0x18] sm:$0xff] %vm827, %v1688
        %1696 = vst.msk [vmem:[#allocation4 + $0x30] sm:$0xff] %vm827, %v1690
        %v1697 = vld [vmem:[#allocation3 + $0x7] sm:$0xff]
        %v1698 = vld [vmem:[#allocation3 + $0xf] sm:$0xff]
        %v1699 = vld [vmem:[#allocation3 + $0x17] sm:$0xff]
        %1703 = vrot.lane.b32.xlu0 %v1697, 32
        %v1704 = vpop.permute.xlu0 %1703
        %1705 = vrot.lane.b32.xlu0 %v1698, 32
        %v1706 = vpop.permute.xlu0 %1705
        %1707 = vrot.lane.b32.xlu0 %v1699, 32
        %v1708 = vpop.permute.xlu0 %1707
        %1712 = vst.msk [vmem:[#allocation4] sm:$0xff] %vm846, %v1704
        %1713 = vst.msk [vmem:[#allocation4 + $0x18] sm:$0xff] %vm846, %v1706
        %1714 = vst.msk [vmem:[#allocation4 + $0x30] sm:$0xff] %vm846, %v1708
        %v1715 = vld [vmem:[#allocation3 + $0x8] sm:$0xff]
        %v1716 = vld [vmem:[#allocation3 + $0x10] sm:$0xff]
        %v1717 = vld [vmem:[#allocation3 + $0x18] sm:$0xff]
        %1721 = vrot.lane.b32.xlu0 %v1715, 40
        %v1722 = vpop.permute.xlu0 %1721
        %1723 = vrot.lane.b32.xlu0 %v1716, 40
        %v1724 = vpop.permute.xlu0 %1723
        %1725 = vrot.lane.b32.xlu0 %v1717, 40
        %v1726 = vpop.permute.xlu0 %1725
        %1730 = vst.msk [vmem:[#allocation4] sm:$0xff] %vm865, %v1722
        %1731 = vst.msk [vmem:[#allocation4 + $0x18] sm:$0xff] %vm865, %v1724
        %1732 = vst.msk [vmem:[#allocation4 + $0x30] sm:$0xff] %vm865, %v1726
        %v1733 = vld [vmem:[#allocation3 + $0xc] sm:$0xff]
        %v1734 = vld [vmem:[#allocation3 + $0x14] sm:$0xff]
        %v1735 = vld [vmem:[#allocation3 + $0x1c] sm:$0xff]
        %1739 = vrot.lane.b32.xlu0 %v1733, 48
        %v1740 = vpop.permute.xlu0 %1739
        %1741 = vrot.lane.b32.xlu0 %v1734, 48
        %v1742 = vpop.permute.xlu0 %1741
        %1743 = vrot.lane.b32.xlu0 %v1735, 48
        %v1744 = vpop.permute.xlu0 %1743
        %1748 = vst.msk [vmem:[#allocation4] sm:$0xff] %vm884, %v1740
        %1749 = vst.msk [vmem:[#allocation4 + $0x18] sm:$0xff] %vm884, %v1742
        %1750 = vst.msk [vmem:[#allocation4 + $0x30] sm:$0xff] %vm884, %v1744
        %v1751 = vld [vmem:[#allocation3 + $0xd] sm:$0xff]
        %v1752 = vld [vmem:[#allocation3 + $0x15] sm:$0xff]
        %v1753 = vld [vmem:[#allocation3 + $0x1d] sm:$0xff]
        %1757 = vrot.lane.b32.xlu0 %v1751, 56
        %v1758 = vpop.permute.xlu0 %1757
        %1759 = vrot.lane.b32.xlu0 %v1752, 56
        %v1760 = vpop.permute.xlu0 %1759
        %1761 = vrot.lane.b32.xlu0 %v1753, 56
        %v1762 = vpop.permute.xlu0 %1761
        %1766 = vst.msk [vmem:[#allocation4] sm:$0xff] %vm903, %v1758
        %1767 = vst.msk [vmem:[#allocation4 + $0x18] sm:$0xff] %vm903, %v1760
        %1768 = vst.msk [vmem:[#allocation4 + $0x30] sm:$0xff] %vm903, %v1762
        %v1769 = vld [vmem:[#allocation3 + $0xe] sm:$0xff]
        %v1770 = vld [vmem:[#allocation3 + $0x16] sm:$0xff]
        %v1771 = vld [vmem:[#allocation3 + $0x1e] sm:$0xff]
        %1775 = vrot.lane.b32.xlu0 %v1769, 64
        %v1776 = vpop.permute.xlu0 %1775
        %1777 = vrot.lane.b32.xlu0 %v1770, 64
        %v1778 = vpop.permute.xlu0 %1777
        %1779 = vrot.lane.b32.xlu0 %v1771, 64
        %v1780 = vpop.permute.xlu0 %1779
        %1784 = vst.msk [vmem:[#allocation4] sm:$0xff] %vm922, %v1776
        %1785 = vst.msk [vmem:[#allocation4 + $0x18] sm:$0xff] %vm922, %v1778
        %1786 = vst.msk [vmem:[#allocation4 + $0x30] sm:$0xff] %vm922, %v1780
        %v1787 = vld [vmem:[#allocation4] sm:$0xff]
        %v1788 = vld [vmem:[#allocation4 + $0x18] sm:$0xff]
        %v1789 = vld [vmem:[#allocation4 + $0x30] sm:$0xff]
        %v1791 = vsel %vm929, %v1787, 0
        %v1794 = vsel %vm929, %v1788, 0
        %v1797 = vsel %vm929, %v1789, 0
        %1799 = vmatprep.subr.mxu0 0.0
        %1800 = vmatpush1.msra.mxu0 %v1624
        %1801 = vmatprep.subr.mxu0 0.0
        %1802 = vmatpush1.msra.mxu0 %v1625
        %1803 = vmatprep.subr.mxu0 0.0
        %1804 = vmatpush1.msra.mxu0 %v1626
        %1805 = vmatprep.subr.mxu0 0.0
        %1806 = vmatpush1.msra.mxu0 %v1627
        %1807 = vmatprep.subr.mxu0 0.0
        %1808 = vmatpush1.msra.mxu0 %v1628
        %1809 = vmatprep.subr.mxu0 0.0
        %1810 = vmatpush1.msra.mxu0 %v1629
        %1811 = vmatprep.subr.mxu0 0.0
        %1812 = vmatpush1.msra.mxu0 %v1630
        %1813 = vmatprep.subr.mxu0 0.0
        %1814 = vmatpush1.msra.mxu0 %v1631
        %1815 = vmatprep.subr.mxu0 0.0
        %1816 = vmatpush1.msra.mxu0 %v1632
        %1817 = vmatprep.subr.mxu0 0.0
        %1818 = vmatpush1.msra.mxu0 0.0
        %1819 = vmatprep.subr.mxu0 0.0
        %1820 = vmatpush1.msra.mxu0 0.0
        %1821 = vmatprep.subr.mxu0 0.0
        %1822 = vmatpush1.msra.mxu0 0.0
        %1823 = vmatprep.subr.mxu0 0.0
        %1824 = vmatpush1.msra.mxu0 0.0
        %1825 = vmatprep.subr.mxu0 0.0
        %1826 = vmatpush1.msra.mxu0 0.0
        %1827 = vmatprep.subr.mxu0 0.0
        %1828 = vmatpush1.msra.mxu0 0.0
        %1829 = vmatprep.subr.mxu0 0.0
        %1830 = vmatpush1.msra.mxu0 0.0
        %1831 = vmatprep.subr.mxu0 0.0
        %1832 = vmatpush1.msra.mxu0 0.0
        %1833 = vmatprep.subr.mxu0 0.0
        %1834 = vmatpush1.msra.mxu0 0.0
        %1835 = vmatprep.subr.mxu0 0.0
        %1836 = vmatpush1.msra.mxu0 0.0
        %1837 = vmatprep.subr.mxu0 0.0
        %1838 = vmatpush1.msra.mxu0 0.0
        %1839 = vmatprep.subr.mxu0 0.0
        %1840 = vmatpush1.msra.mxu0 0.0
        %1841 = vmatprep.subr.mxu0 0.0
        %1842 = vmatpush1.msra.mxu0 0.0
        %1843 = vmatprep.subr.mxu0 0.0
        %1844 = vmatpush1.msra.mxu0 0.0
        %1845 = vmatprep.subr.mxu0 0.0
        %1846 = vmatpush1.msra.mxu0 0.0
        %1847 = vmatprep.subr.mxu0 0.0
        %1848 = vmatpush1.msra.mxu0 0.0
        %1849 = vmatprep.subr.mxu0 0.0
        %1850 = vmatpush1.msra.mxu0 0.0
        %1851 = vmatprep.subr.mxu0 0.0
        %1852 = vmatpush1.msra.mxu0 0.0
        %1853 = vmatprep.subr.mxu0 0.0
        %1854 = vmatpush1.msra.mxu0 0.0
        %1855 = vmatprep.subr.mxu0 0.0
        %1856 = vmatpush1.msra.mxu0 0.0
        %1857 = vmatprep.subr.mxu0 0.0
        %1858 = vmatpush1.msra.mxu0 0.0
        %1859 = vmatprep.subr.mxu0 0.0
        %1860 = vmatpush1.msra.mxu0 0.0
        %1861 = vmatprep.subr.mxu0 0.0
        %1862 = vmatpush1.msra.mxu0 0.0
        %1863 = vmatprep.mubr.f32.mxu0 0.0
        %1864 = vmatmul.mubr.f32.gmra.mrb[0].mxu0 %v1791
        %v1865 = vpop.f32.mrb[0].mxu0
        %v1866 = vadd.f32 0.0, %v1865
        %v1867 = vpop.f32.mrb[0].mxu0
        %1868 = vmatprep.mubr.f32.mxu0 0.0
        %1869 = vmatmul.mubr.f32.gmra.mrb[0].mxu0 %v1794
        %v1870 = vpop.f32.mrb[0].mxu0
        %v1871 = vadd.f32 0.0, %v1870
        %v1872 = vpop.f32.mrb[0].mxu0
        %1873 = vmatprep.mubr.f32.mxu0 0.0
        %1874 = vmatmul.mubr.f32.gmra.mrb[0].mxu0 %v1797
        %v1875 = vpop.f32.mrb[0].mxu0
        %v1876 = vadd.f32 0.0, %v1875
        %v1877 = vpop.f32.mrb[0].mxu0
        %1878 = vdwg.mxu0
        %v1880 = vlaneseq
        %v1881 = vshrl.u32 %v1880, 7
        %v1882 = vsub.s32 0, %v1881
        %v1883 = vrot.slane %v1634, %v1882
        %v1885 = vmul.f32 %v1866, %v1883
        %v1886 = vmul.f32 %v1871, %v1883
        %v1887 = vmul.f32 %v1876, %v1883
        %v1889 = vlaneseq
        %v1890 = vshrl.u32 %v1889, 7
        %v1891 = vsub.s32 0, %v1890
        %v1892 = vrot.slane %v1636, %v1891
        %v1894 = vadd.f32 %v1885, %v1892
        %v1895 = vadd.f32 %v1886, %v1892
        %v1896 = vadd.f32 %v1887, %v1892
        %v1897 = vmax.f32 %v1894, 0.0
        %v1898 = vmax.f32 %v1895, 0.0
        %v1899 = vmax.f32 %v1896, 0.0
        %v1900 = vadd.f32 %v1897, %v1620
        %v1901 = vadd.f32 %v1898, %v1621
        %v1902 = vadd.f32 %v1899, %v1622
        %v1903 = vsel %vm743, %v1900, 0.0
        %v1904 = vsel %vm744, %v1901, 0.0
        %v1905 = vsel %vm745, %v1902, 0.0
        %1906 = vst.msk [vmem:[#allocation2 + $0x7] sm:$0xff] %vm359, %v1903
        %1907 = vst.msk [vmem:[#allocation2 + $0xf] sm:$0xff] %vm359, %v1904
        %1908 = vst.msk [vmem:[#allocation2 + $0x17] sm:$0xff] %vm359, %v1905
        %v1909 = vld [vmem:[%s1043] sm:$0xff]
        %v1910 = vld [vmem:[%s1043 + $0x8] sm:$0xff]
        %v1911 = vld [vmem:[%s1043 + $0x10] sm:$0xff]
        %s1912 = scalar_lea.vmem %s2, 288
        %v1913 = vld [vmem:[%s1912] sm:$0xff]
        %v1914 = vld [vmem:[%s1912 + $0x8] sm:$0xff]
        %v1915 = vld [vmem:[%s1912 + $0x10] sm:$0xff]
        %v1916 = vld [vmem:[%s1912 + $0x18] sm:$0xff]
        %v1917 = vld [vmem:[%s1912 + $0x20] sm:$0xff]
        %v1918 = vld [vmem:[%s1912 + $0x28] sm:$0xff]
        %v1919 = vld [vmem:[%s1912 + $0x30] sm:$0xff]
        %v1920 = vld [vmem:[%s1912 + $0x38] sm:$0xff]
        %v1921 = vld [vmem:[%s1912 + $0x40] sm:$0xff]
        %s1922 = scalar_lea.vmem %s4, 5
        %v1923 = vld [vmem:[%s1922] sm:$0x1]
        %s1924 = scalar_lea.vmem %s5, 5
        %v1925 = vld [vmem:[%s1924] sm:$0x1]
        %v1926 = vld [vmem:[#allocation2] sm:$0xff]
        %v1927 = vld [vmem:[#allocation2 + $0x8] sm:$0xff]
        %v1928 = vld [vmem:[#allocation2 + $0x10] sm:$0xff]
        %1929 = vst.msk [vmem:[#allocation4] sm:$0xff] %vm359, %v1926
        %1930 = vst.msk [vmem:[#allocation4 + $0x18] sm:$0xff] %vm359, %v1927
        %1931 = vst.msk [vmem:[#allocation4 + $0x30] sm:$0xff] %vm359, %v1928
        %v1932 = vld [vmem:[#allocation2 + $0x1] sm:$0xff]
        %v1933 = vld [vmem:[#allocation2 + $0x9] sm:$0xff]
        %v1934 = vld [vmem:[#allocation2 + $0x11] sm:$0xff]
        %1938 = vrot.lane.b32.xlu0 %v1932, 8
        %v1939 = vpop.permute.xlu0 %1938
        %1940 = vrot.lane.b32.xlu0 %v1933, 8
        %v1941 = vpop.permute.xlu0 %1940
        %1942 = vrot.lane.b32.xlu0 %v1934, 8
        %v1943 = vpop.permute.xlu0 %1942
        %1947 = vst.msk [vmem:[#allocation4] sm:$0xff] %vm789, %v1939
        %1948 = vst.msk [vmem:[#allocation4 + $0x18] sm:$0xff] %vm789, %v1941
        %1949 = vst.msk [vmem:[#allocation4 + $0x30] sm:$0xff] %vm789, %v1943
        %v1950 = vld [vmem:[#allocation2 + $0x2] sm:$0xff]
        %v1951 = vld [vmem:[#allocation2 + $0xa] sm:$0xff]
        %v1952 = vld [vmem:[#allocation2 + $0x12] sm:$0xff]
        %1956 = vrot.lane.b32.xlu0 %v1950, 16
        %v1957 = vpop.permute.xlu0 %1956
        %1958 = vrot.lane.b32.xlu0 %v1951, 16
        %v1959 = vpop.permute.xlu0 %1958
        %1960 = vrot.lane.b32.xlu0 %v1952, 16
        %v1961 = vpop.permute.xlu0 %1960
        %1965 = vst.msk [vmem:[#allocation4] sm:$0xff] %vm808, %v1957
        %1966 = vst.msk [vmem:[#allocation4 + $0x18] sm:$0xff] %vm808, %v1959
        %1967 = vst.msk [vmem:[#allocation4 + $0x30] sm:$0xff] %vm808, %v1961
        %v1968 = vld [vmem:[#allocation2 + $0x6] sm:$0xff]
        %v1969 = vld [vmem:[#allocation2 + $0xe] sm:$0xff]
        %v1970 = vld [vmem:[#allocation2 + $0x16] sm:$0xff]
        %1974 = vrot.lane.b32.xlu0 %v1968, 24
        %v1975 = vpop.permute.xlu0 %1974
        %1976 = vrot.lane.b32.xlu0 %v1969, 24
        %v1977 = vpop.permute.xlu0 %1976
        %1978 = vrot.lane.b32.xlu0 %v1970, 24
        %v1979 = vpop.permute.xlu0 %1978
        %1983 = vst.msk [vmem:[#allocation4] sm:$0xff] %vm827, %v1975
        %1984 = vst.msk [vmem:[#allocation4 + $0x18] sm:$0xff] %vm827, %v1977
        %1985 = vst.msk [vmem:[#allocation4 + $0x30] sm:$0xff] %vm827, %v1979
        %v1986 = vld [vmem:[#allocation2 + $0x7] sm:$0xff]
        %v1987 = vld [vmem:[#allocation2 + $0xf] sm:$0xff]
        %v1988 = vld [vmem:[#allocation2 + $0x17] sm:$0xff]
        %1992 = vrot.lane.b32.xlu0 %v1986, 32
        %v1993 = vpop.permute.xlu0 %1992
        %1994 = vrot.lane.b32.xlu0 %v1987, 32
        %v1995 = vpop.permute.xlu0 %1994
        %1996 = vrot.lane.b32.xlu0 %v1988, 32
        %v1997 = vpop.permute.xlu0 %1996
        %2001 = vst.msk [vmem:[#allocation4] sm:$0xff] %vm846, %v1993
        %2002 = vst.msk [vmem:[#allocation4 + $0x18] sm:$0xff] %vm846, %v1995
        %2003 = vst.msk [vmem:[#allocation4 + $0x30] sm:$0xff] %vm846, %v1997
        %v2004 = vld [vmem:[#allocation2 + $0x8] sm:$0xff]
        %v2005 = vld [vmem:[#allocation2 + $0x10] sm:$0xff]
        %v2006 = vld [vmem:[#allocation2 + $0x18] sm:$0xff]
        %2010 = vrot.lane.b32.xlu0 %v2004, 40
        %v2011 = vpop.permute.xlu0 %2010
        %2012 = vrot.lane.b32.xlu0 %v2005, 40
        %v2013 = vpop.permute.xlu0 %2012
        %2014 = vrot.lane.b32.xlu0 %v2006, 40
        %v2015 = vpop.permute.xlu0 %2014
        %2019 = vst.msk [vmem:[#allocation4] sm:$0xff] %vm865, %v2011
        %2020 = vst.msk [vmem:[#allocation4 + $0x18] sm:$0xff] %vm865, %v2013
        %2021 = vst.msk [vmem:[#allocation4 + $0x30] sm:$0xff] %vm865, %v2015
        %v2022 = vld [vmem:[#allocation2 + $0xc] sm:$0xff]
        %v2023 = vld [vmem:[#allocation2 + $0x14] sm:$0xff]
        %v2024 = vld [vmem:[#allocation2 + $0x1c] sm:$0xff]
        %2028 = vrot.lane.b32.xlu0 %v2022, 48
        %v2029 = vpop.permute.xlu0 %2028
        %2030 = vrot.lane.b32.xlu0 %v2023, 48
        %v2031 = vpop.permute.xlu0 %2030
        %2032 = vrot.lane.b32.xlu0 %v2024, 48
        %v2033 = vpop.permute.xlu0 %2032
        %2037 = vst.msk [vmem:[#allocation4] sm:$0xff] %vm884, %v2029
        %2038 = vst.msk [vmem:[#allocation4 + $0x18] sm:$0xff] %vm884, %v2031
        %2039 = vst.msk [vmem:[#allocation4 + $0x30] sm:$0xff] %vm884, %v2033
        %v2040 = vld [vmem:[#allocation2 + $0xd] sm:$0xff]
        %v2041 = vld [vmem:[#allocation2 + $0x15] sm:$0xff]
        %v2042 = vld [vmem:[#allocation2 + $0x1d] sm:$0xff]
        %2046 = vrot.lane.b32.xlu0 %v2040, 56
        %v2047 = vpop.permute.xlu0 %2046
        %2048 = vrot.lane.b32.xlu0 %v2041, 56
        %v2049 = vpop.permute.xlu0 %2048
        %2050 = vrot.lane.b32.xlu0 %v2042, 56
        %v2051 = vpop.permute.xlu0 %2050
        %2055 = vst.msk [vmem:[#allocation4] sm:$0xff] %vm903, %v2047
        %2056 = vst.msk [vmem:[#allocation4 + $0x18] sm:$0xff] %vm903, %v2049
        %2057 = vst.msk [vmem:[#allocation4 + $0x30] sm:$0xff] %vm903, %v2051
        %v2058 = vld [vmem:[#allocation2 + $0xe] sm:$0xff]
        %v2059 = vld [vmem:[#allocation2 + $0x16] sm:$0xff]
        %v2060 = vld [vmem:[#allocation2 + $0x1e] sm:$0xff]
        %2064 = vrot.lane.b32.xlu0 %v2058, 64
        %v2065 = vpop.permute.xlu0 %2064
        %2066 = vrot.lane.b32.xlu0 %v2059, 64
        %v2067 = vpop.permute.xlu0 %2066
        %2068 = vrot.lane.b32.xlu0 %v2060, 64
        %v2069 = vpop.permute.xlu0 %2068
        %2073 = vst.msk [vmem:[#allocation4] sm:$0xff] %vm922, %v2065
        %2074 = vst.msk [vmem:[#allocation4 + $0x18] sm:$0xff] %vm922, %v2067
        %2075 = vst.msk [vmem:[#allocation4 + $0x30] sm:$0xff] %vm922, %v2069
        %v2076 = vld [vmem:[#allocation4] sm:$0xff]
        %v2077 = vld [vmem:[#allocation4 + $0x18] sm:$0xff]
        %v2078 = vld [vmem:[#allocation4 + $0x30] sm:$0xff]
        %v2080 = vsel %vm929, %v2076, 0
        %v2083 = vsel %vm929, %v2077, 0
        %v2086 = vsel %vm929, %v2078, 0
        %2088 = vmatprep.subr.mxu0 0.0
        %2089 = vmatpush1.msra.mxu0 %v1913
        %2090 = vmatprep.subr.mxu0 0.0
        %2091 = vmatpush1.msra.mxu0 %v1914
        %2092 = vmatprep.subr.mxu0 0.0
        %2093 = vmatpush1.msra.mxu0 %v1915
        %2094 = vmatprep.subr.mxu0 0.0
        %2095 = vmatpush1.msra.mxu0 %v1916
        %2096 = vmatprep.subr.mxu0 0.0
        %2097 = vmatpush1.msra.mxu0 %v1917
        %2098 = vmatprep.subr.mxu0 0.0
        %2099 = vmatpush1.msra.mxu0 %v1918
        %2100 = vmatprep.subr.mxu0 0.0
        %2101 = vmatpush1.msra.mxu0 %v1919
        %2102 = vmatprep.subr.mxu0 0.0
        %2103 = vmatpush1.msra.mxu0 %v1920
        %2104 = vmatprep.subr.mxu0 0.0
        %2105 = vmatpush1.msra.mxu0 %v1921
        %2106 = vmatprep.subr.mxu0 0.0
        %2107 = vmatpush1.msra.mxu0 0.0
        %2108 = vmatprep.subr.mxu0 0.0
        %2109 = vmatpush1.msra.mxu0 0.0
        %2110 = vmatprep.subr.mxu0 0.0
        %2111 = vmatpush1.msra.mxu0 0.0
        %2112 = vmatprep.subr.mxu0 0.0
        %2113 = vmatpush1.msra.mxu0 0.0
        %2114 = vmatprep.subr.mxu0 0.0
        %2115 = vmatpush1.msra.mxu0 0.0
        %2116 = vmatprep.subr.mxu0 0.0
        %2117 = vmatpush1.msra.mxu0 0.0
        %2118 = vmatprep.subr.mxu0 0.0
        %2119 = vmatpush1.msra.mxu0 0.0
        %2120 = vmatprep.subr.mxu0 0.0
        %2121 = vmatpush1.msra.mxu0 0.0
        %2122 = vmatprep.subr.mxu0 0.0
        %2123 = vmatpush1.msra.mxu0 0.0
        %2124 = vmatprep.subr.mxu0 0.0
        %2125 = vmatpush1.msra.mxu0 0.0
        %2126 = vmatprep.subr.mxu0 0.0
        %2127 = vmatpush1.msra.mxu0 0.0
        %2128 = vmatprep.subr.mxu0 0.0
        %2129 = vmatpush1.msra.mxu0 0.0
        %2130 = vmatprep.subr.mxu0 0.0
        %2131 = vmatpush1.msra.mxu0 0.0
        %2132 = vmatprep.subr.mxu0 0.0
        %2133 = vmatpush1.msra.mxu0 0.0
        %2134 = vmatprep.subr.mxu0 0.0
        %2135 = vmatpush1.msra.mxu0 0.0
        %2136 = vmatprep.subr.mxu0 0.0
        %2137 = vmatpush1.msra.mxu0 0.0
        %2138 = vmatprep.subr.mxu0 0.0
        %2139 = vmatpush1.msra.mxu0 0.0
        %2140 = vmatprep.subr.mxu0 0.0
        %2141 = vmatpush1.msra.mxu0 0.0
        %2142 = vmatprep.subr.mxu0 0.0
        %2143 = vmatpush1.msra.mxu0 0.0
        %2144 = vmatprep.subr.mxu0 0.0
        %2145 = vmatpush1.msra.mxu0 0.0
        %2146 = vmatprep.subr.mxu0 0.0
        %2147 = vmatpush1.msra.mxu0 0.0
        %2148 = vmatprep.subr.mxu0 0.0
        %2149 = vmatpush1.msra.mxu0 0.0
        %2150 = vmatprep.subr.mxu0 0.0
        %2151 = vmatpush1.msra.mxu0 0.0
        %2152 = vmatprep.mubr.f32.mxu0 0.0
        %2153 = vmatmul.mubr.f32.gmra.mrb[0].mxu0 %v2080
        %v2154 = vpop.f32.mrb[0].mxu0
        %v2155 = vadd.f32 0.0, %v2154
        %v2156 = vpop.f32.mrb[0].mxu0
        %2157 = vmatprep.mubr.f32.mxu0 0.0
        %2158 = vmatmul.mubr.f32.gmra.mrb[0].mxu0 %v2083
        %v2159 = vpop.f32.mrb[0].mxu0
        %v2160 = vadd.f32 0.0, %v2159
        %v2161 = vpop.f32.mrb[0].mxu0
        %2162 = vmatprep.mubr.f32.mxu0 0.0
        %2163 = vmatmul.mubr.f32.gmra.mrb[0].mxu0 %v2086
        %v2164 = vpop.f32.mrb[0].mxu0
        %v2165 = vadd.f32 0.0, %v2164
        %v2166 = vpop.f32.mrb[0].mxu0
        %2167 = vdwg.mxu0
        %v2169 = vlaneseq
        %v2170 = vshrl.u32 %v2169, 7
        %v2171 = vsub.s32 0, %v2170
        %v2172 = vrot.slane %v1923, %v2171
        %v2174 = vmul.f32 %v2155, %v2172
        %v2175 = vmul.f32 %v2160, %v2172
        %v2176 = vmul.f32 %v2165, %v2172
        %v2178 = vlaneseq
        %v2179 = vshrl.u32 %v2178, 7
        %v2180 = vsub.s32 0, %v2179
        %v2181 = vrot.slane %v1925, %v2180
        %v2183 = vadd.f32 %v2174, %v2181
        %v2184 = vadd.f32 %v2175, %v2181
        %v2185 = vadd.f32 %v2176, %v2181
        %v2186 = vmax.f32 %v2183, 0.0
        %v2187 = vmax.f32 %v2184, 0.0
        %v2188 = vmax.f32 %v2185, 0.0
        %v2189 = vadd.f32 %v2186, %v1909
        %v2190 = vadd.f32 %v2187, %v1910
        %v2191 = vadd.f32 %v2188, %v1911
        %v2192 = vsel %vm743, %v2189, 0.0
        %v2193 = vsel %vm744, %v2190, 0.0
        %v2194 = vsel %vm745, %v2191, 0.0
        %2195 = vst.msk [vmem:[#allocation3 + $0x7] sm:$0xff] %vm359, %v2192
        %2196 = vst.msk [vmem:[#allocation3 + $0xf] sm:$0xff] %vm359, %v2193
        %2197 = vst.msk [vmem:[#allocation3 + $0x17] sm:$0xff] %vm359, %v2194
        %v2198 = vld [vmem:[#allocation5] sm:$0xff]
        %v2199 = vld [vmem:[#allocation5 + $0x8] sm:$0xff]
        %v2200 = vld [vmem:[#allocation5 + $0x10] sm:$0xff]
        %s2201 = scalar_lea.vmem %s2, 360
        %v2202 = vld [vmem:[%s2201] sm:$0xff]
        %v2203 = vld [vmem:[%s2201 + $0x8] sm:$0xff]
        %v2204 = vld [vmem:[%s2201 + $0x10] sm:$0xff]
        %v2205 = vld [vmem:[%s2201 + $0x18] sm:$0xff]
        %v2206 = vld [vmem:[%s2201 + $0x20] sm:$0xff]
        %v2207 = vld [vmem:[%s2201 + $0x28] sm:$0xff]
        %v2208 = vld [vmem:[%s2201 + $0x30] sm:$0xff]
        %v2209 = vld [vmem:[%s2201 + $0x38] sm:$0xff]
        %v2210 = vld [vmem:[%s2201 + $0x40] sm:$0xff]
        %s2211 = scalar_lea.vmem %s4, 6
        %v2212 = vld [vmem:[%s2211] sm:$0x1]
        %s2213 = scalar_lea.vmem %s5, 6
        %v2214 = vld [vmem:[%s2213] sm:$0x1]
        %v2215 = vld [vmem:[#allocation3] sm:$0xff]
        %v2216 = vld [vmem:[#allocation3 + $0x8] sm:$0xff]
        %v2217 = vld [vmem:[#allocation3 + $0x10] sm:$0xff]
        %2218 = vst.msk [vmem:[#allocation4] sm:$0xff] %vm359, %v2215
        %2219 = vst.msk [vmem:[#allocation4 + $0x18] sm:$0xff] %vm359, %v2216
        %2220 = vst.msk [vmem:[#allocation4 + $0x30] sm:$0xff] %vm359, %v2217
        %v2221 = vld [vmem:[#allocation3 + $0x1] sm:$0xff]
        %v2222 = vld [vmem:[#allocation3 + $0x9] sm:$0xff]
        %v2223 = vld [vmem:[#allocation3 + $0x11] sm:$0xff]
        %2227 = vrot.lane.b32.xlu0 %v2221, 8
        %v2228 = vpop.permute.xlu0 %2227
        %2229 = vrot.lane.b32.xlu0 %v2222, 8
        %v2230 = vpop.permute.xlu0 %2229
        %2231 = vrot.lane.b32.xlu0 %v2223, 8
        %v2232 = vpop.permute.xlu0 %2231
        %2236 = vst.msk [vmem:[#allocation4] sm:$0xff] %vm789, %v2228
        %2237 = vst.msk [vmem:[#allocation4 + $0x18] sm:$0xff] %vm789, %v2230
        %2238 = vst.msk [vmem:[#allocation4 + $0x30] sm:$0xff] %vm789, %v2232
        %v2239 = vld [vmem:[#allocation3 + $0x2] sm:$0xff]
        %v2240 = vld [vmem:[#allocation3 + $0xa] sm:$0xff]
        %v2241 = vld [vmem:[#allocation3 + $0x12] sm:$0xff]
        %2245 = vrot.lane.b32.xlu0 %v2239, 16
        %v2246 = vpop.permute.xlu0 %2245
        %2247 = vrot.lane.b32.xlu0 %v2240, 16
        %v2248 = vpop.permute.xlu0 %2247
        %2249 = vrot.lane.b32.xlu0 %v2241, 16
        %v2250 = vpop.permute.xlu0 %2249
        %2254 = vst.msk [vmem:[#allocation4] sm:$0xff] %vm808, %v2246
        %2255 = vst.msk [vmem:[#allocation4 + $0x18] sm:$0xff] %vm808, %v2248
        %2256 = vst.msk [vmem:[#allocation4 + $0x30] sm:$0xff] %vm808, %v2250
        %v2257 = vld [vmem:[#allocation3 + $0x6] sm:$0xff]
        %v2258 = vld [vmem:[#allocation3 + $0xe] sm:$0xff]
        %v2259 = vld [vmem:[#allocation3 + $0x16] sm:$0xff]
        %2263 = vrot.lane.b32.xlu0 %v2257, 24
        %v2264 = vpop.permute.xlu0 %2263
        %2265 = vrot.lane.b32.xlu0 %v2258, 24
        %v2266 = vpop.permute.xlu0 %2265
        %2267 = vrot.lane.b32.xlu0 %v2259, 24
        %v2268 = vpop.permute.xlu0 %2267
        %2272 = vst.msk [vmem:[#allocation4] sm:$0xff] %vm827, %v2264
        %2273 = vst.msk [vmem:[#allocation4 + $0x18] sm:$0xff] %vm827, %v2266
        %2274 = vst.msk [vmem:[#allocation4 + $0x30] sm:$0xff] %vm827, %v2268
        %v2275 = vld [vmem:[#allocation3 + $0x7] sm:$0xff]
        %v2276 = vld [vmem:[#allocation3 + $0xf] sm:$0xff]
        %v2277 = vld [vmem:[#allocation3 + $0x17] sm:$0xff]
        %2281 = vrot.lane.b32.xlu0 %v2275, 32
        %v2282 = vpop.permute.xlu0 %2281
        %2283 = vrot.lane.b32.xlu0 %v2276, 32
        %v2284 = vpop.permute.xlu0 %2283
        %2285 = vrot.lane.b32.xlu0 %v2277, 32
        %v2286 = vpop.permute.xlu0 %2285
        %2290 = vst.msk [vmem:[#allocation4] sm:$0xff] %vm846, %v2282
        %2291 = vst.msk [vmem:[#allocation4 + $0x18] sm:$0xff] %vm846, %v2284
        %2292 = vst.msk [vmem:[#allocation4 + $0x30] sm:$0xff] %vm846, %v2286
        %v2293 = vld [vmem:[#allocation3 + $0x8] sm:$0xff]
        %v2294 = vld [vmem:[#allocation3 + $0x10] sm:$0xff]
        %v2295 = vld [vmem:[#allocation3 + $0x18] sm:$0xff]
        %2299 = vrot.lane.b32.xlu0 %v2293, 40
        %v2300 = vpop.permute.xlu0 %2299
        %2301 = vrot.lane.b32.xlu0 %v2294, 40
        %v2302 = vpop.permute.xlu0 %2301
        %2303 = vrot.lane.b32.xlu0 %v2295, 40
        %v2304 = vpop.permute.xlu0 %2303
        %2308 = vst.msk [vmem:[#allocation4] sm:$0xff] %vm865, %v2300
        %2309 = vst.msk [vmem:[#allocation4 + $0x18] sm:$0xff] %vm865, %v2302
        %2310 = vst.msk [vmem:[#allocation4 + $0x30] sm:$0xff] %vm865, %v2304
        %v2311 = vld [vmem:[#allocation3 + $0xc] sm:$0xff]
        %v2312 = vld [vmem:[#allocation3 + $0x14] sm:$0xff]
        %v2313 = vld [vmem:[#allocation3 + $0x1c] sm:$0xff]
        %2317 = vrot.lane.b32.xlu0 %v2311, 48
        %v2318 = vpop.permute.xlu0 %2317
        %2319 = vrot.lane.b32.xlu0 %v2312, 48
        %v2320 = vpop.permute.xlu0 %2319
        %2321 = vrot.lane.b32.xlu0 %v2313, 48
        %v2322 = vpop.permute.xlu0 %2321
        %2326 = vst.msk [vmem:[#allocation4] sm:$0xff] %vm884, %v2318
        %2327 = vst.msk [vmem:[#allocation4 + $0x18] sm:$0xff] %vm884, %v2320
        %2328 = vst.msk [vmem:[#allocation4 + $0x30] sm:$0xff] %vm884, %v2322
        %v2329 = vld [vmem:[#allocation3 + $0xd] sm:$0xff]
        %v2330 = vld [vmem:[#allocation3 + $0x15] sm:$0xff]
        %v2331 = vld [vmem:[#allocation3 + $0x1d] sm:$0xff]
        %2335 = vrot.lane.b32.xlu0 %v2329, 56
        %v2336 = vpop.permute.xlu0 %2335
        %2337 = vrot.lane.b32.xlu0 %v2330, 56
        %v2338 = vpop.permute.xlu0 %2337
        %2339 = vrot.lane.b32.xlu0 %v2331, 56
        %v2340 = vpop.permute.xlu0 %2339
        %2344 = vst.msk [vmem:[#allocation4] sm:$0xff] %vm903, %v2336
        %2345 = vst.msk [vmem:[#allocation4 + $0x18] sm:$0xff] %vm903, %v2338
        %2346 = vst.msk [vmem:[#allocation4 + $0x30] sm:$0xff] %vm903, %v2340
        %v2347 = vld [vmem:[#allocation3 + $0xe] sm:$0xff]
        %v2348 = vld [vmem:[#allocation3 + $0x16] sm:$0xff]
        %v2349 = vld [vmem:[#allocation3 + $0x1e] sm:$0xff]
        %2353 = vrot.lane.b32.xlu0 %v2347, 64
        %v2354 = vpop.permute.xlu0 %2353
        %2355 = vrot.lane.b32.xlu0 %v2348, 64
        %v2356 = vpop.permute.xlu0 %2355
        %2357 = vrot.lane.b32.xlu0 %v2349, 64
        %v2358 = vpop.permute.xlu0 %2357
        %2362 = vst.msk [vmem:[#allocation4] sm:$0xff] %vm922, %v2354
        %2363 = vst.msk [vmem:[#allocation4 + $0x18] sm:$0xff] %vm922, %v2356
        %2364 = vst.msk [vmem:[#allocation4 + $0x30] sm:$0xff] %vm922, %v2358
        %v2365 = vld [vmem:[#allocation4] sm:$0xff]
        %v2366 = vld [vmem:[#allocation4 + $0x18] sm:$0xff]
        %v2367 = vld [vmem:[#allocation4 + $0x30] sm:$0xff]
        %v2369 = vsel %vm929, %v2365, 0
        %v2372 = vsel %vm929, %v2366, 0
        %v2375 = vsel %vm929, %v2367, 0
        %2377 = vmatprep.subr.mxu0 0.0
        %2378 = vmatpush1.msra.mxu0 %v2202
        %2379 = vmatprep.subr.mxu0 0.0
        %2380 = vmatpush1.msra.mxu0 %v2203
        %2381 = vmatprep.subr.mxu0 0.0
        %2382 = vmatpush1.msra.mxu0 %v2204
        %2383 = vmatprep.subr.mxu0 0.0
        %2384 = vmatpush1.msra.mxu0 %v2205
        %2385 = vmatprep.subr.mxu0 0.0
        %2386 = vmatpush1.msra.mxu0 %v2206
        %2387 = vmatprep.subr.mxu0 0.0
        %2388 = vmatpush1.msra.mxu0 %v2207
        %2389 = vmatprep.subr.mxu0 0.0
        %2390 = vmatpush1.msra.mxu0 %v2208
        %2391 = vmatprep.subr.mxu0 0.0
        %2392 = vmatpush1.msra.mxu0 %v2209
        %2393 = vmatprep.subr.mxu0 0.0
        %2394 = vmatpush1.msra.mxu0 %v2210
        %2395 = vmatprep.subr.mxu0 0.0
        %2396 = vmatpush1.msra.mxu0 0.0
        %2397 = vmatprep.subr.mxu0 0.0
        %2398 = vmatpush1.msra.mxu0 0.0
        %2399 = vmatprep.subr.mxu0 0.0
        %2400 = vmatpush1.msra.mxu0 0.0
        %2401 = vmatprep.subr.mxu0 0.0
        %2402 = vmatpush1.msra.mxu0 0.0
        %2403 = vmatprep.subr.mxu0 0.0
        %2404 = vmatpush1.msra.mxu0 0.0
        %2405 = vmatprep.subr.mxu0 0.0
        %2406 = vmatpush1.msra.mxu0 0.0
        %2407 = vmatprep.subr.mxu0 0.0
        %2408 = vmatpush1.msra.mxu0 0.0
        %2409 = vmatprep.subr.mxu0 0.0
        %2410 = vmatpush1.msra.mxu0 0.0
        %2411 = vmatprep.subr.mxu0 0.0
        %2412 = vmatpush1.msra.mxu0 0.0
        %2413 = vmatprep.subr.mxu0 0.0
        %2414 = vmatpush1.msra.mxu0 0.0
        %2415 = vmatprep.subr.mxu0 0.0
        %2416 = vmatpush1.msra.mxu0 0.0
        %2417 = vmatprep.subr.mxu0 0.0
        %2418 = vmatpush1.msra.mxu0 0.0
        %2419 = vmatprep.subr.mxu0 0.0
        %2420 = vmatpush1.msra.mxu0 0.0
        %2421 = vmatprep.subr.mxu0 0.0
        %2422 = vmatpush1.msra.mxu0 0.0
        %2423 = vmatprep.subr.mxu0 0.0
        %2424 = vmatpush1.msra.mxu0 0.0
        %2425 = vmatprep.subr.mxu0 0.0
        %2426 = vmatpush1.msra.mxu0 0.0
        %2427 = vmatprep.subr.mxu0 0.0
        %2428 = vmatpush1.msra.mxu0 0.0
        %2429 = vmatprep.subr.mxu0 0.0
        %2430 = vmatpush1.msra.mxu0 0.0
        %2431 = vmatprep.subr.mxu0 0.0
        %2432 = vmatpush1.msra.mxu0 0.0
        %2433 = vmatprep.subr.mxu0 0.0
        %2434 = vmatpush1.msra.mxu0 0.0
        %2435 = vmatprep.subr.mxu0 0.0
        %2436 = vmatpush1.msra.mxu0 0.0
        %2437 = vmatprep.subr.mxu0 0.0
        %2438 = vmatpush1.msra.mxu0 0.0
        %2439 = vmatprep.subr.mxu0 0.0
        %2440 = vmatpush1.msra.mxu0 0.0
        %2441 = vmatprep.mubr.f32.mxu0 0.0
        %2442 = vmatmul.mubr.f32.gmra.mrb[0].mxu0 %v2369
        %v2443 = vpop.f32.mrb[0].mxu0
        %v2444 = vadd.f32 0.0, %v2443
        %v2445 = vpop.f32.mrb[0].mxu0
        %2446 = vmatprep.mubr.f32.mxu0 0.0
        %2447 = vmatmul.mubr.f32.gmra.mrb[0].mxu0 %v2372
        %v2448 = vpop.f32.mrb[0].mxu0
        %v2449 = vadd.f32 0.0, %v2448
        %v2450 = vpop.f32.mrb[0].mxu0
        %2451 = vmatprep.mubr.f32.mxu0 0.0
        %2452 = vmatmul.mubr.f32.gmra.mrb[0].mxu0 %v2375
        %v2453 = vpop.f32.mrb[0].mxu0
        %v2454 = vadd.f32 0.0, %v2453
        %v2455 = vpop.f32.mrb[0].mxu0
        %2456 = vdwg.mxu0
        %v2458 = vlaneseq
        %v2459 = vshrl.u32 %v2458, 7
        %v2460 = vsub.s32 0, %v2459
        %v2461 = vrot.slane %v2212, %v2460
        %v2463 = vmul.f32 %v2444, %v2461
        %v2464 = vmul.f32 %v2449, %v2461
        %v2465 = vmul.f32 %v2454, %v2461
        %v2467 = vlaneseq
        %v2468 = vshrl.u32 %v2467, 7
        %v2469 = vsub.s32 0, %v2468
        %v2470 = vrot.slane %v2214, %v2469
        %v2472 = vadd.f32 %v2463, %v2470
        %v2473 = vadd.f32 %v2464, %v2470
        %v2474 = vadd.f32 %v2465, %v2470
        %v2475 = vmax.f32 %v2472, 0.0
        %v2476 = vmax.f32 %v2473, 0.0
        %v2477 = vmax.f32 %v2474, 0.0
        %v2478 = vadd.f32 %v2475, %v2198
        %v2479 = vadd.f32 %v2476, %v2199
        %v2480 = vadd.f32 %v2477, %v2200
        %v2481 = vsel %vm743, %v2478, 0.0
        %v2482 = vsel %vm744, %v2479, 0.0
        %v2483 = vsel %vm745, %v2480, 0.0
        %2484 = vst.msk [vmem:[#allocation2 + $0x7] sm:$0xff] %vm359, %v2481
        %2485 = vst.msk [vmem:[#allocation2 + $0xf] sm:$0xff] %vm359, %v2482
        %2486 = vst.msk [vmem:[#allocation2 + $0x17] sm:$0xff] %vm359, %v2483
        %v2487 = vld [vmem:[%s3] sm:$0xff]
        %v2488 = vld [vmem:[%s3 + $0x8] sm:$0xff]
        %v2489 = vld [vmem:[%s3 + $0x10] sm:$0xff]
        %v2490 = vld [vmem:[%s3 + $0x18] sm:$0xff]
        %v2491 = vld [vmem:[%s3 + $0x20] sm:$0xff]
        %v2492 = vld [vmem:[%s3 + $0x28] sm:$0xff]
        %v2493 = vld [vmem:[%s3 + $0x30] sm:$0xff]
        %v2494 = vld [vmem:[%s3 + $0x38] sm:$0xff]
        %v2495 = vld [vmem:[%s3 + $0x40] sm:$0xff]
        %v2496 = vld [vmem:[%s6] sm:$0x1]
        %v2497 = vld [vmem:[%s7] sm:$0x1]
        %v2498 = vld [vmem:[#allocation2] sm:$0xff]
        %v2499 = vld [vmem:[#allocation2 + $0x8] sm:$0xff]
        %v2500 = vld [vmem:[#allocation2 + $0x10] sm:$0xff]
        %2501 = vst.msk [vmem:[#allocation4] sm:$0xff] %vm359, %v2498
        %2502 = vst.msk [vmem:[#allocation4 + $0x18] sm:$0xff] %vm359, %v2499
        %2503 = vst.msk [vmem:[#allocation4 + $0x30] sm:$0xff] %vm359, %v2500
        %v2504 = vld [vmem:[#allocation2 + $0x1] sm:$0xff]
        %v2505 = vld [vmem:[#allocation2 + $0x9] sm:$0xff]
        %v2506 = vld [vmem:[#allocation2 + $0x11] sm:$0xff]
        %2510 = vrot.lane.b32.xlu0 %v2504, 8
        %v2511 = vpop.permute.xlu0 %2510
        %2512 = vrot.lane.b32.xlu0 %v2505, 8
        %v2513 = vpop.permute.xlu0 %2512
        %2514 = vrot.lane.b32.xlu0 %v2506, 8
        %v2515 = vpop.permute.xlu0 %2514
        %2519 = vst.msk [vmem:[#allocation4] sm:$0xff] %vm789, %v2511
        %2520 = vst.msk [vmem:[#allocation4 + $0x18] sm:$0xff] %vm789, %v2513
        %2521 = vst.msk [vmem:[#allocation4 + $0x30] sm:$0xff] %vm789, %v2515
        %v2522 = vld [vmem:[#allocation2 + $0x2] sm:$0xff]
        %v2523 = vld [vmem:[#allocation2 + $0xa] sm:$0xff]
        %v2524 = vld [vmem:[#allocation2 + $0x12] sm:$0xff]
        %2528 = vrot.lane.b32.xlu0 %v2522, 16
        %v2529 = vpop.permute.xlu0 %2528
        %2530 = vrot.lane.b32.xlu0 %v2523, 16
        %v2531 = vpop.permute.xlu0 %2530
        %2532 = vrot.lane.b32.xlu0 %v2524, 16
        %v2533 = vpop.permute.xlu0 %2532
        %2537 = vst.msk [vmem:[#allocation4] sm:$0xff] %vm808, %v2529
        %2538 = vst.msk [vmem:[#allocation4 + $0x18] sm:$0xff] %vm808, %v2531
        %2539 = vst.msk [vmem:[#allocation4 + $0x30] sm:$0xff] %vm808, %v2533
        %v2540 = vld [vmem:[#allocation2 + $0x6] sm:$0xff]
        %v2541 = vld [vmem:[#allocation2 + $0xe] sm:$0xff]
        %v2542 = vld [vmem:[#allocation2 + $0x16] sm:$0xff]
        %2546 = vrot.lane.b32.xlu0 %v2540, 24
        %v2547 = vpop.permute.xlu0 %2546
        %2548 = vrot.lane.b32.xlu0 %v2541, 24
        %v2549 = vpop.permute.xlu0 %2548
        %2550 = vrot.lane.b32.xlu0 %v2542, 24
        %v2551 = vpop.permute.xlu0 %2550
        %2555 = vst.msk [vmem:[#allocation4] sm:$0xff] %vm827, %v2547
        %2556 = vst.msk [vmem:[#allocation4 + $0x18] sm:$0xff] %vm827, %v2549
        %2557 = vst.msk [vmem:[#allocation4 + $0x30] sm:$0xff] %vm827, %v2551
        %v2558 = vld [vmem:[#allocation2 + $0x7] sm:$0xff]
        %v2559 = vld [vmem:[#allocation2 + $0xf] sm:$0xff]
        %v2560 = vld [vmem:[#allocation2 + $0x17] sm:$0xff]
        %2564 = vrot.lane.b32.xlu0 %v2558, 32
        %v2565 = vpop.permute.xlu0 %2564
        %2566 = vrot.lane.b32.xlu0 %v2559, 32
        %v2567 = vpop.permute.xlu0 %2566
        %2568 = vrot.lane.b32.xlu0 %v2560, 32
        %v2569 = vpop.permute.xlu0 %2568
        %2573 = vst.msk [vmem:[#allocation4] sm:$0xff] %vm846, %v2565
        %2574 = vst.msk [vmem:[#allocation4 + $0x18] sm:$0xff] %vm846, %v2567
        %2575 = vst.msk [vmem:[#allocation4 + $0x30] sm:$0xff] %vm846, %v2569
        %v2576 = vld [vmem:[#allocation2 + $0x8] sm:$0xff]
        %v2577 = vld [vmem:[#allocation2 + $0x10] sm:$0xff]
        %v2578 = vld [vmem:[#allocation2 + $0x18] sm:$0xff]
        %2582 = vrot.lane.b32.xlu0 %v2576, 40
        %v2583 = vpop.permute.xlu0 %2582
        %2584 = vrot.lane.b32.xlu0 %v2577, 40
        %v2585 = vpop.permute.xlu0 %2584
        %2586 = vrot.lane.b32.xlu0 %v2578, 40
        %v2587 = vpop.permute.xlu0 %2586
        %2591 = vst.msk [vmem:[#allocation4] sm:$0xff] %vm865, %v2583
        %2592 = vst.msk [vmem:[#allocation4 + $0x18] sm:$0xff] %vm865, %v2585
        %2593 = vst.msk [vmem:[#allocation4 + $0x30] sm:$0xff] %vm865, %v2587
        %v2594 = vld [vmem:[#allocation2 + $0xc] sm:$0xff]
        %v2595 = vld [vmem:[#allocation2 + $0x14] sm:$0xff]
        %v2596 = vld [vmem:[#allocation2 + $0x1c] sm:$0xff]
        %2600 = vrot.lane.b32.xlu0 %v2594, 48
        %v2601 = vpop.permute.xlu0 %2600
        %2602 = vrot.lane.b32.xlu0 %v2595, 48
        %v2603 = vpop.permute.xlu0 %2602
        %2604 = vrot.lane.b32.xlu0 %v2596, 48
        %v2605 = vpop.permute.xlu0 %2604
        %2609 = vst.msk [vmem:[#allocation4] sm:$0xff] %vm884, %v2601
        %2610 = vst.msk [vmem:[#allocation4 + $0x18] sm:$0xff] %vm884, %v2603
        %2611 = vst.msk [vmem:[#allocation4 + $0x30] sm:$0xff] %vm884, %v2605
        %v2612 = vld [vmem:[#allocation2 + $0xd] sm:$0xff]
        %v2613 = vld [vmem:[#allocation2 + $0x15] sm:$0xff]
        %v2614 = vld [vmem:[#allocation2 + $0x1d] sm:$0xff]
        %2618 = vrot.lane.b32.xlu0 %v2612, 56
        %v2619 = vpop.permute.xlu0 %2618
        %2620 = vrot.lane.b32.xlu0 %v2613, 56
        %v2621 = vpop.permute.xlu0 %2620
        %2622 = vrot.lane.b32.xlu0 %v2614, 56
        %v2623 = vpop.permute.xlu0 %2622
        %2627 = vst.msk [vmem:[#allocation4] sm:$0xff] %vm903, %v2619
        %2628 = vst.msk [vmem:[#allocation4 + $0x18] sm:$0xff] %vm903, %v2621
        %2629 = vst.msk [vmem:[#allocation4 + $0x30] sm:$0xff] %vm903, %v2623
        %v2630 = vld [vmem:[#allocation2 + $0xe] sm:$0xff]
        %v2631 = vld [vmem:[#allocation2 + $0x16] sm:$0xff]
        %v2632 = vld [vmem:[#allocation2 + $0x1e] sm:$0xff]
        %2636 = vrot.lane.b32.xlu0 %v2630, 64
        %v2637 = vpop.permute.xlu0 %2636
        %2638 = vrot.lane.b32.xlu0 %v2631, 64
        %v2639 = vpop.permute.xlu0 %2638
        %2640 = vrot.lane.b32.xlu0 %v2632, 64
        %v2641 = vpop.permute.xlu0 %2640
        %2645 = vst.msk [vmem:[#allocation4] sm:$0xff] %vm922, %v2637
        %2646 = vst.msk [vmem:[#allocation4 + $0x18] sm:$0xff] %vm922, %v2639
        %2647 = vst.msk [vmem:[#allocation4 + $0x30] sm:$0xff] %vm922, %v2641
        %v2648 = vld [vmem:[#allocation4] sm:$0xff]
        %v2649 = vld [vmem:[#allocation4 + $0x18] sm:$0xff]
        %v2650 = vld [vmem:[#allocation4 + $0x30] sm:$0xff]
        %v2652 = vsel %vm929, %v2648, 0
        %v2655 = vsel %vm929, %v2649, 0
        %v2658 = vsel %vm929, %v2650, 0
        %2660 = vmatprep.subr.mxu0 0.0
        %2661 = vmatpush1.msra.mxu0 %v2487
        %2662 = vmatprep.subr.mxu0 0.0
        %2663 = vmatpush1.msra.mxu0 %v2488
        %2664 = vmatprep.subr.mxu0 0.0
        %2665 = vmatpush1.msra.mxu0 %v2489
        %2666 = vmatprep.subr.mxu0 0.0
        %2667 = vmatpush1.msra.mxu0 %v2490
        %2668 = vmatprep.subr.mxu0 0.0
        %2669 = vmatpush1.msra.mxu0 %v2491
        %2670 = vmatprep.subr.mxu0 0.0
        %2671 = vmatpush1.msra.mxu0 %v2492
        %2672 = vmatprep.subr.mxu0 0.0
        %2673 = vmatpush1.msra.mxu0 %v2493
        %2674 = vmatprep.subr.mxu0 0.0
        %2675 = vmatpush1.msra.mxu0 %v2494
        %2676 = vmatprep.subr.mxu0 0.0
        %2677 = vmatpush1.msra.mxu0 %v2495
        %2678 = vmatprep.subr.mxu0 0.0
        %2679 = vmatpush1.msra.mxu0 0.0
        %2680 = vmatprep.subr.mxu0 0.0
        %2681 = vmatpush1.msra.mxu0 0.0
        %2682 = vmatprep.subr.mxu0 0.0
        %2683 = vmatpush1.msra.mxu0 0.0
        %2684 = vmatprep.subr.mxu0 0.0
        %2685 = vmatpush1.msra.mxu0 0.0
        %2686 = vmatprep.subr.mxu0 0.0
        %2687 = vmatpush1.msra.mxu0 0.0
        %2688 = vmatprep.subr.mxu0 0.0
        %2689 = vmatpush1.msra.mxu0 0.0
        %2690 = vmatprep.subr.mxu0 0.0
        %2691 = vmatpush1.msra.mxu0 0.0
        %2692 = vmatprep.subr.mxu0 0.0
        %2693 = vmatpush1.msra.mxu0 0.0
        %2694 = vmatprep.subr.mxu0 0.0
        %2695 = vmatpush1.msra.mxu0 0.0
        %2696 = vmatprep.subr.mxu0 0.0
        %2697 = vmatpush1.msra.mxu0 0.0
        %2698 = vmatprep.subr.mxu0 0.0
        %2699 = vmatpush1.msra.mxu0 0.0
        %2700 = vmatprep.subr.mxu0 0.0
        %2701 = vmatpush1.msra.mxu0 0.0
        %2702 = vmatprep.subr.mxu0 0.0
        %2703 = vmatpush1.msra.mxu0 0.0
        %2704 = vmatprep.subr.mxu0 0.0
        %2705 = vmatpush1.msra.mxu0 0.0
        %2706 = vmatprep.subr.mxu0 0.0
        %2707 = vmatpush1.msra.mxu0 0.0
        %2708 = vmatprep.subr.mxu0 0.0
        %2709 = vmatpush1.msra.mxu0 0.0
        %2710 = vmatprep.subr.mxu0 0.0
        %2711 = vmatpush1.msra.mxu0 0.0
        %2712 = vmatprep.subr.mxu0 0.0
        %2713 = vmatpush1.msra.mxu0 0.0
        %2714 = vmatprep.subr.mxu0 0.0
        %2715 = vmatpush1.msra.mxu0 0.0
        %2716 = vmatprep.subr.mxu0 0.0
        %2717 = vmatpush1.msra.mxu0 0.0
        %2718 = vmatprep.subr.mxu0 0.0
        %2719 = vmatpush1.msra.mxu0 0.0
        %2720 = vmatprep.subr.mxu0 0.0
        %2721 = vmatpush1.msra.mxu0 0.0
        %2722 = vmatprep.subr.mxu0 0.0
        %2723 = vmatpush1.msra.mxu0 0.0
        %2724 = vmatprep.mubr.f32.mxu0 0.0
        %2725 = vmatmul.mubr.f32.gmra.mrb[0].mxu0 %v2652
        %v2726 = vpop.f32.mrb[0].mxu0
        %v2727 = vadd.f32 0.0, %v2726
        %v2728 = vpop.f32.mrb[0].mxu0
        %2729 = vmatprep.mubr.f32.mxu0 0.0
        %2730 = vmatmul.mubr.f32.gmra.mrb[0].mxu0 %v2655
        %v2731 = vpop.f32.mrb[0].mxu0
        %v2732 = vadd.f32 0.0, %v2731
        %v2733 = vpop.f32.mrb[0].mxu0
        %2734 = vmatprep.mubr.f32.mxu0 0.0
        %2735 = vmatmul.mubr.f32.gmra.mrb[0].mxu0 %v2658
        %v2736 = vpop.f32.mrb[0].mxu0
        %v2737 = vadd.f32 0.0, %v2736
        %v2738 = vpop.f32.mrb[0].mxu0
        %2739 = vdwg.mxu0
        %v2741 = vlaneseq
        %v2742 = vshrl.u32 %v2741, 7
        %v2743 = vsub.s32 0, %v2742
        %v2744 = vrot.slane %v2496, %v2743
        %v2746 = vmul.f32 %v2727, %v2744
        %v2747 = vmul.f32 %v2732, %v2744
        %v2748 = vmul.f32 %v2737, %v2744
        %v2750 = vlaneseq
        %v2751 = vshrl.u32 %v2750, 7
        %v2752 = vsub.s32 0, %v2751
        %v2753 = vrot.slane %v2497, %v2752
        %v2755 = vadd.f32 %v2746, %v2753
        %v2756 = vadd.f32 %v2747, %v2753
        %v2757 = vadd.f32 %v2748, %v2753
        %v2758 = vmax.f32 %v2755, 0.0
        %v2759 = vmax.f32 %v2756, 0.0
        %v2760 = vmax.f32 %v2757, 0.0
        %v2761 = vsel %vm743, %v2758, 0.0
        %v2762 = vsel %vm744, %v2759, 0.0
        %v2763 = vsel %vm745, %v2760, 0.0
        %2764 = vst.msk [vmem:[%s298] sm:$0xff] %vm414, %v2761
        %2765 = vst.msk [vmem:[%s298 + $0x8] sm:$0xff] %vm414, %v2762
        %2766 = vst.msk [vmem:[%s298 + $0x10] sm:$0xff] %vm414, %v2763
        %s2767 = sand.u32 %s203, 1
        %s2768 = scalar_lea.sflag [#allocation7], %s2767
        %s2769 = sand.u32 %s203, 1
        %s2770 = smul.addr %s2769, 24
        %s2771 = scalar_lea.vmem [#allocation6], %s2770
        // Predicated region
        $region53: #{tpu_custom_call.1} parent=51 // pred_check
          %p2772 = pneg %p213
        $region54: #{tpu_custom_call.1} parent=51 // pred_check_branch
          %2774 = sbr.rel (%p2772) target = $region56
        $region55: #{tpu_custom_call.1} parent=51 // pred_region
          %s2776 = ssub.s32 384, 384
          %2777 = vsyncadd %s2768, %s2776
          %s2778 = smul.addr %s22, 3
          %s2779 = smul.addr %s2778, 128
          %s2780 = scalar_lea.hbm %s8, %s2779
          %s2781 = sshll.u32 %s2771, 4
          %s2782 = int_to_ptr.vmem [resolvable:$true] %s2781
          %2787 = dma.vmem_to_hbm [thread:$0]  %s2782, 384, %s2780, %s2768, 128, 128, 8
        $region56: #{tpu_custom_call.1} parent=51 // pred_fallthru
          _
      $region52: #{tpu_custom_call.1} parent=5 // pred_fallthru
        _
      %p2788 = scmp.le.s32.totalorder 2, %s17
      // Predicated region
      $region57: #{tpu_custom_call.1} parent=5 // pred_check
        %p2789 = pneg %p2788
      $region58: #{tpu_custom_call.1} parent=5 // pred_check_branch
        %2791 = sbr.rel (%p2789) target = $region60
      $region59: #{tpu_custom_call.1} parent=5 // pred_region
        %s2792 = ssub.s32 %s17, 2
        // Predicated region
        $region61: #{tpu_custom_call.1} parent=59 // pred_check
          %p2793 = pneg %p219
        $region62: #{tpu_custom_call.1} parent=59 // pred_check_branch
          %2795 = sbr.rel (%p2793) target = $region64
        $region63: #{tpu_custom_call.1} parent=59 // pred_region
          %s2796 = sand.u32 %s204, 1
          %s2797 = scalar_lea.sflag [#allocation7], %s2796
          %s2798 = sand.u32 %s204, 1
          %s2799 = smul.addr %s2798, 24
          %s2800 = scalar_lea.vmem [#allocation6], %s2799
          %2801 = dma.done %s2797, 384
        $region64: #{tpu_custom_call.1} parent=59 // pred_fallthru
          _
      $region60: #{tpu_custom_call.1} parent=5 // pred_fallthru
        _
    $region6: #{tpu_custom_call.1} parent=1 // loop_footer
      %s21 = sadd.s32 1, %s17
    $region7: #{tpu_custom_call.1} parent=1 // loop_footer_branch
      %16 = sbr.rel target = $region3
    $region8: #{tpu_custom_call.1} parent=1 // loop_exit
      _
    %2802 = vsyncpa [#allocation7], 1
    %s2803 = scalar_lea.sflag [#allocation7], 1
    %2804 = vsyncpa %s2803, 1

</llo_original>
